<compile_context>
chip_gen: v7x
topology: tpu7x:2x2x1
jax: 0.10.0
libtpu: 0.0.40
codegen_flags: <defaults>
</compile_context>

<pallas_src>
import functools

import jax
import jax.numpy as jnp
from jax.experimental import pallas as pl
from jax.experimental.pallas import tpu as pltpu

LANE = 128


def _round_up(x, m):
    return (x + m - 1) // m * m


def _vmem_capacity_bytes():
    try:
        return int(pltpu.get_tpu_info().vmem_capacity_bytes)
    except Exception:
        return 64 * 1024 * 1024  # conservative fallback (v7x per-core VMEM)


_VMEM_CAP = _vmem_capacity_bytes()
_BLOCK_BUDGET = int(0.55 * _VMEM_CAP)                      # live blocks (+double buffers +temps)
_VMEM_LIMIT = min(int(0.90 * _VMEM_CAP), 100 * 1024 * 1024)


# -----------------------------------------------------------------------------
# Kernels: fused conv(+bias)(+GDN) on one (batch, row-tile) block.
#   x_ref : (tr + taps_r-1, ow_pad + taps_q-1, K)  bf16   (s2d input window)
#   w_ref : (taps_r, taps_q, K, Cout_pad)          bf16
#   b_ref : (1, Cout_pad)                          f32
#   g_ref : (Cout_pad, Cout_pad)                   bf16   (gamma^T, padded)
#   beta  : (1, Cout_pad)                          f32
#   o_ref : (tr, ow_pad, Cout_pad)                 bf16 / f32
# -----------------------------------------------------------------------------
def _conv_accum(x_ref, w_ref, b_ref, o_shape):
    tr, ow, cout = o_shape
    taps_r, taps_q, k, _ = w_ref.shape
    acc = jnp.zeros((tr * ow, cout), jnp.float32)
    for r in range(taps_r):            # static, unrolled: <= 9 MXU matmuls per tile
        for q in range(taps_q):
            patch = x_ref[pl.ds(r, tr), pl.ds(q, ow), :].reshape(tr * ow, k)
            acc = acc + jnp.dot(patch, w_ref[r, q],
                                preferred_element_type=jnp.float32)
    return acc + b_ref[...]


def _conv_bias_kernel(x_ref, w_ref, b_ref, o_ref):
    y = _conv_accum(x_ref, w_ref, b_ref, o_ref.shape)
    o_ref[...] = y.reshape(o_ref.shape).astype(o_ref.dtype)


def _conv_bias_gdn_kernel(x_ref, w_ref, b_ref, g_ref, beta_ref, o_ref):
    y = _conv_accum(x_ref, w_ref, b_ref, o_ref.shape)
    # GDN: y_i * rsqrt(beta_i + sum_j gamma[i,j] * y_j^2); bf16 MXU matmul, f32 accum.
    norm = jnp.dot((y * y).astype(jnp.bfloat16), g_ref[...],
                   preferred_element_type=jnp.float32) + beta_ref[...]
    norm = jnp.maximum(norm, 1e-6)
    o_ref[...] = (y * jax.lax.rsqrt(norm)).reshape(o_ref.shape).astype(o_ref.dtype)


# -----------------------------------------------------------------------------
# One encoder layer: "same"-padded 5x5 stride-2 conv (+ optional fused GDN)
# -----------------------------------------------------------------------------
def _pick_row_tile(oh, blk_bytes_fn, budget):
    for tr in range(oh, 0, -1):        # largest divisor of oh that fits the budget
        if oh % tr == 0 and blk_bytes_fn(tr) <= budget:
            return tr
    return 1


def conv_gdn_layer(x_nhwc, w, bias, gamma_t=None, beta=None, *,
                   out_channels, fold_all_taps):
    """x_nhwc: (B,H,W,Cin) real channels; w: (taps_r,taps_q,K,Cout_pad) bf16."""
    apply_gdn = gamma_t is not None
    b, h, wd, cin = x_nhwc.shape
    oh, ow = h // 2, wd // 2
    ow_pad = _round_up(max(ow, 8), 8)
    taps_r, taps_q, k_pad, cout_pad = w.shape

    # TF-style "same" padding (kernel 5, stride 2), matching the torch Conv2D wrapper.
    pad_top = max((oh - 1) * 2 + 5 - h, 0) // 2
    pad_left = max((ow - 1) * 2 + 5 - wd, 0) // 2

    # ---- glue: pad + space-to-depth(2).  No width-tap HBM expansion. ----
    x = x_nhwc.astype(jnp.bfloat16)
    hp, wp = 2 * (oh + 2), 2 * (ow_pad + 2)
    x = jnp.pad(x, ((0, 0), (pad_top, hp - h - pad_top),
                    (pad_left, wp - wd - pad_left), (0, 0)))
    x = x.reshape(b, oh + 2, 2, ow_pad + 2, 2, cin)
    x = jnp.transpose(x, (0, 1, 3, 2, 4, 5)).reshape(b, oh + 2, ow_pad + 2, 4 * cin)

    if fold_all_taps:
        # conv1 only: fold all 9 taps into channels (cheap: Cin=3) -> one K=128 matmul,
        # halo-free non-overlapping row tiles.
        x = jnp.concatenate([x[:, r:r + oh, q:q + ow_pad, :]
                             for r in range(3) for q in range(3)], axis=-1)
        k_real = 36 * cin
    else:
        k_real = 4 * cin
    if k_pad > k_real:
        x = jnp.pad(x, ((0, 0), (0, 0), (0, 0), (0, k_pad - k_real)))

    out_dtype = jnp.bfloat16 if apply_gdn else jnp.float32
    out_bytes = 2 if apply_gdn else 4
    halo = 0 if fold_all_taps else 2
    wv = ow_pad + halo

    def blk_bytes(tr):
        x_b = (tr + halo) * wv * k_pad * 2
        o_b = tr * ow_pad * cout_pad * out_bytes
        w_b = taps_r * taps_q * k_pad * cout_pad * 2
        g_b = (cout_pad * cout_pad * 2 + cout_pad * 4) if apply_gdn else 0
        tmp = 4 * tr * ow_pad * cout_pad * 4                # f32 acc / y^2 / norm temps
        # x2: Pallas double-buffers every pipelined operand (params included).
        return 2 * (x_b + o_b + w_b + g_b + cout_pad * 4) + tmp

    tr = _pick_row_tile(oh, blk_bytes, _BLOCK_BUDGET)
    n_tiles = oh // tr

    if fold_all_taps:
        x_in = x                                             # (B, OH, OW_pad, K): no halo
        x_spec = pl.BlockSpec((None, tr, ow_pad, k_pad), lambda bb, tt: (bb, tt, 0, 0))
    else:
        if n_tiles == 1:
            x_in = x[:, None]                                # (B, 1, OH+2, OW_pad+2, K)
        else:
            # TODO(synk): replace this halo-duplicating stack with an overlapping-window
            # fetch (manual pltpu.make_async_copy) to avoid the extra HBM pass when tiling.
            x_in = jnp.stack([x[:, t * tr:t * tr + tr + 2] for t in range(n_tiles)],
                             axis=1)
        x_spec = pl.BlockSpec((None, None, tr + 2, wv, k_pad),
                              lambda bb, tt: (bb, tt, 0, 0, 0))

    in_specs = [x_spec,
                pl.BlockSpec((taps_r, taps_q, k_pad, cout_pad),
                             lambda bb, tt: (0, 0, 0, 0)),
                pl.BlockSpec((1, cout_pad), lambda bb, tt: (0, 0))]
    args = [x_in, w, bias]
    if apply_gdn:
        kernel = _conv_bias_gdn_kernel
        in_specs += [pl.BlockSpec((cout_pad, cout_pad), lambda bb, tt: (0, 0)),
                     pl.BlockSpec((1, cout_pad), lambda bb, tt: (0, 0))]
        args += [gamma_t, beta]
    else:
        kernel = _conv_bias_kernel

    # Advisory cost estimate for the XLA scheduler.
    flops = 2 * b * oh * ow_pad * taps_r * taps_q * k_pad * cout_pad
    transcendentals = 0
    bytes_accessed = (x_in.size * 2 + w.size * 2 + bias.size * 4
                      + b * oh * ow_pad * cout_pad * out_bytes)
    if apply_gdn:
        flops += b * oh * ow_pad * (2 * cout_pad * cout_pad + 6 * cout_pad)
        transcendentals = b * oh * ow_pad * cout_pad
        bytes_accessed += gamma_t.size * 2 + beta.size * 4

    out = pl.pallas_call(
        kernel,
        grid=(b, n_tiles),
        in_specs=in_specs,
        out_specs=pl.BlockSpec((None, tr, ow_pad, cout_pad),
                               lambda bb, tt: (bb, tt, 0, 0)),
        out_shape=jax.ShapeDtypeStruct((b, oh, ow_pad, cout_pad), out_dtype),
        compiler_params=pltpu.CompilerParams(
            dimension_semantics=("parallel", "parallel"),
            vmem_limit_bytes=_VMEM_LIMIT),
        cost_estimate=pl.CostEstimate(flops=int(flops),
                                      transcendentals=int(transcendentals),
                                      bytes_accessed=int(bytes_accessed)),
    )(*args)

    # Drop width / channel padding once per layer (fuses into the next layer's glue).
    return out[:, :, :ow, :out_channels]


# -----------------------------------------------------------------------------
# Parameter construction (deterministic synthetic; torch layouts -> kernel layouts)
# -----------------------------------------------------------------------------
def _make_conv_params(key, cin, cout, cout_pad, *, fold_all_taps, scale=0.05):
    kw_key, kb_key = jax.random.split(key)
    w = scale * jax.random.normal(kw_key, (cout, cin, 5, 5), jnp.float32)
    bias = scale * jax.random.normal(kb_key, (cout,), jnp.float32)
    # Pad Cout -> Cout_pad (lane-dense stores) and 5x5 -> 6x6 (zeros) for the s2d split.
    w6 = jnp.pad(w, ((0, cout_pad - cout), (0, 0), (0, 1), (0, 1)))
    # [co, c, kr=2r+s, kw=2q+p] -> (r, q, s, p, c, co)
    w6 = w6.reshape(cout_pad, cin, 3, 2, 3, 2)
    w6 = jnp.transpose(w6, (2, 4, 3, 5, 1, 0))
    if fold_all_taps:
        k_real, k_fin = 36 * cin, _round_up(36 * cin, LANE)
        wk = w6.reshape(1, 1, k_real, cout_pad)
    else:
        k_real, k_fin = 4 * cin, _round_up(4 * cin, 16)
        wk = w6.reshape(3, 3, k_real, cout_pad)
    wk = jnp.pad(wk, ((0, 0), (0, 0), (0, k_fin - k_real), (0, 0))).astype(jnp.bfloat16)
    bias_p = jnp.pad(bias, (0, cout_pad - cout)).reshape(1, cout_pad)
    return wk, bias_p


def _make_gdn_params(c, c_pad):
    beta = jnp.ones((c,), jnp.float32)               # compressai default beta init
    gamma = 0.1 * jnp.eye(c, dtype=jnp.float32)      # compressai default gamma init
    gamma_t = jnp.pad(gamma.T, ((0, c_pad - c), (0, c_pad - c))).astype(jnp.bfloat16)
    beta_p = jnp.pad(beta, (0, c_pad - c), constant_values=1.0).reshape(1, c_pad)
    return gamma_t, beta_p


def make_encoder_params(n_ch, m_ch, key):
    n_pad, m_pad = _round_up(n_ch, LANE), _round_up(m_ch, LANE)
    k1, k2, k3, k4 = jax.random.split(key, 4)
    return {
        "conv1": _make_conv_params(k1, 3, n_ch, n_pad, fold_all_taps=True),
        "gdn1": _make_gdn_params(n_ch, n_pad),
        "conv2": _make_conv_params(k2, n_ch, n_ch, n_pad, fold_all_taps=False),
        "gdn2": _make_gdn_params(n_ch, n_pad),
        "conv3": _make_conv_params(k3, n_ch, n_ch, n_pad, fold_all_taps=False),
        "gdn3": _make_gdn_params(n_ch, n_pad),
        "conv4": _make_conv_params(k4, n_ch, m_ch, m_pad, fold_all_taps=False),
    }


# -----------------------------------------------------------------------------
# Encoder forward (NCHW in / NCHW out; internally NHWC, real channels, padded Cout)
# -----------------------------------------------------------------------------
@functools.partial(jax.jit, static_argnames=("n_ch", "m_ch"))
def encoder_forward(x_nchw, params, *, n_ch, m_ch):
    x = jnp.transpose(x_nchw, (0, 2, 3, 1))  # NCHW -> NHWC
    for i in (1, 2, 3):
        wk, bias = params[f"conv{i}"]
        gamma_t, beta = params[f"gdn{i}"]
        x = conv_gdn_layer(x, wk, bias, gamma_t, beta,
                           out_channels=n_ch, fold_all_taps=(i == 1))
    wk, bias = params["conv4"]
    x = conv_gdn_layer(x, wk, bias, out_channels=m_ch, fold_all_taps=False)
    return jnp.transpose(x, (0, 3, 1, 2)).astype(jnp.float32)  # NHWC -> NCHW


if __name__ == "__main__":
    key = jax.random.PRNGKey(0)
    k_in, k_par = jax.random.split(key)

    N, M = 8, 16
    x = jax.random.normal(k_in, (2, 3, 32, 32), jnp.float32)  # NCHW input
    params = make_encoder_params(N, M, k_par)

    y = encoder_forward(x, params, n_ch=N, m_ch=M)
    jax.block_until_ready(y)

    assert y.shape == (2, M, 2, 2), y.shape  # 32 -> 16 -> 8 -> 4 -> 2 spatially
    assert bool(jnp.all(jnp.isfinite(y)))
    print("KERNEL_OK")
</pallas_src>

<mosaic_0001>
module attributes {stable_mosaic.version = 11 : i64} {
  func.func @_conv_bias_gdn_kernel(%arg0: i32, %arg1: i32, %arg2: memref<1x16x16x128xbf16, #tpu.memory_space<vmem>>, %arg3: memref<1x1x128x128xbf16, #tpu.memory_space<vmem>>, %arg4: memref<1x128xf32, #tpu.memory_space<vmem>>, %arg5: memref<128x128xbf16, #tpu.memory_space<vmem>>, %arg6: memref<1x128xf32, #tpu.memory_space<vmem>>, %arg7: memref<1x16x16x128xbf16, #tpu.memory_space<vmem>>) attributes {dimension_semantics = [#tpu.dimension_semantics<parallel>, #tpu.dimension_semantics<parallel>], iteration_bounds = array<i64: 2, 1>, scalar_prefetch = 0 : i64, scratch_operands = 0 : i64, tpu.core_type = #tpu.core_type<tc>, window_params = [{transform_indices = @transform_0, window_bounds = array<i64: 1, 16, 16, 128>}, {pipeline_mode = #tpu.pipeline_mode<synchronous>, transform_indices = @transform_1, window_bounds = array<i64: 1, 1, 128, 128>}, {pipeline_mode = #tpu.pipeline_mode<synchronous>, transform_indices = @transform_2, window_bounds = array<i64: 1, 128>}, {pipeline_mode = #tpu.pipeline_mode<synchronous>, transform_indices = @transform_3, window_bounds = array<i64: 128, 128>}, {pipeline_mode = #tpu.pipeline_mode<synchronous>, transform_indices = @transform_4, window_bounds = array<i64: 1, 128>}, {transform_indices = @transform_5, window_bounds = array<i64: 1, 16, 16, 128>}]} {
    %cst = arith.constant 0.000000e+00 : f32
    %0 = vector.broadcast %cst : f32 to vector<256x128xf32>
    %c0 = arith.constant 0 : index
    %c0_0 = arith.constant 0 : index
    %c0_1 = arith.constant 0 : index
    %c0_2 = arith.constant 0 : index
    %1 = vector.load %arg2[%c0, %c0_0, %c0_1, %c0_2] : memref<1x16x16x128xbf16, #tpu.memory_space<vmem>>, vector<1x16x16x128xbf16>
    %2 = vector.shape_cast %1 : vector<1x16x16x128xbf16> to vector<16x16x128xbf16>
    %3 = vector.shape_cast %2 : vector<16x16x128xbf16> to vector<256x128xbf16>
    %c0_3 = arith.constant 0 : index
    %c0_4 = arith.constant 0 : index
    %c0_5 = arith.constant 0 : index
    %c0_6 = arith.constant 0 : index
    %4 = vector.load %arg3[%c0_3, %c0_4, %c0_5, %c0_6] : memref<1x1x128x128xbf16, #tpu.memory_space<vmem>>, vector<1x1x128x128xbf16>
    %5 = vector.shape_cast %4 : vector<1x1x128x128xbf16> to vector<128x128xbf16>
    %cst_7 = arith.constant dense<0.000000e+00> : vector<256x128xf32>
    %6 = tpu.matmul %3, %5, %cst_7 {dimension_numbers = #tpu.dot_dimension_numbers<[1], [0], [0], [1], [0, 0, 1, 1], [], []>} : vector<256x128xbf16>, vector<128x128xbf16>, vector<256x128xf32> -> vector<256x128xf32>
    %7 = arith.addf %0, %6 : vector<256x128xf32>
    %c0_8 = arith.constant 0 : index
    %c0_9 = arith.constant 0 : index
    %8 = vector.load %arg4[%c0_8, %c0_9] : memref<1x128xf32, #tpu.memory_space<vmem>>, vector<1x128xf32>
    %9 = vector.broadcast %8 : vector<1x128xf32> to vector<256x128xf32>
    %10 = arith.addf %7, %9 : vector<256x128xf32>
    %11 = arith.mulf %10, %10 : vector<256x128xf32>
    %12 = arith.truncf %11 : vector<256x128xf32> to vector<256x128xbf16>
    %c0_10 = arith.constant 0 : index
    %c0_11 = arith.constant 0 : index
    %13 = vector.load %arg5[%c0_10, %c0_11] : memref<128x128xbf16, #tpu.memory_space<vmem>>, vector<128x128xbf16>
    %cst_12 = arith.constant dense<0.000000e+00> : vector<256x128xf32>
    %14 = tpu.matmul %12, %13, %cst_12 {dimension_numbers = #tpu.dot_dimension_numbers<[1], [0], [0], [1], [0, 0, 1, 1], [], []>} : vector<256x128xbf16>, vector<128x128xbf16>, vector<256x128xf32> -> vector<256x128xf32>
    %c0_13 = arith.constant 0 : index
    %c0_14 = arith.constant 0 : index
    %15 = vector.load %arg6[%c0_13, %c0_14] : memref<1x128xf32, #tpu.memory_space<vmem>>, vector<1x128xf32>
    %16 = vector.broadcast %15 : vector<1x128xf32> to vector<256x128xf32>
    %17 = arith.addf %14, %16 : vector<256x128xf32>
    %cst_15 = arith.constant 9.99999997E-7 : f32
    %18 = vector.broadcast %cst_15 : f32 to vector<256x128xf32>
    %19 = arith.maximumf %17, %18 : vector<256x128xf32>
    %20 = math.rsqrt %19 : vector<256x128xf32>
    %21 = arith.mulf %10, %20 : vector<256x128xf32>
    %22 = vector.shape_cast %21 : vector<256x128xf32> to vector<16x16x128xf32>
    %23 = arith.truncf %22 : vector<16x16x128xf32> to vector<16x16x128xbf16>
    %c0_16 = arith.constant 0 : index
    %c0_17 = arith.constant 0 : index
    %c0_18 = arith.constant 0 : index
    %c0_19 = arith.constant 0 : index
    %24 = vector.load %arg7[%c0_16, %c0_17, %c0_18, %c0_19] : memref<1x16x16x128xbf16, #tpu.memory_space<vmem>>, vector<1x16x16x128xbf16>
    %25 = vector.shape_cast %24 : vector<1x16x16x128xbf16> to vector<16x16x128xbf16>
    %26 = vector.shape_cast %23 : vector<16x16x128xbf16> to vector<1x16x16x128xbf16>
    tpu.vector_store %arg7[%c0_16, %c0_17, %c0_18, %c0_19], %26 {strides = array<i32>} : memref<1x16x16x128xbf16, #tpu.memory_space<vmem>>, vector<1x16x16x128xbf16>,
    return
  }
  func.func @transform_0(%arg0: i32, %arg1: i32) -> (i32, i32, i32, i32) {
    %c0_i32 = arith.constant 0 : i32
    %c0_i32_0 = arith.constant 0 : i32
    %c0_i32_1 = arith.constant 0 : i32
    return %arg0, %arg1, %c0_i32, %c0_i32_0 : i32, i32, i32, i32
  }
  func.func @transform_1(%arg0: i32, %arg1: i32) -> (i32, i32, i32, i32) {
    %c0_i32 = arith.constant 0 : i32
    %c0_i32_0 = arith.constant 0 : i32
    %c0_i32_1 = arith.constant 0 : i32
    %c0_i32_2 = arith.constant 0 : i32
    %c0_i32_3 = arith.constant 0 : i32
    return %c0_i32, %c0_i32_0, %c0_i32_1, %c0_i32_2 : i32, i32, i32, i32
  }
  func.func @transform_2(%arg0: i32, %arg1: i32) -> (i32, i32) {
    %c0_i32 = arith.constant 0 : i32
    %c0_i32_0 = arith.constant 0 : i32
    %c0_i32_1 = arith.constant 0 : i32
    return %c0_i32, %c0_i32_0 : i32, i32
  }
  func.func @transform_3(%arg0: i32, %arg1: i32) -> (i32, i32) {
    %c0_i32 = arith.constant 0 : i32
    %c0_i32_0 = arith.constant 0 : i32
    %c0_i32_1 = arith.constant 0 : i32
    return %c0_i32, %c0_i32_0 : i32, i32
  }
  func.func @transform_4(%arg0: i32, %arg1: i32) -> (i32, i32) {
    %c0_i32 = arith.constant 0 : i32
    %c0_i32_0 = arith.constant 0 : i32
    %c0_i32_1 = arith.constant 0 : i32
    return %c0_i32, %c0_i32_0 : i32, i32
  }
  func.func @transform_5(%arg0: i32, %arg1: i32) -> (i32, i32, i32, i32) {
    %c0_i32 = arith.constant 0 : i32
    %c0_i32_0 = arith.constant 0 : i32
    %c0_i32_1 = arith.constant 0 : i32
    return %arg0, %arg1, %c0_i32, %c0_i32_0 : i32, i32, i32, i32
  }
}

module attributes {stable_mosaic.version = 11 : i64} {
  func.func @_conv_bias_gdn_kernel(%arg0: i32, %arg1: i32, %arg2: memref<1x1x10x10x32xbf16, #tpu.memory_space<vmem>>, %arg3: memref<3x3x32x128xbf16, #tpu.memory_space<vmem>>, %arg4: memref<1x128xf32, #tpu.memory_space<vmem>>, %arg5: memref<128x128xbf16, #tpu.memory_space<vmem>>, %arg6: memref<1x128xf32, #tpu.memory_space<vmem>>, %arg7: memref<1x8x8x128xbf16, #tpu.memory_space<vmem>>) attributes {dimension_semantics = [#tpu.dimension_semantics<parallel>, #tpu.dimension_semantics<parallel>], iteration_bounds = array<i64: 2, 1>, scalar_prefetch = 0 : i64, scratch_operands = 0 : i64, tpu.core_type = #tpu.core_type<tc>, window_params = [{transform_indices = @transform_0, window_bounds = array<i64: 1, 1, 10, 10, 32>}, {pipeline_mode = #tpu.pipeline_mode<synchronous>, transform_indices = @transform_1, window_bounds = array<i64: 3, 3, 32, 128>}, {pipeline_mode = #tpu.pipeline_mode<synchronous>, transform_indices = @transform_2, window_bounds = array<i64: 1, 128>}, {pipeline_mode = #tpu.pipeline_mode<synchronous>, transform_indices = @transform_3, window_bounds = array<i64: 128, 128>}, {pipeline_mode = #tpu.pipeline_mode<synchronous>, transform_indices = @transform_4, window_bounds = array<i64: 1, 128>}, {transform_indices = @transform_5, window_bounds = array<i64: 1, 8, 8, 128>}]} {
    %cst = arith.constant 0.000000e+00 : f32
    %0 = vector.broadcast %cst : f32 to vector<64x128xf32>
    %c0 = arith.constant 0 : index
    %c0_0 = arith.constant 0 : index
    %c0_1 = arith.constant 0 : index
    %c0_2 = arith.constant 0 : index
    %c0_3 = arith.constant 0 : index
    %1 = vector.load %arg2[%c0, %c0_0, %c0_1, %c0_2, %c0_3] : memref<1x1x10x10x32xbf16, #tpu.memory_space<vmem>>, vector<1x1x8x8x32xbf16>
    %2 = vector.shape_cast %1 : vector<1x1x8x8x32xbf16> to vector<8x8x32xbf16>
    %3 = vector.shape_cast %2 : vector<8x8x32xbf16> to vector<64x32xbf16>
    %c0_4 = arith.constant 0 : index
    %c0_5 = arith.constant 0 : index
    %c0_6 = arith.constant 0 : index
    %c0_7 = arith.constant 0 : index
    %4 = vector.load %arg3[%c0_4, %c0_5, %c0_6, %c0_7] : memref<3x3x32x128xbf16, #tpu.memory_space<vmem>>, vector<1x1x32x128xbf16>
    %5 = vector.shape_cast %4 : vector<1x1x32x128xbf16> to vector<32x128xbf16>
    %cst_8 = arith.constant dense<0.000000e+00> : vector<64x128xf32>
    %6 = tpu.matmul %3, %5, %cst_8 {dimension_numbers = #tpu.dot_dimension_numbers<[1], [0], [0], [1], [0, 0, 1, 1], [], []>} : vector<64x32xbf16>, vector<32x128xbf16>, vector<64x128xf32> -> vector<64x128xf32>
    %7 = arith.addf %0, %6 : vector<64x128xf32>
    %c0_9 = arith.constant 0 : index
    %c0_10 = arith.constant 0 : index
    %c0_11 = arith.constant 0 : index
    %c1 = arith.constant 1 : index
    %c0_12 = arith.constant 0 : index
    %8 = vector.load %arg2[%c0_9, %c0_10, %c0_11, %c1, %c0_12] : memref<1x1x10x10x32xbf16, #tpu.memory_space<vmem>>, vector<1x1x8x8x32xbf16>
    %9 = vector.shape_cast %8 : vector<1x1x8x8x32xbf16> to vector<8x8x32xbf16>
    %10 = vector.shape_cast %9 : vector<8x8x32xbf16> to vector<64x32xbf16>
    %c0_13 = arith.constant 0 : index
    %c1_14 = arith.constant 1 : index
    %c0_15 = arith.constant 0 : index
    %c0_16 = arith.constant 0 : index
    %11 = vector.load %arg3[%c0_13, %c1_14, %c0_15, %c0_16] : memref<3x3x32x128xbf16, #tpu.memory_space<vmem>>, vector<1x1x32x128xbf16>
    %12 = vector.shape_cast %11 : vector<1x1x32x128xbf16> to vector<32x128xbf16>
    %cst_17 = arith.constant dense<0.000000e+00> : vector<64x128xf32>
    %13 = tpu.matmul %10, %12, %cst_17 {dimension_numbers = #tpu.dot_dimension_numbers<[1], [0], [0], [1], [0, 0, 1, 1], [], []>} : vector<64x32xbf16>, vector<32x128xbf16>, vector<64x128xf32> -> vector<64x128xf32>
    %14 = arith.addf %7, %13 : vector<64x128xf32>
    %c0_18 = arith.constant 0 : index
    %c0_19 = arith.constant 0 : index
    %c0_20 = arith.constant 0 : index
    %c2 = arith.constant 2 : index
    %c0_21 = arith.constant 0 : index
    %15 = vector.load %arg2[%c0_18, %c0_19, %c0_20, %c2, %c0_21] : memref<1x1x10x10x32xbf16, #tpu.memory_space<vmem>>, vector<1x1x8x8x32xbf16>
    %16 = vector.shape_cast %15 : vector<1x1x8x8x32xbf16> to vector<8x8x32xbf16>
    %17 = vector.shape_cast %16 : vector<8x8x32xbf16> to vector<64x32xbf16>
    %c0_22 = arith.constant 0 : index
    %c2_23 = arith.constant 2 : index
    %c0_24 = arith.constant 0 : index
    %c0_25 = arith.constant 0 : index
    %18 = vector.load %arg3[%c0_22, %c2_23, %c0_24, %c0_25] : memref<3x3x32x128xbf16, #tpu.memory_space<vmem>>, vector<1x1x32x128xbf16>
    %19 = vector.shape_cast %18 : vector<1x1x32x128xbf16> to vector<32x128xbf16>
    %cst_26 = arith.constant dense<0.000000e+00> : vector<64x128xf32>
    %20 = tpu.matmul %17, %19, %cst_26 {dimension_numbers = #tpu.dot_dimension_numbers<[1], [0], [0], [1], [0, 0, 1, 1], [], []>} : vector<64x32xbf16>, vector<32x128xbf16>, vector<64x128xf32> -> vector<64x128xf32>
    %21 = arith.addf %14, %20 : vector<64x128xf32>
    %c0_27 = arith.constant 0 : index
    %c0_28 = arith.constant 0 : index
    %c1_29 = arith.constant 1 : index
    %c0_30 = arith.constant 0 : index
    %c0_31 = arith.constant 0 : index
    %22 = vector.load %arg2[%c0_27, %c0_28, %c1_29, %c0_30, %c0_31] : memref<1x1x10x10x32xbf16, #tpu.memory_space<vmem>>, vector<1x1x8x8x32xbf16>
    %23 = vector.shape_cast %22 : vector<1x1x8x8x32xbf16> to vector<8x8x32xbf16>
    %24 = vector.shape_cast %23 : vector<8x8x32xbf16> to vector<64x32xbf16>
    %c1_32 = arith.constant 1 : index
    %c0_33 = arith.constant 0 : index
    %c0_34 = arith.constant 0 : index
    %c0_35 = arith.constant 0 : index
    %25 = vector.load %arg3[%c1_32, %c0_33, %c0_34, %c0_35] : memref<3x3x32x128xbf16, #tpu.memory_space<vmem>>, vector<1x1x32x128xbf16>
    %26 = vector.shape_cast %25 : vector<1x1x32x128xbf16> to vector<32x128xbf16>
    %cst_36 = arith.constant dense<0.000000e+00> : vector<64x128xf32>
    %27 = tpu.matmul %24, %26, %cst_36 {dimension_numbers = #tpu.dot_dimension_numbers<[1], [0], [0], [1], [0, 0, 1, 1], [], []>} : vector<64x32xbf16>, vector<32x128xbf16>, vector<64x128xf32> -> vector<64x128xf32>
    %28 = arith.addf %21, %27 : vector<64x128xf32>
    %c0_37 = arith.constant 0 : index
    %c0_38 = arith.constant 0 : index
    %c1_39 = arith.constant 1 : index
    %c1_40 = arith.constant 1 : index
    %c0_41 = arith.constant 0 : index
    %29 = vector.load %arg2[%c0_37, %c0_38, %c1_39, %c1_40, %c0_41] : memref<1x1x10x10x32xbf16, #tpu.memory_space<vmem>>, vector<1x1x8x8x32xbf16>
    %30 = vector.shape_cast %29 : vector<1x1x8x8x32xbf16> to vector<8x8x32xbf16>
    %31 = vector.shape_cast %30 : vector<8x8x32xbf16> to vector<64x32xbf16>
    %c1_42 = arith.constant 1 : index
    %c1_43 = arith.constant 1 : index
    %c0_44 = arith.constant 0 : index
    %c0_45 = arith.constant 0 : index
    %32 = vector.load %arg3[%c1_42, %c1_43, %c0_44, %c0_45] : memref<3x3x32x128xbf16, #tpu.memory_space<vmem>>, vector<1x1x32x128xbf16>
    %33 = vector.shape_cast %32 : vector<1x1x32x128xbf16> to vector<32x128xbf16>
    %cst_46 = arith.constant dense<0.000000e+00> : vector<64x128xf32>
    %34 = tpu.matmul %31, %33, %cst_46 {dimension_numbers = #tpu.dot_dimension_numbers<[1], [0], [0], [1], [0, 0, 1, 1], [], []>} : vector<64x32xbf16>, vector<32x128xbf16>, vector<64x128xf32> -> vector<64x128xf32>
    %35 = arith.addf %28, %34 : vector<64x128xf32>
    %c0_47 = arith.constant 0 : index
    %c0_48 = arith.constant 0 : index
    %c1_49 = arith.constant 1 : index
    %c2_50 = arith.constant 2 : index
    %c0_51 = arith.constant 0 : index
    %36 = vector.load %arg2[%c0_47, %c0_48, %c1_49, %c2_50, %c0_51] : memref<1x1x10x10x32xbf16, #tpu.memory_space<vmem>>, vector<1x1x8x8x32xbf16>
    %37 = vector.shape_cast %36 : vector<1x1x8x8x32xbf16> to vector<8x8x32xbf16>
    %38 = vector.shape_cast %37 : vector<8x8x32xbf16> to vector<64x32xbf16>
    %c1_52 = arith.constant 1 : index
    %c2_53 = arith.constant 2 : index
    %c0_54 = arith.constant 0 : index
    %c0_55 = arith.constant 0 : index
    %39 = vector.load %arg3[%c1_52, %c2_53, %c0_54, %c0_55] : memref<3x3x32x128xbf16, #tpu.memory_space<vmem>>, vector<1x1x32x128xbf16>
    %40 = vector.shape_cast %39 : vector<1x1x32x128xbf16> to vector<32x128xbf16>
    %cst_56 = arith.constant dense<0.000000e+00> : vector<64x128xf32>
    %41 = tpu.matmul %38, %40, %cst_56 {dimension_numbers = #tpu.dot_dimension_numbers<[1], [0], [0], [1], [0, 0, 1, 1], [], []>} : vector<64x32xbf16>, vector<32x128xbf16>, vector<64x128xf32> -> vector<64x128xf32>
    %42 = arith.addf %35, %41 : vector<64x128xf32>
    %c0_57 = arith.constant 0 : index
    %c0_58 = arith.constant 0 : index
    %c2_59 = arith.constant 2 : index
    %c0_60 = arith.constant 0 : index
    %c0_61 = arith.constant 0 : index
    %43 = vector.load %arg2[%c0_57, %c0_58, %c2_59, %c0_60, %c0_61] : memref<1x1x10x10x32xbf16, #tpu.memory_space<vmem>>, vector<1x1x8x8x32xbf16>
    %44 = vector.shape_cast %43 : vector<1x1x8x8x32xbf16> to vector<8x8x32xbf16>
    %45 = vector.shape_cast %44 : vector<8x8x32xbf16> to vector<64x32xbf16>
    %c2_62 = arith.constant 2 : index
    %c0_63 = arith.constant 0 : index
    %c0_64 = arith.constant 0 : index
    %c0_65 = arith.constant 0 : index
    %46 = vector.load %arg3[%c2_62, %c0_63, %c0_64, %c0_65] : memref<3x3x32x128xbf16, #tpu.memory_space<vmem>>, vector<1x1x32x128xbf16>
    %47 = vector.shape_cast %46 : vector<1x1x32x128xbf16> to vector<32x128xbf16>
    %cst_66 = arith.constant dense<0.000000e+00> : vector<64x128xf32>
    %48 = tpu.matmul %45, %47, %cst_66 {dimension_numbers = #tpu.dot_dimension_numbers<[1], [0], [0], [1], [0, 0, 1, 1], [], []>} : vector<64x32xbf16>, vector<32x128xbf16>, vector<64x128xf32> -> vector<64x128xf32>
    %49 = arith.addf %42, %48 : vector<64x128xf32>
    %c0_67 = arith.constant 0 : index
    %c0_68 = arith.constant 0 : index
    %c2_69 = arith.constant 2 : index
    %c1_70 = arith.constant 1 : index
    %c0_71 = arith.constant 0 : index
    %50 = vector.load %arg2[%c0_67, %c0_68, %c2_69, %c1_70, %c0_71] : memref<1x1x10x10x32xbf16, #tpu.memory_space<vmem>>, vector<1x1x8x8x32xbf16>
    %51 = vector.shape_cast %50 : vector<1x1x8x8x32xbf16> to vector<8x8x32xbf16>
    %52 = vector.shape_cast %51 : vector<8x8x32xbf16> to vector<64x32xbf16>
    %c2_72 = arith.constant 2 : index
    %c1_73 = arith.constant 1 : index
    %c0_74 = arith.constant 0 : index
    %c0_75 = arith.constant 0 : index
    %53 = vector.load %arg3[%c2_72, %c1_73, %c0_74, %c0_75] : memref<3x3x32x128xbf16, #tpu.memory_space<vmem>>, vector<1x1x32x128xbf16>
    %54 = vector.shape_cast %53 : vector<1x1x32x128xbf16> to vector<32x128xbf16>
    %cst_76 = arith.constant dense<0.000000e+00> : vector<64x128xf32>
    %55 = tpu.matmul %52, %54, %cst_76 {dimension_numbers = #tpu.dot_dimension_numbers<[1], [0], [0], [1], [0, 0, 1, 1], [], []>} : vector<64x32xbf16>, vector<32x128xbf16>, vector<64x128xf32> -> vector<64x128xf32>
    %56 = arith.addf %49, %55 : vector<64x128xf32>
    %c0_77 = arith.constant 0 : index
    %c0_78 = arith.constant 0 : index
    %c2_79 = arith.constant 2 : index
    %c2_80 = arith.constant 2 : index
    %c0_81 = arith.constant 0 : index
    %57 = vector.load %arg2[%c0_77, %c0_78, %c2_79, %c2_80, %c0_81] : memref<1x1x10x10x32xbf16, #tpu.memory_space<vmem>>, vector<1x1x8x8x32xbf16>
    %58 = vector.shape_cast %57 : vector<1x1x8x8x32xbf16> to vector<8x8x32xbf16>
    %59 = vector.shape_cast %58 : vector<8x8x32xbf16> to vector<64x32xbf16>
    %c2_82 = arith.constant 2 : index
    %c2_83 = arith.constant 2 : index
    %c0_84 = arith.constant 0 : index
    %c0_85 = arith.constant 0 : index
    %60 = vector.load %arg3[%c2_82, %c2_83, %c0_84, %c0_85] : memref<3x3x32x128xbf16, #tpu.memory_space<vmem>>, vector<1x1x32x128xbf16>
    %61 = vector.shape_cast %60 : vector<1x1x32x128xbf16> to vector<32x128xbf16>
    %cst_86 = arith.constant dense<0.000000e+00> : vector<64x128xf32>
    %62 = tpu.matmul %59, %61, %cst_86 {dimension_numbers = #tpu.dot_dimension_numbers<[1], [0], [0], [1], [0, 0, 1, 1], [], []>} : vector<64x32xbf16>, vector<32x128xbf16>, vector<64x128xf32> -> vector<64x128xf32>
    %63 = arith.addf %56, %62 : vector<64x128xf32>
    %c0_87 = arith.constant 0 : index
    %c0_88 = arith.constant 0 : index
    %64 = vector.load %arg4[%c0_87, %c0_88] : memref<1x128xf32, #tpu.memory_space<vmem>>, vector<1x128xf32>
    %65 = vector.broadcast %64 : vector<1x128xf32> to vector<64x128xf32>
    %66 = arith.addf %63, %65 : vector<64x128xf32>
    %67 = arith.mulf %66, %66 : vector<64x128xf32>
    %68 = arith.truncf %67 : vector<64x128xf32> to vector<64x128xbf16>
    %c0_89 = arith.constant 0 : index
    %c0_90 = arith.constant 0 : index
    %69 = vector.load %arg5[%c0_89, %c0_90] : memref<128x128xbf16, #tpu.memory_space<vmem>>, vector<128x128xbf16>
    %cst_91 = arith.constant dense<0.000000e+00> : vector<64x128xf32>
    %70 = tpu.matmul %68, %69, %cst_91 {dimension_numbers = #tpu.dot_dimension_numbers<[1], [0], [0], [1], [0, 0, 1, 1], [], []>} : vector<64x128xbf16>, vector<128x128xbf16>, vector<64x128xf32> -> vector<64x128xf32>
    %c0_92 = arith.constant 0 : index
    %c0_93 = arith.constant 0 : index
    %71 = vector.load %arg6[%c0_92, %c0_93] : memref<1x128xf32, #tpu.memory_space<vmem>>, vector<1x128xf32>
    %72 = vector.broadcast %71 : vector<1x128xf32> to vector<64x128xf32>
    %73 = arith.addf %70, %72 : vector<64x128xf32>
    %cst_94 = arith.constant 9.99999997E-7 : f32
    %74 = vector.broadcast %cst_94 : f32 to vector<64x128xf32>
    %75 = arith.maximumf %73, %74 : vector<64x128xf32>
    %76 = math.rsqrt %75 : vector<64x128xf32>
    %77 = arith.mulf %66, %76 : vector<64x128xf32>
    %78 = vector.shape_cast %77 : vector<64x128xf32> to vector<8x8x128xf32>
    %79 = arith.truncf %78 : vector<8x8x128xf32> to vector<8x8x128xbf16>
    %c0_95 = arith.constant 0 : index
    %c0_96 = arith.constant 0 : index
    %c0_97 = arith.constant 0 : index
    %c0_98 = arith.constant 0 : index
    %80 = vector.load %arg7[%c0_95, %c0_96, %c0_97, %c0_98] : memref<1x8x8x128xbf16, #tpu.memory_space<vmem>>, vector<1x8x8x128xbf16>
    %81 = vector.shape_cast %80 : vector<1x8x8x128xbf16> to vector<8x8x128xbf16>
    %82 = vector.shape_cast %79 : vector<8x8x128xbf16> to vector<1x8x8x128xbf16>
    tpu.vector_store %arg7[%c0_95, %c0_96, %c0_97, %c0_98], %82 {strides = array<i32>} : memref<1x8x8x128xbf16, #tpu.memory_space<vmem>>, vector<1x8x8x128xbf16>,
    return
  }
  func.func @transform_0(%arg0: i32, %arg1: i32) -> (i32, i32, i32, i32, i32) {
    %c0_i32 = arith.constant 0 : i32
    %c0_i32_0 = arith.constant 0 : i32
    %c0_i32_1 = arith.constant 0 : i32
    %c0_i32_2 = arith.constant 0 : i32
    return %arg0, %arg1, %c0_i32, %c0_i32_0, %c0_i32_1 : i32, i32, i32, i32, i32
  }
  func.func @transform_1(%arg0: i32, %arg1: i32) -> (i32, i32, i32, i32) {
    %c0_i32 = arith.constant 0 : i32
    %c0_i32_0 = arith.constant 0 : i32
    %c0_i32_1 = arith.constant 0 : i32
    %c0_i32_2 = arith.constant 0 : i32
    %c0_i32_3 = arith.constant 0 : i32
    return %c0_i32, %c0_i32_0, %c0_i32_1, %c0_i32_2 : i32, i32, i32, i32
  }
  func.func @transform_2(%arg0: i32, %arg1: i32) -> (i32, i32) {
    %c0_i32 = arith.constant 0 : i32
    %c0_i32_0 = arith.constant 0 : i32
    %c0_i32_1 = arith.constant 0 : i32
    return %c0_i32, %c0_i32_0 : i32, i32
  }
  func.func @transform_3(%arg0: i32, %arg1: i32) -> (i32, i32) {
    %c0_i32 = arith.constant 0 : i32
    %c0_i32_0 = arith.constant 0 : i32
    %c0_i32_1 = arith.constant 0 : i32
    return %c0_i32, %c0_i32_0 : i32, i32
  }
  func.func @transform_4(%arg0: i32, %arg1: i32) -> (i32, i32) {
    %c0_i32 = arith.constant 0 : i32
    %c0_i32_0 = arith.constant 0 : i32
    %c0_i32_1 = arith.constant 0 : i32
    return %c0_i32, %c0_i32_0 : i32, i32
  }
  func.func @transform_5(%arg0: i32, %arg1: i32) -> (i32, i32, i32, i32) {
    %c0_i32 = arith.constant 0 : i32
    %c0_i32_0 = arith.constant 0 : i32
    %c0_i32_1 = arith.constant 0 : i32
    return %arg0, %arg1, %c0_i32, %c0_i32_0 : i32, i32, i32, i32
  }
}

module attributes {stable_mosaic.version = 11 : i64} {
  func.func @_conv_bias_gdn_kernel(%arg0: i32, %arg1: i32, %arg2: memref<1x1x6x10x32xbf16, #tpu.memory_space<vmem>>, %arg3: memref<3x3x32x128xbf16, #tpu.memory_space<vmem>>, %arg4: memref<1x128xf32, #tpu.memory_space<vmem>>, %arg5: memref<128x128xbf16, #tpu.memory_space<vmem>>, %arg6: memref<1x128xf32, #tpu.memory_space<vmem>>, %arg7: memref<1x4x8x128xbf16, #tpu.memory_space<vmem>>) attributes {dimension_semantics = [#tpu.dimension_semantics<parallel>, #tpu.dimension_semantics<parallel>], iteration_bounds = array<i64: 2, 1>, scalar_prefetch = 0 : i64, scratch_operands = 0 : i64, tpu.core_type = #tpu.core_type<tc>, window_params = [{transform_indices = @transform_0, window_bounds = array<i64: 1, 1, 6, 10, 32>}, {pipeline_mode = #tpu.pipeline_mode<synchronous>, transform_indices = @transform_1, window_bounds = array<i64: 3, 3, 32, 128>}, {pipeline_mode = #tpu.pipeline_mode<synchronous>, transform_indices = @transform_2, window_bounds = array<i64: 1, 128>}, {pipeline_mode = #tpu.pipeline_mode<synchronous>, transform_indices = @transform_3, window_bounds = array<i64: 128, 128>}, {pipeline_mode = #tpu.pipeline_mode<synchronous>, transform_indices = @transform_4, window_bounds = array<i64: 1, 128>}, {transform_indices = @transform_5, window_bounds = array<i64: 1, 4, 8, 128>}]} {
    %cst = arith.constant 0.000000e+00 : f32
    %0 = vector.broadcast %cst : f32 to vector<32x128xf32>
    %c0 = arith.constant 0 : index
    %c0_0 = arith.constant 0 : index
    %c0_1 = arith.constant 0 : index
    %c0_2 = arith.constant 0 : index
    %c0_3 = arith.constant 0 : index
    %1 = vector.load %arg2[%c0, %c0_0, %c0_1, %c0_2, %c0_3] : memref<1x1x6x10x32xbf16, #tpu.memory_space<vmem>>, vector<1x1x4x8x32xbf16>
    %2 = vector.shape_cast %1 : vector<1x1x4x8x32xbf16> to vector<4x8x32xbf16>
    %3 = vector.shape_cast %2 : vector<4x8x32xbf16> to vector<32x32xbf16>
    %c0_4 = arith.constant 0 : index
    %c0_5 = arith.constant 0 : index
    %c0_6 = arith.constant 0 : index
    %c0_7 = arith.constant 0 : index
    %4 = vector.load %arg3[%c0_4, %c0_5, %c0_6, %c0_7] : memref<3x3x32x128xbf16, #tpu.memory_space<vmem>>, vector<1x1x32x128xbf16>
    %5 = vector.shape_cast %4 : vector<1x1x32x128xbf16> to vector<32x128xbf16>
    %cst_8 = arith.constant dense<0.000000e+00> : vector<32x128xf32>
    %6 = tpu.matmul %3, %5, %cst_8 {dimension_numbers = #tpu.dot_dimension_numbers<[1], [0], [0], [1], [0, 0, 1, 1], [], []>} : vector<32x32xbf16>, vector<32x128xbf16>, vector<32x128xf32> -> vector<32x128xf32>
    %7 = arith.addf %0, %6 : vector<32x128xf32>
    %c0_9 = arith.constant 0 : index
    %c0_10 = arith.constant 0 : index
    %c0_11 = arith.constant 0 : index
    %c1 = arith.constant 1 : index
    %c0_12 = arith.constant 0 : index
    %8 = vector.load %arg2[%c0_9, %c0_10, %c0_11, %c1, %c0_12] : memref<1x1x6x10x32xbf16, #tpu.memory_space<vmem>>, vector<1x1x4x8x32xbf16>
    %9 = vector.shape_cast %8 : vector<1x1x4x8x32xbf16> to vector<4x8x32xbf16>
    %10 = vector.shape_cast %9 : vector<4x8x32xbf16> to vector<32x32xbf16>
    %c0_13 = arith.constant 0 : index
    %c1_14 = arith.constant 1 : index
    %c0_15 = arith.constant 0 : index
    %c0_16 = arith.constant 0 : index
    %11 = vector.load %arg3[%c0_13, %c1_14, %c0_15, %c0_16] : memref<3x3x32x128xbf16, #tpu.memory_space<vmem>>, vector<1x1x32x128xbf16>
    %12 = vector.shape_cast %11 : vector<1x1x32x128xbf16> to vector<32x128xbf16>
    %cst_17 = arith.constant dense<0.000000e+00> : vector<32x128xf32>
    %13 = tpu.matmul %10, %12, %cst_17 {dimension_numbers = #tpu.dot_dimension_numbers<[1], [0], [0], [1], [0, 0, 1, 1], [], []>} : vector<32x32xbf16>, vector<32x128xbf16>, vector<32x128xf32> -> vector<32x128xf32>
    %14 = arith.addf %7, %13 : vector<32x128xf32>
    %c0_18 = arith.constant 0 : index
    %c0_19 = arith.constant 0 : index
    %c0_20 = arith.constant 0 : index
    %c2 = arith.constant 2 : index
    %c0_21 = arith.constant 0 : index
    %15 = vector.load %arg2[%c0_18, %c0_19, %c0_20, %c2, %c0_21] : memref<1x1x6x10x32xbf16, #tpu.memory_space<vmem>>, vector<1x1x4x8x32xbf16>
    %16 = vector.shape_cast %15 : vector<1x1x4x8x32xbf16> to vector<4x8x32xbf16>
    %17 = vector.shape_cast %16 : vector<4x8x32xbf16> to vector<32x32xbf16>
    %c0_22 = arith.constant 0 : index
    %c2_23 = arith.constant 2 : index
    %c0_24 = arith.constant 0 : index
    %c0_25 = arith.constant 0 : index
    %18 = vector.load %arg3[%c0_22, %c2_23, %c0_24, %c0_25] : memref<3x3x32x128xbf16, #tpu.memory_space<vmem>>, vector<1x1x32x128xbf16>
    %19 = vector.shape_cast %18 : vector<1x1x32x128xbf16> to vector<32x128xbf16>
    %cst_26 = arith.constant dense<0.000000e+00> : vector<32x128xf32>
    %20 = tpu.matmul %17, %19, %cst_26 {dimension_numbers = #tpu.dot_dimension_numbers<[1], [0], [0], [1], [0, 0, 1, 1], [], []>} : vector<32x32xbf16>, vector<32x128xbf16>, vector<32x128xf32> -> vector<32x128xf32>
    %21 = arith.addf %14, %20 : vector<32x128xf32>
    %c0_27 = arith.constant 0 : index
    %c0_28 = arith.constant 0 : index
    %c1_29 = arith.constant 1 : index
    %c0_30 = arith.constant 0 : index
    %c0_31 = arith.constant 0 : index
    %22 = vector.load %arg2[%c0_27, %c0_28, %c1_29, %c0_30, %c0_31] : memref<1x1x6x10x32xbf16, #tpu.memory_space<vmem>>, vector<1x1x4x8x32xbf16>
    %23 = vector.shape_cast %22 : vector<1x1x4x8x32xbf16> to vector<4x8x32xbf16>
    %24 = vector.shape_cast %23 : vector<4x8x32xbf16> to vector<32x32xbf16>
    %c1_32 = arith.constant 1 : index
    %c0_33 = arith.constant 0 : index
    %c0_34 = arith.constant 0 : index
    %c0_35 = arith.constant 0 : index
    %25 = vector.load %arg3[%c1_32, %c0_33, %c0_34, %c0_35] : memref<3x3x32x128xbf16, #tpu.memory_space<vmem>>, vector<1x1x32x128xbf16>
    %26 = vector.shape_cast %25 : vector<1x1x32x128xbf16> to vector<32x128xbf16>
    %cst_36 = arith.constant dense<0.000000e+00> : vector<32x128xf32>
    %27 = tpu.matmul %24, %26, %cst_36 {dimension_numbers = #tpu.dot_dimension_numbers<[1], [0], [0], [1], [0, 0, 1, 1], [], []>} : vector<32x32xbf16>, vector<32x128xbf16>, vector<32x128xf32> -> vector<32x128xf32>
    %28 = arith.addf %21, %27 : vector<32x128xf32>
    %c0_37 = arith.constant 0 : index
    %c0_38 = arith.constant 0 : index
    %c1_39 = arith.constant 1 : index
    %c1_40 = arith.constant 1 : index
    %c0_41 = arith.constant 0 : index
    %29 = vector.load %arg2[%c0_37, %c0_38, %c1_39, %c1_40, %c0_41] : memref<1x1x6x10x32xbf16, #tpu.memory_space<vmem>>, vector<1x1x4x8x32xbf16>
    %30 = vector.shape_cast %29 : vector<1x1x4x8x32xbf16> to vector<4x8x32xbf16>
    %31 = vector.shape_cast %30 : vector<4x8x32xbf16> to vector<32x32xbf16>
    %c1_42 = arith.constant 1 : index
    %c1_43 = arith.constant 1 : index
    %c0_44 = arith.constant 0 : index
    %c0_45 = arith.constant 0 : index
    %32 = vector.load %arg3[%c1_42, %c1_43, %c0_44, %c0_45] : memref<3x3x32x128xbf16, #tpu.memory_space<vmem>>, vector<1x1x32x128xbf16>
    %33 = vector.shape_cast %32 : vector<1x1x32x128xbf16> to vector<32x128xbf16>
    %cst_46 = arith.constant dense<0.000000e+00> : vector<32x128xf32>
    %34 = tpu.matmul %31, %33, %cst_46 {dimension_numbers = #tpu.dot_dimension_numbers<[1], [0], [0], [1], [0, 0, 1, 1], [], []>} : vector<32x32xbf16>, vector<32x128xbf16>, vector<32x128xf32> -> vector<32x128xf32>
    %35 = arith.addf %28, %34 : vector<32x128xf32>
    %c0_47 = arith.constant 0 : index
    %c0_48 = arith.constant 0 : index
    %c1_49 = arith.constant 1 : index
    %c2_50 = arith.constant 2 : index
    %c0_51 = arith.constant 0 : index
    %36 = vector.load %arg2[%c0_47, %c0_48, %c1_49, %c2_50, %c0_51] : memref<1x1x6x10x32xbf16, #tpu.memory_space<vmem>>, vector<1x1x4x8x32xbf16>
    %37 = vector.shape_cast %36 : vector<1x1x4x8x32xbf16> to vector<4x8x32xbf16>
    %38 = vector.shape_cast %37 : vector<4x8x32xbf16> to vector<32x32xbf16>
    %c1_52 = arith.constant 1 : index
    %c2_53 = arith.constant 2 : index
    %c0_54 = arith.constant 0 : index
    %c0_55 = arith.constant 0 : index
    %39 = vector.load %arg3[%c1_52, %c2_53, %c0_54, %c0_55] : memref<3x3x32x128xbf16, #tpu.memory_space<vmem>>, vector<1x1x32x128xbf16>
    %40 = vector.shape_cast %39 : vector<1x1x32x128xbf16> to vector<32x128xbf16>
    %cst_56 = arith.constant dense<0.000000e+00> : vector<32x128xf32>
    %41 = tpu.matmul %38, %40, %cst_56 {dimension_numbers = #tpu.dot_dimension_numbers<[1], [0], [0], [1], [0, 0, 1, 1], [], []>} : vector<32x32xbf16>, vector<32x128xbf16>, vector<32x128xf32> -> vector<32x128xf32>
    %42 = arith.addf %35, %41 : vector<32x128xf32>
    %c0_57 = arith.constant 0 : index
    %c0_58 = arith.constant 0 : index
    %c2_59 = arith.constant 2 : index
    %c0_60 = arith.constant 0 : index
    %c0_61 = arith.constant 0 : index
    %43 = vector.load %arg2[%c0_57, %c0_58, %c2_59, %c0_60, %c0_61] : memref<1x1x6x10x32xbf16, #tpu.memory_space<vmem>>, vector<1x1x4x8x32xbf16>
    %44 = vector.shape_cast %43 : vector<1x1x4x8x32xbf16> to vector<4x8x32xbf16>
    %45 = vector.shape_cast %44 : vector<4x8x32xbf16> to vector<32x32xbf16>
    %c2_62 = arith.constant 2 : index
    %c0_63 = arith.constant 0 : index
    %c0_64 = arith.constant 0 : index
    %c0_65 = arith.constant 0 : index
    %46 = vector.load %arg3[%c2_62, %c0_63, %c0_64, %c0_65] : memref<3x3x32x128xbf16, #tpu.memory_space<vmem>>, vector<1x1x32x128xbf16>
    %47 = vector.shape_cast %46 : vector<1x1x32x128xbf16> to vector<32x128xbf16>
    %cst_66 = arith.constant dense<0.000000e+00> : vector<32x128xf32>
    %48 = tpu.matmul %45, %47, %cst_66 {dimension_numbers = #tpu.dot_dimension_numbers<[1], [0], [0], [1], [0, 0, 1, 1], [], []>} : vector<32x32xbf16>, vector<32x128xbf16>, vector<32x128xf32> -> vector<32x128xf32>
    %49 = arith.addf %42, %48 : vector<32x128xf32>
    %c0_67 = arith.constant 0 : index
    %c0_68 = arith.constant 0 : index
    %c2_69 = arith.constant 2 : index
    %c1_70 = arith.constant 1 : index
    %c0_71 = arith.constant 0 : index
    %50 = vector.load %arg2[%c0_67, %c0_68, %c2_69, %c1_70, %c0_71] : memref<1x1x6x10x32xbf16, #tpu.memory_space<vmem>>, vector<1x1x4x8x32xbf16>
    %51 = vector.shape_cast %50 : vector<1x1x4x8x32xbf16> to vector<4x8x32xbf16>
    %52 = vector.shape_cast %51 : vector<4x8x32xbf16> to vector<32x32xbf16>
    %c2_72 = arith.constant 2 : index
    %c1_73 = arith.constant 1 : index
    %c0_74 = arith.constant 0 : index
    %c0_75 = arith.constant 0 : index
    %53 = vector.load %arg3[%c2_72, %c1_73, %c0_74, %c0_75] : memref<3x3x32x128xbf16, #tpu.memory_space<vmem>>, vector<1x1x32x128xbf16>
    %54 = vector.shape_cast %53 : vector<1x1x32x128xbf16> to vector<32x128xbf16>
    %cst_76 = arith.constant dense<0.000000e+00> : vector<32x128xf32>
    %55 = tpu.matmul %52, %54, %cst_76 {dimension_numbers = #tpu.dot_dimension_numbers<[1], [0], [0], [1], [0, 0, 1, 1], [], []>} : vector<32x32xbf16>, vector<32x128xbf16>, vector<32x128xf32> -> vector<32x128xf32>
    %56 = arith.addf %49, %55 : vector<32x128xf32>
    %c0_77 = arith.constant 0 : index
    %c0_78 = arith.constant 0 : index
    %c2_79 = arith.constant 2 : index
    %c2_80 = arith.constant 2 : index
    %c0_81 = arith.constant 0 : index
    %57 = vector.load %arg2[%c0_77, %c0_78, %c2_79, %c2_80, %c0_81] : memref<1x1x6x10x32xbf16, #tpu.memory_space<vmem>>, vector<1x1x4x8x32xbf16>
    %58 = vector.shape_cast %57 : vector<1x1x4x8x32xbf16> to vector<4x8x32xbf16>
    %59 = vector.shape_cast %58 : vector<4x8x32xbf16> to vector<32x32xbf16>
    %c2_82 = arith.constant 2 : index
    %c2_83 = arith.constant 2 : index
    %c0_84 = arith.constant 0 : index
    %c0_85 = arith.constant 0 : index
    %60 = vector.load %arg3[%c2_82, %c2_83, %c0_84, %c0_85] : memref<3x3x32x128xbf16, #tpu.memory_space<vmem>>, vector<1x1x32x128xbf16>
    %61 = vector.shape_cast %60 : vector<1x1x32x128xbf16> to vector<32x128xbf16>
    %cst_86 = arith.constant dense<0.000000e+00> : vector<32x128xf32>
    %62 = tpu.matmul %59, %61, %cst_86 {dimension_numbers = #tpu.dot_dimension_numbers<[1], [0], [0], [1], [0, 0, 1, 1], [], []>} : vector<32x32xbf16>, vector<32x128xbf16>, vector<32x128xf32> -> vector<32x128xf32>
    %63 = arith.addf %56, %62 : vector<32x128xf32>
    %c0_87 = arith.constant 0 : index
    %c0_88 = arith.constant 0 : index
    %64 = vector.load %arg4[%c0_87, %c0_88] : memref<1x128xf32, #tpu.memory_space<vmem>>, vector<1x128xf32>
    %65 = vector.broadcast %64 : vector<1x128xf32> to vector<32x128xf32>
    %66 = arith.addf %63, %65 : vector<32x128xf32>
    %67 = arith.mulf %66, %66 : vector<32x128xf32>
    %68 = arith.truncf %67 : vector<32x128xf32> to vector<32x128xbf16>
    %c0_89 = arith.constant 0 : index
    %c0_90 = arith.constant 0 : index
    %69 = vector.load %arg5[%c0_89, %c0_90] : memref<128x128xbf16, #tpu.memory_space<vmem>>, vector<128x128xbf16>
    %cst_91 = arith.constant dense<0.000000e+00> : vector<32x128xf32>
    %70 = tpu.matmul %68, %69, %cst_91 {dimension_numbers = #tpu.dot_dimension_numbers<[1], [0], [0], [1], [0, 0, 1, 1], [], []>} : vector<32x128xbf16>, vector<128x128xbf16>, vector<32x128xf32> -> vector<32x128xf32>
    %c0_92 = arith.constant 0 : index
    %c0_93 = arith.constant 0 : index
    %71 = vector.load %arg6[%c0_92, %c0_93] : memref<1x128xf32, #tpu.memory_space<vmem>>, vector<1x128xf32>
    %72 = vector.broadcast %71 : vector<1x128xf32> to vector<32x128xf32>
    %73 = arith.addf %70, %72 : vector<32x128xf32>
    %cst_94 = arith.constant 9.99999997E-7 : f32
    %74 = vector.broadcast %cst_94 : f32 to vector<32x128xf32>
    %75 = arith.maximumf %73, %74 : vector<32x128xf32>
    %76 = math.rsqrt %75 : vector<32x128xf32>
    %77 = arith.mulf %66, %76 : vector<32x128xf32>
    %78 = vector.shape_cast %77 : vector<32x128xf32> to vector<4x8x128xf32>
    %79 = arith.truncf %78 : vector<4x8x128xf32> to vector<4x8x128xbf16>
    %c0_95 = arith.constant 0 : index
    %c0_96 = arith.constant 0 : index
    %c0_97 = arith.constant 0 : index
    %c0_98 = arith.constant 0 : index
    %80 = vector.load %arg7[%c0_95, %c0_96, %c0_97, %c0_98] : memref<1x4x8x128xbf16, #tpu.memory_space<vmem>>, vector<1x4x8x128xbf16>
    %81 = vector.shape_cast %80 : vector<1x4x8x128xbf16> to vector<4x8x128xbf16>
    %82 = vector.shape_cast %79 : vector<4x8x128xbf16> to vector<1x4x8x128xbf16>
    tpu.vector_store %arg7[%c0_95, %c0_96, %c0_97, %c0_98], %82 {strides = array<i32>} : memref<1x4x8x128xbf16, #tpu.memory_space<vmem>>, vector<1x4x8x128xbf16>,
    return
  }
  func.func @transform_0(%arg0: i32, %arg1: i32) -> (i32, i32, i32, i32, i32) {
    %c0_i32 = arith.constant 0 : i32
    %c0_i32_0 = arith.constant 0 : i32
    %c0_i32_1 = arith.constant 0 : i32
    %c0_i32_2 = arith.constant 0 : i32
    return %arg0, %arg1, %c0_i32, %c0_i32_0, %c0_i32_1 : i32, i32, i32, i32, i32
  }
  func.func @transform_1(%arg0: i32, %arg1: i32) -> (i32, i32, i32, i32) {
    %c0_i32 = arith.constant 0 : i32
    %c0_i32_0 = arith.constant 0 : i32
    %c0_i32_1 = arith.constant 0 : i32
    %c0_i32_2 = arith.constant 0 : i32
    %c0_i32_3 = arith.constant 0 : i32
    return %c0_i32, %c0_i32_0, %c0_i32_1, %c0_i32_2 : i32, i32, i32, i32
  }
  func.func @transform_2(%arg0: i32, %arg1: i32) -> (i32, i32) {
    %c0_i32 = arith.constant 0 : i32
    %c0_i32_0 = arith.constant 0 : i32
    %c0_i32_1 = arith.constant 0 : i32
    return %c0_i32, %c0_i32_0 : i32, i32
  }
  func.func @transform_3(%arg0: i32, %arg1: i32) -> (i32, i32) {
    %c0_i32 = arith.constant 0 : i32
    %c0_i32_0 = arith.constant 0 : i32
    %c0_i32_1 = arith.constant 0 : i32
    return %c0_i32, %c0_i32_0 : i32, i32
  }
  func.func @transform_4(%arg0: i32, %arg1: i32) -> (i32, i32) {
    %c0_i32 = arith.constant 0 : i32
    %c0_i32_0 = arith.constant 0 : i32
    %c0_i32_1 = arith.constant 0 : i32
    return %c0_i32, %c0_i32_0 : i32, i32
  }
  func.func @transform_5(%arg0: i32, %arg1: i32) -> (i32, i32, i32, i32) {
    %c0_i32 = arith.constant 0 : i32
    %c0_i32_0 = arith.constant 0 : i32
    %c0_i32_1 = arith.constant 0 : i32
    return %arg0, %arg1, %c0_i32, %c0_i32_0 : i32, i32, i32, i32
  }
}

module attributes {stable_mosaic.version = 11 : i64} {
  func.func @_conv_bias_kernel(%arg0: i32, %arg1: i32, %arg2: memref<1x1x4x10x32xbf16, #tpu.memory_space<vmem>>, %arg3: memref<3x3x32x128xbf16, #tpu.memory_space<vmem>>, %arg4: memref<1x128xf32, #tpu.memory_space<vmem>>, %arg5: memref<1x2x8x128xf32, #tpu.memory_space<vmem>>) attributes {dimension_semantics = [#tpu.dimension_semantics<parallel>, #tpu.dimension_semantics<parallel>], iteration_bounds = array<i64: 2, 1>, scalar_prefetch = 0 : i64, scratch_operands = 0 : i64, tpu.core_type = #tpu.core_type<tc>, window_params = [{transform_indices = @transform_0, window_bounds = array<i64: 1, 1, 4, 10, 32>}, {pipeline_mode = #tpu.pipeline_mode<synchronous>, transform_indices = @transform_1, window_bounds = array<i64: 3, 3, 32, 128>}, {pipeline_mode = #tpu.pipeline_mode<synchronous>, transform_indices = @transform_2, window_bounds = array<i64: 1, 128>}, {transform_indices = @transform_3, window_bounds = array<i64: 1, 2, 8, 128>}]} {
    %cst = arith.constant 0.000000e+00 : f32
    %0 = vector.broadcast %cst : f32 to vector<16x128xf32>
    %c0 = arith.constant 0 : index
    %c0_0 = arith.constant 0 : index
    %c0_1 = arith.constant 0 : index
    %c0_2 = arith.constant 0 : index
    %c0_3 = arith.constant 0 : index
    %1 = vector.load %arg2[%c0, %c0_0, %c0_1, %c0_2, %c0_3] : memref<1x1x4x10x32xbf16, #tpu.memory_space<vmem>>, vector<1x1x2x8x32xbf16>
    %2 = vector.shape_cast %1 : vector<1x1x2x8x32xbf16> to vector<2x8x32xbf16>
    %3 = vector.shape_cast %2 : vector<2x8x32xbf16> to vector<16x32xbf16>
    %c0_4 = arith.constant 0 : index
    %c0_5 = arith.constant 0 : index
    %c0_6 = arith.constant 0 : index
    %c0_7 = arith.constant 0 : index
    %4 = vector.load %arg3[%c0_4, %c0_5, %c0_6, %c0_7] : memref<3x3x32x128xbf16, #tpu.memory_space<vmem>>, vector<1x1x32x128xbf16>
    %5 = vector.shape_cast %4 : vector<1x1x32x128xbf16> to vector<32x128xbf16>
    %cst_8 = arith.constant dense<0.000000e+00> : vector<16x128xf32>
    %6 = tpu.matmul %3, %5, %cst_8 {dimension_numbers = #tpu.dot_dimension_numbers<[1], [0], [0], [1], [0, 0, 1, 1], [], []>} : vector<16x32xbf16>, vector<32x128xbf16>, vector<16x128xf32> -> vector<16x128xf32>
    %7 = arith.addf %0, %6 : vector<16x128xf32>
    %c0_9 = arith.constant 0 : index
    %c0_10 = arith.constant 0 : index
    %c0_11 = arith.constant 0 : index
    %c1 = arith.constant 1 : index
    %c0_12 = arith.constant 0 : index
    %8 = vector.load %arg2[%c0_9, %c0_10, %c0_11, %c1, %c0_12] : memref<1x1x4x10x32xbf16, #tpu.memory_space<vmem>>, vector<1x1x2x8x32xbf16>
    %9 = vector.shape_cast %8 : vector<1x1x2x8x32xbf16> to vector<2x8x32xbf16>
    %10 = vector.shape_cast %9 : vector<2x8x32xbf16> to vector<16x32xbf16>
    %c0_13 = arith.constant 0 : index
    %c1_14 = arith.constant 1 : index
    %c0_15 = arith.constant 0 : index
    %c0_16 = arith.constant 0 : index
    %11 = vector.load %arg3[%c0_13, %c1_14, %c0_15, %c0_16] : memref<3x3x32x128xbf16, #tpu.memory_space<vmem>>, vector<1x1x32x128xbf16>
    %12 = vector.shape_cast %11 : vector<1x1x32x128xbf16> to vector<32x128xbf16>
    %cst_17 = arith.constant dense<0.000000e+00> : vector<16x128xf32>
    %13 = tpu.matmul %10, %12, %cst_17 {dimension_numbers = #tpu.dot_dimension_numbers<[1], [0], [0], [1], [0, 0, 1, 1], [], []>} : vector<16x32xbf16>, vector<32x128xbf16>, vector<16x128xf32> -> vector<16x128xf32>
    %14 = arith.addf %7, %13 : vector<16x128xf32>
    %c0_18 = arith.constant 0 : index
    %c0_19 = arith.constant 0 : index
    %c0_20 = arith.constant 0 : index
    %c2 = arith.constant 2 : index
    %c0_21 = arith.constant 0 : index
    %15 = vector.load %arg2[%c0_18, %c0_19, %c0_20, %c2, %c0_21] : memref<1x1x4x10x32xbf16, #tpu.memory_space<vmem>>, vector<1x1x2x8x32xbf16>
    %16 = vector.shape_cast %15 : vector<1x1x2x8x32xbf16> to vector<2x8x32xbf16>
    %17 = vector.shape_cast %16 : vector<2x8x32xbf16> to vector<16x32xbf16>
    %c0_22 = arith.constant 0 : index
    %c2_23 = arith.constant 2 : index
    %c0_24 = arith.constant 0 : index
    %c0_25 = arith.constant 0 : index
    %18 = vector.load %arg3[%c0_22, %c2_23, %c0_24, %c0_25] : memref<3x3x32x128xbf16, #tpu.memory_space<vmem>>, vector<1x1x32x128xbf16>
    %19 = vector.shape_cast %18 : vector<1x1x32x128xbf16> to vector<32x128xbf16>
    %cst_26 = arith.constant dense<0.000000e+00> : vector<16x128xf32>
    %20 = tpu.matmul %17, %19, %cst_26 {dimension_numbers = #tpu.dot_dimension_numbers<[1], [0], [0], [1], [0, 0, 1, 1], [], []>} : vector<16x32xbf16>, vector<32x128xbf16>, vector<16x128xf32> -> vector<16x128xf32>
    %21 = arith.addf %14, %20 : vector<16x128xf32>
    %c0_27 = arith.constant 0 : index
    %c0_28 = arith.constant 0 : index
    %c1_29 = arith.constant 1 : index
    %c0_30 = arith.constant 0 : index
    %c0_31 = arith.constant 0 : index
    %22 = vector.load %arg2[%c0_27, %c0_28, %c1_29, %c0_30, %c0_31] : memref<1x1x4x10x32xbf16, #tpu.memory_space<vmem>>, vector<1x1x2x8x32xbf16>
    %23 = vector.shape_cast %22 : vector<1x1x2x8x32xbf16> to vector<2x8x32xbf16>
    %24 = vector.shape_cast %23 : vector<2x8x32xbf16> to vector<16x32xbf16>
    %c1_32 = arith.constant 1 : index
    %c0_33 = arith.constant 0 : index
    %c0_34 = arith.constant 0 : index
    %c0_35 = arith.constant 0 : index
    %25 = vector.load %arg3[%c1_32, %c0_33, %c0_34, %c0_35] : memref<3x3x32x128xbf16, #tpu.memory_space<vmem>>, vector<1x1x32x128xbf16>
    %26 = vector.shape_cast %25 : vector<1x1x32x128xbf16> to vector<32x128xbf16>
    %cst_36 = arith.constant dense<0.000000e+00> : vector<16x128xf32>
    %27 = tpu.matmul %24, %26, %cst_36 {dimension_numbers = #tpu.dot_dimension_numbers<[1], [0], [0], [1], [0, 0, 1, 1], [], []>} : vector<16x32xbf16>, vector<32x128xbf16>, vector<16x128xf32> -> vector<16x128xf32>
    %28 = arith.addf %21, %27 : vector<16x128xf32>
    %c0_37 = arith.constant 0 : index
    %c0_38 = arith.constant 0 : index
    %c1_39 = arith.constant 1 : index
    %c1_40 = arith.constant 1 : index
    %c0_41 = arith.constant 0 : index
    %29 = vector.load %arg2[%c0_37, %c0_38, %c1_39, %c1_40, %c0_41] : memref<1x1x4x10x32xbf16, #tpu.memory_space<vmem>>, vector<1x1x2x8x32xbf16>
    %30 = vector.shape_cast %29 : vector<1x1x2x8x32xbf16> to vector<2x8x32xbf16>
    %31 = vector.shape_cast %30 : vector<2x8x32xbf16> to vector<16x32xbf16>
    %c1_42 = arith.constant 1 : index
    %c1_43 = arith.constant 1 : index
    %c0_44 = arith.constant 0 : index
    %c0_45 = arith.constant 0 : index
    %32 = vector.load %arg3[%c1_42, %c1_43, %c0_44, %c0_45] : memref<3x3x32x128xbf16, #tpu.memory_space<vmem>>, vector<1x1x32x128xbf16>
    %33 = vector.shape_cast %32 : vector<1x1x32x128xbf16> to vector<32x128xbf16>
    %cst_46 = arith.constant dense<0.000000e+00> : vector<16x128xf32>
    %34 = tpu.matmul %31, %33, %cst_46 {dimension_numbers = #tpu.dot_dimension_numbers<[1], [0], [0], [1], [0, 0, 1, 1], [], []>} : vector<16x32xbf16>, vector<32x128xbf16>, vector<16x128xf32> -> vector<16x128xf32>
    %35 = arith.addf %28, %34 : vector<16x128xf32>
    %c0_47 = arith.constant 0 : index
    %c0_48 = arith.constant 0 : index
    %c1_49 = arith.constant 1 : index
    %c2_50 = arith.constant 2 : index
    %c0_51 = arith.constant 0 : index
    %36 = vector.load %arg2[%c0_47, %c0_48, %c1_49, %c2_50, %c0_51] : memref<1x1x4x10x32xbf16, #tpu.memory_space<vmem>>, vector<1x1x2x8x32xbf16>
    %37 = vector.shape_cast %36 : vector<1x1x2x8x32xbf16> to vector<2x8x32xbf16>
    %38 = vector.shape_cast %37 : vector<2x8x32xbf16> to vector<16x32xbf16>
    %c1_52 = arith.constant 1 : index
    %c2_53 = arith.constant 2 : index
    %c0_54 = arith.constant 0 : index
    %c0_55 = arith.constant 0 : index
    %39 = vector.load %arg3[%c1_52, %c2_53, %c0_54, %c0_55] : memref<3x3x32x128xbf16, #tpu.memory_space<vmem>>, vector<1x1x32x128xbf16>
    %40 = vector.shape_cast %39 : vector<1x1x32x128xbf16> to vector<32x128xbf16>
    %cst_56 = arith.constant dense<0.000000e+00> : vector<16x128xf32>
    %41 = tpu.matmul %38, %40, %cst_56 {dimension_numbers = #tpu.dot_dimension_numbers<[1], [0], [0], [1], [0, 0, 1, 1], [], []>} : vector<16x32xbf16>, vector<32x128xbf16>, vector<16x128xf32> -> vector<16x128xf32>
    %42 = arith.addf %35, %41 : vector<16x128xf32>
    %c0_57 = arith.constant 0 : index
    %c0_58 = arith.constant 0 : index
    %c2_59 = arith.constant 2 : index
    %c0_60 = arith.constant 0 : index
    %c0_61 = arith.constant 0 : index
    %43 = vector.load %arg2[%c0_57, %c0_58, %c2_59, %c0_60, %c0_61] : memref<1x1x4x10x32xbf16, #tpu.memory_space<vmem>>, vector<1x1x2x8x32xbf16>
    %44 = vector.shape_cast %43 : vector<1x1x2x8x32xbf16> to vector<2x8x32xbf16>
    %45 = vector.shape_cast %44 : vector<2x8x32xbf16> to vector<16x32xbf16>
    %c2_62 = arith.constant 2 : index
    %c0_63 = arith.constant 0 : index
    %c0_64 = arith.constant 0 : index
    %c0_65 = arith.constant 0 : index
    %46 = vector.load %arg3[%c2_62, %c0_63, %c0_64, %c0_65] : memref<3x3x32x128xbf16, #tpu.memory_space<vmem>>, vector<1x1x32x128xbf16>
    %47 = vector.shape_cast %46 : vector<1x1x32x128xbf16> to vector<32x128xbf16>
    %cst_66 = arith.constant dense<0.000000e+00> : vector<16x128xf32>
    %48 = tpu.matmul %45, %47, %cst_66 {dimension_numbers = #tpu.dot_dimension_numbers<[1], [0], [0], [1], [0, 0, 1, 1], [], []>} : vector<16x32xbf16>, vector<32x128xbf16>, vector<16x128xf32> -> vector<16x128xf32>
    %49 = arith.addf %42, %48 : vector<16x128xf32>
    %c0_67 = arith.constant 0 : index
    %c0_68 = arith.constant 0 : index
    %c2_69 = arith.constant 2 : index
    %c1_70 = arith.constant 1 : index
    %c0_71 = arith.constant 0 : index
    %50 = vector.load %arg2[%c0_67, %c0_68, %c2_69, %c1_70, %c0_71] : memref<1x1x4x10x32xbf16, #tpu.memory_space<vmem>>, vector<1x1x2x8x32xbf16>
    %51 = vector.shape_cast %50 : vector<1x1x2x8x32xbf16> to vector<2x8x32xbf16>
    %52 = vector.shape_cast %51 : vector<2x8x32xbf16> to vector<16x32xbf16>
    %c2_72 = arith.constant 2 : index
    %c1_73 = arith.constant 1 : index
    %c0_74 = arith.constant 0 : index
    %c0_75 = arith.constant 0 : index
    %53 = vector.load %arg3[%c2_72, %c1_73, %c0_74, %c0_75] : memref<3x3x32x128xbf16, #tpu.memory_space<vmem>>, vector<1x1x32x128xbf16>
    %54 = vector.shape_cast %53 : vector<1x1x32x128xbf16> to vector<32x128xbf16>
    %cst_76 = arith.constant dense<0.000000e+00> : vector<16x128xf32>
    %55 = tpu.matmul %52, %54, %cst_76 {dimension_numbers = #tpu.dot_dimension_numbers<[1], [0], [0], [1], [0, 0, 1, 1], [], []>} : vector<16x32xbf16>, vector<32x128xbf16>, vector<16x128xf32> -> vector<16x128xf32>
    %56 = arith.addf %49, %55 : vector<16x128xf32>
    %c0_77 = arith.constant 0 : index
    %c0_78 = arith.constant 0 : index
    %c2_79 = arith.constant 2 : index
    %c2_80 = arith.constant 2 : index
    %c0_81 = arith.constant 0 : index
    %57 = vector.load %arg2[%c0_77, %c0_78, %c2_79, %c2_80, %c0_81] : memref<1x1x4x10x32xbf16, #tpu.memory_space<vmem>>, vector<1x1x2x8x32xbf16>
    %58 = vector.shape_cast %57 : vector<1x1x2x8x32xbf16> to vector<2x8x32xbf16>
    %59 = vector.shape_cast %58 : vector<2x8x32xbf16> to vector<16x32xbf16>
    %c2_82 = arith.constant 2 : index
    %c2_83 = arith.constant 2 : index
    %c0_84 = arith.constant 0 : index
    %c0_85 = arith.constant 0 : index
    %60 = vector.load %arg3[%c2_82, %c2_83, %c0_84, %c0_85] : memref<3x3x32x128xbf16, #tpu.memory_space<vmem>>, vector<1x1x32x128xbf16>
    %61 = vector.shape_cast %60 : vector<1x1x32x128xbf16> to vector<32x128xbf16>
    %cst_86 = arith.constant dense<0.000000e+00> : vector<16x128xf32>
    %62 = tpu.matmul %59, %61, %cst_86 {dimension_numbers = #tpu.dot_dimension_numbers<[1], [0], [0], [1], [0, 0, 1, 1], [], []>} : vector<16x32xbf16>, vector<32x128xbf16>, vector<16x128xf32> -> vector<16x128xf32>
    %63 = arith.addf %56, %62 : vector<16x128xf32>
    %c0_87 = arith.constant 0 : index
    %c0_88 = arith.constant 0 : index
    %64 = vector.load %arg4[%c0_87, %c0_88] : memref<1x128xf32, #tpu.memory_space<vmem>>, vector<1x128xf32>
    %65 = vector.broadcast %64 : vector<1x128xf32> to vector<16x128xf32>
    %66 = arith.addf %63, %65 : vector<16x128xf32>
    %67 = vector.shape_cast %66 : vector<16x128xf32> to vector<2x8x128xf32>
    %c0_89 = arith.constant 0 : index
    %c0_90 = arith.constant 0 : index
    %c0_91 = arith.constant 0 : index
    %c0_92 = arith.constant 0 : index
    %68 = vector.load %arg5[%c0_89, %c0_90, %c0_91, %c0_92] : memref<1x2x8x128xf32, #tpu.memory_space<vmem>>, vector<1x2x8x128xf32>
    %69 = vector.shape_cast %68 : vector<1x2x8x128xf32> to vector<2x8x128xf32>
    %70 = vector.shape_cast %67 : vector<2x8x128xf32> to vector<1x2x8x128xf32>
    tpu.vector_store %arg5[%c0_89, %c0_90, %c0_91, %c0_92], %70 {strides = array<i32>} : memref<1x2x8x128xf32, #tpu.memory_space<vmem>>, vector<1x2x8x128xf32>,
    return
  }
  func.func @transform_0(%arg0: i32, %arg1: i32) -> (i32, i32, i32, i32, i32) {
    %c0_i32 = arith.constant 0 : i32
    %c0_i32_0 = arith.constant 0 : i32
    %c0_i32_1 = arith.constant 0 : i32
    %c0_i32_2 = arith.constant 0 : i32
    return %arg0, %arg1, %c0_i32, %c0_i32_0, %c0_i32_1 : i32, i32, i32, i32, i32
  }
  func.func @transform_1(%arg0: i32, %arg1: i32) -> (i32, i32, i32, i32) {
    %c0_i32 = arith.constant 0 : i32
    %c0_i32_0 = arith.constant 0 : i32
    %c0_i32_1 = arith.constant 0 : i32
    %c0_i32_2 = arith.constant 0 : i32
    %c0_i32_3 = arith.constant 0 : i32
    return %c0_i32, %c0_i32_0, %c0_i32_1, %c0_i32_2 : i32, i32, i32, i32
  }
  func.func @transform_2(%arg0: i32, %arg1: i32) -> (i32, i32) {
    %c0_i32 = arith.constant 0 : i32
    %c0_i32_0 = arith.constant 0 : i32
    %c0_i32_1 = arith.constant 0 : i32
    return %c0_i32, %c0_i32_0 : i32, i32
  }
  func.func @transform_3(%arg0: i32, %arg1: i32) -> (i32, i32, i32, i32) {
    %c0_i32 = arith.constant 0 : i32
    %c0_i32_0 = arith.constant 0 : i32
    %c0_i32_1 = arith.constant 0 : i32
    return %arg0, %arg1, %c0_i32, %c0_i32_0 : i32, i32, i32, i32
  }
}

</mosaic_0001>

<llo_original>
// kernel: encoder_forward.4
$region0: #{encoder_forward.4}
  #allocation0 [shape = 'u32[]', space=smem, size = 0x4, offset = 0x4, fixed_abs, tag = 'smem constant byte address 0x4 - core index']
  #allocation1 [shape = 'u32[144,128]{1,0:T(1,128)}', space=vmem, size = 0x12000, scoped, tag = 'internal scratch']
  %s0 = inlined_call_operand.vmem [shape: bf16[2,16,16,128], index: 0, kind: input, shape index: {}]
  %s1 = inlined_call_operand.vmem [shape: bf16[1,1,128,128], index: 1, kind: input, shape index: {}]
  %s2 = inlined_call_operand.vmem [shape: f32[1,128], index: 2, kind: input, shape index: {}]
  %s3 = inlined_call_operand.vmem [shape: bf16[128,128], index: 3, kind: input, shape index: {}]
  %s4 = inlined_call_operand.vmem [shape: f32[1,128], index: 4, kind: input, shape index: {}]
  %s5 = inlined_call_operand.vmem [shape: bf16[2,16,16,128], index: 5, kind: output, shape index: {}]
  %s6 = sld [smem:[#allocation0]]
  $region53: #{encoder_forward.4} parent=0
    _
  %s8 = ssub.s32 1, %s6
  %s9 = scalar_select 0, %s8, %s6
  loop: start=0, step=1, limit=4
  $region2: #{encoder_forward.4} parent=0 // loop_pre_header
    _
  $region3: #{encoder_forward.4} parent=0 // loop_header
    %s11 = sphi 0, %s15
    %p12 = scmp.ge.s32.totalorder %s11, 4
    %s18 = sphi 0, %s30
    %s19 = sphi 0, %s26
    %s20 = sphi 0, %s18
    %s21 = sphi 0, %s19
    %s22 = sphi 0, %s20
    %s23 = sphi 0, %s21
    %s35 = sphi 0, %s37
    %s38 = sphi 0, %s35
    %s39 = sphi 0, %s38
    %s55 = sphi 0, %s39
    %s59 = sphi 0, %s59
    %s61 = sphi 0, %s59
    %s62 = sphi 0, %s61
    %s76 = sphi 0, %s62
    %s80 = sphi 0, %s80
    %s82 = sphi 0, %s80
    %s83 = sphi 0, %s82
    %s97 = sphi 0, %s83
    %s101 = sphi 0, %s101
    %s103 = sphi 0, %s101
    %s104 = sphi 0, %s103
    %s118 = sphi 0, %s104
    %s122 = sphi 0, %s122
    %s124 = sphi 0, %s122
    %s125 = sphi 0, %s124
    %s139 = sphi 0, %s125
    %s147 = sphi 0, %s149
    %s150 = sphi 0, %s147
    %s151 = sphi 0, %s150
    %s167 = sphi 0, %s151
  $region4: #{encoder_forward.4} parent=0 // loop_header_branch
    %14 = sbr.rel (%p12) target = $region8
  $region5: #{encoder_forward.4} parent=0 // loop_body
    %s16 = ssub.s32 %s11, 1
    %s17 = ssub.s32 %s11, 2
    %s24 = sadd.s32 1, %s19
    %p25 = scmp.ge.s32.totalorder %s24, 1
    %s26 = scalar_select %p25, 0, %s24
    %s27 = sadd.s32 1, %s18
    %s28 = scalar_select %p25, %s27, %s18
    %p29 = scmp.ge.s32.totalorder %s28, 2
    %s30 = scalar_select %p29, 0, %s28
    %s31 = ssub.s32 %s18, %s30
    %s32 = ssub.s32 %s19, %s26
    %s33 = sor.u32 %s31, %s32
    %p34 = scmp.eq.s32.totalorder %s33, 0
    %s36 = sadd.s32 %s35, 1
    %s37 = scalar_select %p34, %s35, %s36
    %p40 = pneg %p34
    %p41 = scmp.eq.s32.totalorder %s11, 1
    %p42 = por %p40, %p41
    %p43 = scmp.ne.s32.totalorder %s35, %s38
    %p44 = scmp.eq.s32.totalorder %s11, 0
    %p45 = por %p43, %p44
    %p46 = scmp.ne.s32.totalorder %s35, %s38
    %p47 = scmp.eq.s32.totalorder %s16, 1
    %p48 = por %p46, %p47
    %p49 = scmp.ne.s32.totalorder %s38, %s39
    %p50 = scmp.eq.s32.totalorder %s16, 0
    %p51 = por %p49, %p50
    %p52 = scmp.ne.s32.totalorder %s38, %s39
    %p53 = scmp.eq.s32.totalorder %s17, 1
    %p54 = por %p52, %p53
    %p56 = scmp.ne.s32.totalorder %s39, %s55
    %p57 = scmp.eq.s32.totalorder %s17, 0
    %p58 = por %p56, %p57
    %s60 = sadd.s32 %s59, 1
    %p63 = scmp.eq.s32.totalorder %s11, 1
    %p64 = scmp.ne.s32.totalorder %s59, %s61
    %p65 = scmp.eq.s32.totalorder %s11, 0
    %p66 = por %p64, %p65
    %p67 = scmp.ne.s32.totalorder %s59, %s61
    %p68 = scmp.eq.s32.totalorder %s16, 1
    %p69 = por %p67, %p68
    %p70 = scmp.ne.s32.totalorder %s61, %s62
    %p71 = scmp.eq.s32.totalorder %s16, 0
    %p72 = por %p70, %p71
    %p73 = scmp.ne.s32.totalorder %s61, %s62
    %p74 = scmp.eq.s32.totalorder %s17, 1
    %p75 = por %p73, %p74
    %p77 = scmp.ne.s32.totalorder %s62, %s76
    %p78 = scmp.eq.s32.totalorder %s17, 0
    %p79 = por %p77, %p78
    %s81 = sadd.s32 %s80, 1
    %p84 = scmp.eq.s32.totalorder %s11, 1
    %p85 = scmp.ne.s32.totalorder %s80, %s82
    %p86 = scmp.eq.s32.totalorder %s11, 0
    %p87 = por %p85, %p86
    %p88 = scmp.ne.s32.totalorder %s80, %s82
    %p89 = scmp.eq.s32.totalorder %s16, 1
    %p90 = por %p88, %p89
    %p91 = scmp.ne.s32.totalorder %s82, %s83
    %p92 = scmp.eq.s32.totalorder %s16, 0
    %p93 = por %p91, %p92
    %p94 = scmp.ne.s32.totalorder %s82, %s83
    %p95 = scmp.eq.s32.totalorder %s17, 1
    %p96 = por %p94, %p95
    %p98 = scmp.ne.s32.totalorder %s83, %s97
    %p99 = scmp.eq.s32.totalorder %s17, 0
    %p100 = por %p98, %p99
    %s102 = sadd.s32 %s101, 1
    %p105 = scmp.eq.s32.totalorder %s11, 1
    %p106 = scmp.ne.s32.totalorder %s101, %s103
    %p107 = scmp.eq.s32.totalorder %s11, 0
    %p108 = por %p106, %p107
    %p109 = scmp.ne.s32.totalorder %s101, %s103
    %p110 = scmp.eq.s32.totalorder %s16, 1
    %p111 = por %p109, %p110
    %p112 = scmp.ne.s32.totalorder %s103, %s104
    %p113 = scmp.eq.s32.totalorder %s16, 0
    %p114 = por %p112, %p113
    %p115 = scmp.ne.s32.totalorder %s103, %s104
    %p116 = scmp.eq.s32.totalorder %s17, 1
    %p117 = por %p115, %p116
    %p119 = scmp.ne.s32.totalorder %s104, %s118
    %p120 = scmp.eq.s32.totalorder %s17, 0
    %p121 = por %p119, %p120
    %s123 = sadd.s32 %s122, 1
    %p126 = scmp.eq.s32.totalorder %s11, 1
    %p127 = scmp.ne.s32.totalorder %s122, %s124
    %p128 = scmp.eq.s32.totalorder %s11, 0
    %p129 = por %p127, %p128
    %p130 = scmp.ne.s32.totalorder %s122, %s124
    %p131 = scmp.eq.s32.totalorder %s16, 1
    %p132 = por %p130, %p131
    %p133 = scmp.ne.s32.totalorder %s124, %s125
    %p134 = scmp.eq.s32.totalorder %s16, 0
    %p135 = por %p133, %p134
    %p136 = scmp.ne.s32.totalorder %s124, %s125
    %p137 = scmp.eq.s32.totalorder %s17, 1
    %p138 = por %p136, %p137
    %p140 = scmp.ne.s32.totalorder %s125, %s139
    %p141 = scmp.eq.s32.totalorder %s17, 0
    %p142 = por %p140, %p141
    %s143 = ssub.s32 %s18, %s30
    %s144 = ssub.s32 %s19, %s26
    %s145 = sor.u32 %s143, %s144
    %p146 = scmp.eq.s32.totalorder %s145, 0
    %s148 = sadd.s32 %s147, 1
    %s149 = scalar_select %p146, %s147, %s148
    %p152 = pneg %p146
    %p153 = scmp.eq.s32.totalorder %s11, 1
    %p154 = por %p152, %p153
    %p155 = scmp.ne.s32.totalorder %s147, %s150
    %p156 = scmp.eq.s32.totalorder %s11, 0
    %p157 = por %p155, %p156
    %p158 = scmp.ne.s32.totalorder %s147, %s150
    %p159 = scmp.eq.s32.totalorder %s16, 1
    %p160 = por %p158, %p159
    %p161 = scmp.ne.s32.totalorder %s150, %s151
    %p162 = scmp.eq.s32.totalorder %s16, 0
    %p163 = por %p161, %p162
    %p164 = scmp.ne.s32.totalorder %s150, %s151
    %p165 = scmp.eq.s32.totalorder %s17, 1
    %p166 = por %p164, %p165
    %p168 = scmp.ne.s32.totalorder %s151, %s167
    %p169 = scmp.eq.s32.totalorder %s17, 0
    %p170 = por %p168, %p169
    %p171 = scmp.le.s32.totalorder 1, %s11
    %p172 = scmp.lt.s32.totalorder %s11, 3
    %p173 = pnand %p171, %p172
    %p174 = pneg %p173
    // Predicated region
    $region9: #{encoder_forward.4} parent=5 // pred_check
      _
    $region10: #{encoder_forward.4} parent=5 // pred_check_branch
      %176 = sbr.rel (%p173) target = $region12
    $region11: #{encoder_forward.4} parent=5 // pred_region
      %s177 = ssub.s32 %s11, 1
      // Predicated region
      $region13: #{encoder_forward.4} parent=11 // pred_check
        %p178 = pneg %p72
      $region14: #{encoder_forward.4} parent=11 // pred_check_branch
        %180 = sbr.rel (%p178) target = $region16
      $region15: #{encoder_forward.4} parent=11 // pred_region
        _
      $region16: #{encoder_forward.4} parent=11 // pred_fallthru
        _
      // Predicated region
      $region17: #{encoder_forward.4} parent=11 // pred_check
        %p181 = pneg %p93
      $region18: #{encoder_forward.4} parent=11 // pred_check_branch
        %183 = sbr.rel (%p181) target = $region20
      $region19: #{encoder_forward.4} parent=11 // pred_region
        _
      $region20: #{encoder_forward.4} parent=11 // pred_fallthru
        _
      // Predicated region
      $region21: #{encoder_forward.4} parent=11 // pred_check
        %p184 = pneg %p114
      $region22: #{encoder_forward.4} parent=11 // pred_check_branch
        %186 = sbr.rel (%p184) target = $region24
      $region23: #{encoder_forward.4} parent=11 // pred_region
        _
      $region24: #{encoder_forward.4} parent=11 // pred_fallthru
        _
      // Predicated region
      $region25: #{encoder_forward.4} parent=11 // pred_check
        %p187 = pneg %p135
      $region26: #{encoder_forward.4} parent=11 // pred_check_branch
        %189 = sbr.rel (%p187) target = $region28
      $region27: #{encoder_forward.4} parent=11 // pred_region
        _
      $region28: #{encoder_forward.4} parent=11 // pred_fallthru
        _
    $region12: #{encoder_forward.4} parent=5 // pred_fallthru
      _
    %p190 = scmp.lt.s32.totalorder %s11, 2
    // Predicated region
    $region29: #{encoder_forward.4} parent=5 // pred_check
      %p191 = pneg %p190
    $region30: #{encoder_forward.4} parent=5 // pred_check_branch
      %193 = sbr.rel (%p191) target = $region32
    $region31: #{encoder_forward.4} parent=5 // pred_region
      // Predicated region
      $region33: #{encoder_forward.4} parent=31 // pred_check
        %p194 = pneg %p45
      $region34: #{encoder_forward.4} parent=31 // pred_check_branch
        %196 = sbr.rel (%p194) target = $region36
      $region35: #{encoder_forward.4} parent=31 // pred_region
        %s197 = smul.u32 16, %s19
        %p198 = scmp.lt.s32.totalorder %s18, 1
        %s199 = scalar_select %p198, %s18, 1
        %p200 = scmp.lt.s32.totalorder %s197, 15
        %s201 = scalar_select %p200, %s197, 15
        %s202 = smul.addr %s201, 2
        %s203 = smul.addr %s199, 32
        %s204 = sadd.s32 %s202, %s203
        %s205 = smul.addr %s204, 4
        %s206 = scalar_lea.vmem %s0, %s205
        %s207 = smul.u32 16, %s19
      $region36: #{encoder_forward.4} parent=31 // pred_fallthru
        _
    $region32: #{encoder_forward.4} parent=5 // pred_fallthru
      _
    %p208 = scmp.le.s32.totalorder 1, %s11
    %p209 = scmp.lt.s32.totalorder %s11, 3
    %p210 = pnand %p208, %p209
    %p211 = pneg %p210
    // Predicated region
    $region37: #{encoder_forward.4} parent=5 // pred_check
      _
    $region38: #{encoder_forward.4} parent=5 // pred_check_branch
      %213 = sbr.rel (%p210) target = $region40
    $region39: #{encoder_forward.4} parent=5 // pred_region
      %s214 = ssub.s32 %s11, 1
      %s215 = smul.u32 16, %s21
      %p216 = scmp.lt.s32.totalorder %s20, 1
      %s217 = scalar_select %p216, %s20, 1
      %p218 = scmp.lt.s32.totalorder %s215, 15
      %s219 = scalar_select %p218, %s215, 15
      %s220 = smul.addr %s219, 2
      %s221 = smul.addr %s217, 32
      %s222 = sadd.s32 %s220, %s221
      %s223 = smul.addr %s222, 4
      %s224 = scalar_lea.vmem %s0, %s223
      %p225 = pneg %p51
      %p226 = pneg %p48
      %p227 = pneg %p72
      %p228 = pneg %p69
      %p229 = pneg %p93
      %p230 = pneg %p90
      %p231 = pneg %p114
      %p232 = pneg %p111
      %p233 = pneg %p135
      %p234 = pneg %p132
      %p235 = pneg %p163
      %p236 = pneg %p160
      %s237 = smul.u32 16, %s21
      %p238 = scmp.lt.s32.totalorder %s20, 1
      %s239 = scalar_select %p238, %s20, 1
      %p240 = scmp.lt.s32.totalorder %s237, 15
      %s241 = scalar_select %p240, %s237, 15
      %s242 = smul.addr %s241, 2
      %s243 = smul.addr %s239, 32
      %s244 = sadd.s32 %s242, %s243
      %s245 = smul.addr %s244, 4
      %s246 = scalar_lea.vmem %s5, %s245
      %s247 = smul.u32 16, %s21
      %p248 = scmp.lt.s32.totalorder %s20, 1
      %s249 = scalar_select %p248, %s20, 1
      %p250 = scmp.lt.s32.totalorder %s247, 15
      %s251 = scalar_select %p250, %s247, 15
      %s252 = smul.addr %s251, 2
      %s253 = smul.addr %s249, 32
      %s254 = sadd.s32 %s252, %s253
      %s255 = smul.addr %s254, 4
      %s256 = scalar_lea.vmem %s0, %s255
      %s257 = smul.u32 16, %s21
      %s258 = smul.u32 16, %s21
      %p259 = scmp.lt.s32.totalorder %s20, 1
      %s260 = scalar_select %p259, %s20, 1
      %p261 = scmp.lt.s32.totalorder %s258, 15
      %s262 = scalar_select %p261, %s258, 15
      %s263 = smul.addr %s262, 2
      %s264 = smul.addr %s260, 32
      %s265 = sadd.s32 %s263, %s264
      %s266 = smul.addr %s265, 4
      %s267 = scalar_lea.vmem %s5, %s266
      %s268 = smul.u32 16, %s21
      %v270 = vld [vmem:[%s256] sm:$0xf]
      %v271 = vld [vmem:[%s256 + $0x4] sm:$0xf]
      %v272 = vld [vmem:[%s256 + $0x8] sm:$0xf]
      %v273 = vld [vmem:[%s256 + $0xc] sm:$0xf]
      %v274 = vld [vmem:[%s256 + $0x10] sm:$0xf]
      %v275 = vld [vmem:[%s256 + $0x14] sm:$0xf]
      %v276 = vld [vmem:[%s256 + $0x18] sm:$0xf]
      %v277 = vld [vmem:[%s256 + $0x1c] sm:$0xf]
      %v278 = vld [vmem:[%s256 + $0x20] sm:$0xf]
      %v279 = vld [vmem:[%s256 + $0x24] sm:$0xf]
      %v280 = vld [vmem:[%s256 + $0x28] sm:$0xf]
      %v281 = vld [vmem:[%s256 + $0x2c] sm:$0xf]
      %v282 = vld [vmem:[%s256 + $0x30] sm:$0xf]
      %v283 = vld [vmem:[%s256 + $0x34] sm:$0xf]
      %v284 = vld [vmem:[%s256 + $0x38] sm:$0xf]
      %v285 = vld [vmem:[%s256 + $0x3c] sm:$0xf]
      %v286 = vld [vmem:[%s256 + $0x40] sm:$0xf]
      %v287 = vld [vmem:[%s256 + $0x44] sm:$0xf]
      %v288 = vld [vmem:[%s256 + $0x48] sm:$0xf]
      %v289 = vld [vmem:[%s256 + $0x4c] sm:$0xf]
      %v290 = vld [vmem:[%s256 + $0x50] sm:$0xf]
      %v291 = vld [vmem:[%s256 + $0x54] sm:$0xf]
      %v292 = vld [vmem:[%s256 + $0x58] sm:$0xf]
      %v293 = vld [vmem:[%s256 + $0x5c] sm:$0xf]
      %v294 = vld [vmem:[%s256 + $0x60] sm:$0xf]
      %v295 = vld [vmem:[%s256 + $0x64] sm:$0xf]
      %v296 = vld [vmem:[%s256 + $0x68] sm:$0xf]
      %v297 = vld [vmem:[%s256 + $0x6c] sm:$0xf]
      %v298 = vld [vmem:[%s256 + $0x70] sm:$0xf]
      %v299 = vld [vmem:[%s256 + $0x74] sm:$0xf]
      %v300 = vld [vmem:[%s256 + $0x78] sm:$0xf]
      %v301 = vld [vmem:[%s256 + $0x7c] sm:$0xf]
      %v302 = vld [vmem:[%s1] sm:$0xf]
      %v303 = vld [vmem:[%s1 + $0x4] sm:$0xf]
      %v304 = vld [vmem:[%s1 + $0x8] sm:$0xf]
      %v305 = vld [vmem:[%s1 + $0xc] sm:$0xf]
      %v306 = vld [vmem:[%s1 + $0x10] sm:$0xf]
      %v307 = vld [vmem:[%s1 + $0x14] sm:$0xf]
      %v308 = vld [vmem:[%s1 + $0x18] sm:$0xf]
      %v309 = vld [vmem:[%s1 + $0x1c] sm:$0xf]
      %v310 = vld [vmem:[%s1 + $0x20] sm:$0xf]
      %v311 = vld [vmem:[%s1 + $0x24] sm:$0xf]
      %v312 = vld [vmem:[%s1 + $0x28] sm:$0xf]
      %v313 = vld [vmem:[%s1 + $0x2c] sm:$0xf]
      %v314 = vld [vmem:[%s1 + $0x30] sm:$0xf]
      %v315 = vld [vmem:[%s1 + $0x34] sm:$0xf]
      %v316 = vld [vmem:[%s1 + $0x38] sm:$0xf]
      %v317 = vld [vmem:[%s1 + $0x3c] sm:$0xf]
      %v318 = vld [vmem:[%s2] sm:$0x1]
      %v320 = vlaneseq
      %v321 = vshrl.u32 %v320, 7
      %v322 = vsub.s32 0, %v321
      %v323 = vrot.slane %v318, %v322
      %v357 = vunpack.c.l.b16 %v270
      %v358 = vunpack.c.l.b16 %v271
      %v359 = vunpack.c.l.b16 %v272
      %v360 = vunpack.c.l.b16 %v273
      %v361 = vunpack.c.l.b16 %v274
      %v362 = vunpack.c.l.b16 %v275
      %v363 = vunpack.c.l.b16 %v276
      %v364 = vunpack.c.l.b16 %v277
      %v365 = vunpack.c.l.b16 %v278
      %v366 = vunpack.c.l.b16 %v279
      %v367 = vunpack.c.l.b16 %v280
      %v368 = vunpack.c.l.b16 %v281
      %v369 = vunpack.c.l.b16 %v282
      %v370 = vunpack.c.l.b16 %v283
      %v371 = vunpack.c.l.b16 %v284
      %v372 = vunpack.c.l.b16 %v285
      %v373 = vunpack.c.l.b16 %v286
      %v374 = vunpack.c.l.b16 %v287
      %v375 = vunpack.c.l.b16 %v288
      %v376 = vunpack.c.l.b16 %v289
      %v377 = vunpack.c.l.b16 %v290
      %v378 = vunpack.c.l.b16 %v291
      %v379 = vunpack.c.l.b16 %v292
      %v380 = vunpack.c.l.b16 %v293
      %v381 = vunpack.c.l.b16 %v294
      %v382 = vunpack.c.l.b16 %v295
      %v383 = vunpack.c.l.b16 %v296
      %v384 = vunpack.c.l.b16 %v297
      %v385 = vunpack.c.l.b16 %v298
      %v386 = vunpack.c.l.b16 %v299
      %v387 = vunpack.c.l.b16 %v300
      %v388 = vunpack.c.l.b16 %v301
      %v389 = vpack.c.b16 %v358, %v357
      %v390 = vpack.c.b16 %v360, %v359
      %v391 = vpack.c.b16 %v362, %v361
      %v392 = vpack.c.b16 %v364, %v363
      %v393 = vpack.c.b16 %v366, %v365
      %v394 = vpack.c.b16 %v368, %v367
      %v395 = vpack.c.b16 %v370, %v369
      %v396 = vpack.c.b16 %v372, %v371
      %v397 = vpack.c.b16 %v374, %v373
      %v398 = vpack.c.b16 %v376, %v375
      %v399 = vpack.c.b16 %v378, %v377
      %v400 = vpack.c.b16 %v380, %v379
      %v401 = vpack.c.b16 %v382, %v381
      %v402 = vpack.c.b16 %v384, %v383
      %v403 = vpack.c.b16 %v386, %v385
      %v404 = vpack.c.b16 %v388, %v387
      %v437 = vunpack.c.l.b16 %v302
      %v438 = vunpack.c.l.b16 %v303
      %v439 = vunpack.c.l.b16 %v304
      %v440 = vunpack.c.l.b16 %v305
      %v441 = vunpack.c.l.b16 %v306
      %v442 = vunpack.c.l.b16 %v307
      %v443 = vunpack.c.l.b16 %v308
      %v444 = vunpack.c.l.b16 %v309
      %v445 = vunpack.c.l.b16 %v310
      %v446 = vunpack.c.l.b16 %v311
      %v447 = vunpack.c.l.b16 %v312
      %v448 = vunpack.c.l.b16 %v313
      %v449 = vunpack.c.l.b16 %v314
      %v450 = vunpack.c.l.b16 %v315
      %v451 = vunpack.c.l.b16 %v316
      %v452 = vunpack.c.l.b16 %v317
      %v453 = vpack.c.b16 %v438, %v437
      %v454 = vpack.c.b16 %v440, %v439
      %v455 = vpack.c.b16 %v442, %v441
      %v456 = vpack.c.b16 %v444, %v443
      %v457 = vpack.c.b16 %v446, %v445
      %v458 = vpack.c.b16 %v448, %v447
      %v459 = vpack.c.b16 %v450, %v449
      %v460 = vpack.c.b16 %v452, %v451
      %469 = vmatprep.subr.bf16.mxu0 0
      %470 = vmatpush1.bf16.msra.mxu0 %v453
      %471 = vmatprep.subr.bf16.mxu0 0
      %472 = vmatpush1.bf16.msra.mxu0 %v454
      %473 = vmatprep.subr.bf16.mxu0 0
      %474 = vmatpush1.bf16.msra.mxu0 %v455
      %475 = vmatprep.subr.bf16.mxu0 0
      %476 = vmatpush1.bf16.msra.mxu0 %v456
      %477 = vmatprep.subr.bf16.mxu0 0
      %478 = vmatpush1.bf16.msra.mxu0 %v457
      %479 = vmatprep.subr.bf16.mxu0 0
      %480 = vmatpush1.bf16.msra.mxu0 %v458
      %481 = vmatprep.subr.bf16.mxu0 0
      %482 = vmatpush1.bf16.msra.mxu0 %v459
      %483 = vmatprep.subr.bf16.mxu0 0
      %484 = vmatpush1.bf16.msra.mxu0 %v460
      %485 = vmatprep.subr.bf16.mxu0 0
      %486 = vmatpush1.bf16.msra.mxu0 0
      %487 = vmatprep.subr.bf16.mxu0 0
      %488 = vmatpush1.bf16.msra.mxu0 0
      %489 = vmatprep.subr.bf16.mxu0 0
      %490 = vmatpush1.bf16.msra.mxu0 0
      %491 = vmatprep.subr.bf16.mxu0 0
      %492 = vmatpush1.bf16.msra.mxu0 0
      %493 = vmatprep.subr.bf16.mxu0 0
      %494 = vmatpush1.bf16.msra.mxu0 0
      %495 = vmatprep.subr.bf16.mxu0 0
      %496 = vmatpush1.bf16.msra.mxu0 0
      %497 = vmatprep.subr.bf16.mxu0 0
      %498 = vmatpush1.bf16.msra.mxu0 0
      %499 = vmatprep.subr.bf16.mxu0 0
      %500 = vmatpush1.bf16.msra.mxu0 0
      %501 = vmatprep.mubr.bf16.mxu0 0
      %502 = vmatmul.mubr.bf16.gmra.mrb[0].mxu0 %v389
      %v503 = vpop.f32.mrb[0].mxu0
      %v504 = vadd.f32 %v323, %v503
      %v505 = vpop.f32.mrb[0].mxu0
      %v506 = vpop.f32.mrb[0].mxu0
      %v507 = vadd.f32 %v323, %v506
      %v508 = vpop.f32.mrb[0].mxu0
      %509 = vmatprep.mubr.bf16.mxu0 0
      %510 = vmatmul.mubr.bf16.gmra.mrb[0].mxu0 %v390
      %v511 = vpop.f32.mrb[0].mxu0
      %v512 = vadd.f32 %v323, %v511
      %v513 = vpop.f32.mrb[0].mxu0
      %v514 = vpop.f32.mrb[0].mxu0
      %v515 = vadd.f32 %v323, %v514
      %v516 = vpop.f32.mrb[0].mxu0
      %517 = vmatprep.mubr.bf16.mxu0 0
      %518 = vmatmul.mubr.bf16.gmra.mrb[0].mxu0 %v391
      %v519 = vpop.f32.mrb[0].mxu0
      %v520 = vadd.f32 %v323, %v519
      %v521 = vpop.f32.mrb[0].mxu0
      %v522 = vpop.f32.mrb[0].mxu0
      %v523 = vadd.f32 %v323, %v522
      %v524 = vpop.f32.mrb[0].mxu0
      %525 = vmatprep.mubr.bf16.mxu0 0
      %526 = vmatmul.mubr.bf16.gmra.mrb[0].mxu0 %v392
      %v527 = vpop.f32.mrb[0].mxu0
      %v528 = vadd.f32 %v323, %v527
      %v529 = vpop.f32.mrb[0].mxu0
      %v530 = vpop.f32.mrb[0].mxu0
      %v531 = vadd.f32 %v323, %v530
      %v532 = vpop.f32.mrb[0].mxu0
      %533 = vmatprep.mubr.bf16.mxu0 0
      %534 = vmatmul.mubr.bf16.gmra.mrb[0].mxu0 %v393
      %v535 = vpop.f32.mrb[0].mxu0
      %v536 = vadd.f32 %v323, %v535
      %v537 = vpop.f32.mrb[0].mxu0
      %v538 = vpop.f32.mrb[0].mxu0
      %v539 = vadd.f32 %v323, %v538
      %v540 = vpop.f32.mrb[0].mxu0
      %541 = vmatprep.mubr.bf16.mxu0 0
      %542 = vmatmul.mubr.bf16.gmra.mrb[0].mxu0 %v394
      %v543 = vpop.f32.mrb[0].mxu0
      %v544 = vadd.f32 %v323, %v543
      %v545 = vpop.f32.mrb[0].mxu0
      %v546 = vpop.f32.mrb[0].mxu0
      %v547 = vadd.f32 %v323, %v546
      %v548 = vpop.f32.mrb[0].mxu0
      %549 = vmatprep.mubr.bf16.mxu0 0
      %550 = vmatmul.mubr.bf16.gmra.mrb[0].mxu0 %v395
      %v551 = vpop.f32.mrb[0].mxu0
      %v552 = vadd.f32 %v323, %v551
      %v553 = vpop.f32.mrb[0].mxu0
      %v554 = vpop.f32.mrb[0].mxu0
      %v555 = vadd.f32 %v323, %v554
      %v556 = vpop.f32.mrb[0].mxu0
      %557 = vmatprep.mubr.bf16.mxu0 0
      %558 = vmatmul.mubr.bf16.gmra.mrb[0].mxu0 %v396
      %v559 = vpop.f32.mrb[0].mxu0
      %v560 = vadd.f32 %v323, %v559
      %v561 = vpop.f32.mrb[0].mxu0
      %v562 = vpop.f32.mrb[0].mxu0
      %v563 = vadd.f32 %v323, %v562
      %v564 = vpop.f32.mrb[0].mxu0
      %565 = vmatprep.mubr.bf16.mxu0 0
      %566 = vmatmul.mubr.bf16.gmra.mrb[0].mxu0 %v397
      %v567 = vpop.f32.mrb[0].mxu0
      %v568 = vadd.f32 %v323, %v567
      %v569 = vpop.f32.mrb[0].mxu0
      %v570 = vpop.f32.mrb[0].mxu0
      %v571 = vadd.f32 %v323, %v570
      %v572 = vpop.f32.mrb[0].mxu0
      %573 = vmatprep.mubr.bf16.mxu0 0
      %574 = vmatmul.mubr.bf16.gmra.mrb[0].mxu0 %v398
      %v575 = vpop.f32.mrb[0].mxu0
      %v576 = vadd.f32 %v323, %v575
      %v577 = vpop.f32.mrb[0].mxu0
      %v578 = vpop.f32.mrb[0].mxu0
      %v579 = vadd.f32 %v323, %v578
      %v580 = vpop.f32.mrb[0].mxu0
      %581 = vmatprep.mubr.bf16.mxu0 0
      %582 = vmatmul.mubr.bf16.gmra.mrb[0].mxu0 %v399
      %v583 = vpop.f32.mrb[0].mxu0
      %v584 = vadd.f32 %v323, %v583
      %v585 = vpop.f32.mrb[0].mxu0
      %v586 = vpop.f32.mrb[0].mxu0
      %v587 = vadd.f32 %v323, %v586
      %v588 = vpop.f32.mrb[0].mxu0
      %589 = vmatprep.mubr.bf16.mxu0 0
      %590 = vmatmul.mubr.bf16.gmra.mrb[0].mxu0 %v400
      %v591 = vpop.f32.mrb[0].mxu0
      %v592 = vadd.f32 %v323, %v591
      %v593 = vpop.f32.mrb[0].mxu0
      %v594 = vpop.f32.mrb[0].mxu0
      %v595 = vadd.f32 %v323, %v594
      %v596 = vpop.f32.mrb[0].mxu0
      %597 = vmatprep.mubr.bf16.mxu0 0
      %598 = vmatmul.mubr.bf16.gmra.mrb[0].mxu0 %v401
      %v599 = vpop.f32.mrb[0].mxu0
      %v600 = vadd.f32 %v323, %v599
      %v601 = vpop.f32.mrb[0].mxu0
      %v602 = vpop.f32.mrb[0].mxu0
      %v603 = vadd.f32 %v323, %v602
      %v604 = vpop.f32.mrb[0].mxu0
      %605 = vmatprep.mubr.bf16.mxu0 0
      %606 = vmatmul.mubr.bf16.gmra.mrb[0].mxu0 %v402
      %v607 = vpop.f32.mrb[0].mxu0
      %v608 = vadd.f32 %v323, %v607
      %v609 = vpop.f32.mrb[0].mxu0
      %v610 = vpop.f32.mrb[0].mxu0
      %v611 = vadd.f32 %v323, %v610
      %v612 = vpop.f32.mrb[0].mxu0
      %613 = vmatprep.mubr.bf16.mxu0 0
      %614 = vmatmul.mubr.bf16.gmra.mrb[0].mxu0 %v403
      %v615 = vpop.f32.mrb[0].mxu0
      %v616 = vadd.f32 %v323, %v615
      %v617 = vpop.f32.mrb[0].mxu0
      %v618 = vpop.f32.mrb[0].mxu0
      %v619 = vadd.f32 %v323, %v618
      %v620 = vpop.f32.mrb[0].mxu0
      %621 = vmatprep.mubr.bf16.mxu0 0
      %622 = vmatmul.mubr.bf16.gmra.mrb[0].mxu0 %v404
      %v623 = vpop.f32.mrb[0].mxu0
      %v624 = vadd.f32 %v323, %v623
      %v625 = vpop.f32.mrb[0].mxu0
      %v626 = vpop.f32.mrb[0].mxu0
      %v627 = vadd.f32 %v323, %v626
      %v628 = vpop.f32.mrb[0].mxu0
      %629 = vdwg.mxu0
      %v630 = vmul.f32 %v504, %v504
      %v631 = vmul.f32 %v507, %v507
      %v632 = vmul.f32 %v512, %v512
      %v633 = vmul.f32 %v515, %v515
      %v634 = vmul.f32 %v520, %v520
      %v635 = vmul.f32 %v523, %v523
      %v636 = vmul.f32 %v528, %v528
      %v637 = vmul.f32 %v531, %v531
      %v638 = vmul.f32 %v536, %v536
      %v639 = vmul.f32 %v539, %v539
      %v640 = vmul.f32 %v544, %v544
      %v641 = vmul.f32 %v547, %v547
      %v642 = vmul.f32 %v552, %v552
      %v643 = vmul.f32 %v555, %v555
      %v644 = vmul.f32 %v560, %v560
      %v645 = vmul.f32 %v563, %v563
      %v646 = vmul.f32 %v568, %v568
      %v647 = vmul.f32 %v571, %v571
      %v648 = vmul.f32 %v576, %v576
      %v649 = vmul.f32 %v579, %v579
      %v650 = vmul.f32 %v584, %v584
      %v651 = vmul.f32 %v587, %v587
      %v652 = vmul.f32 %v592, %v592
      %v653 = vmul.f32 %v595, %v595
      %v654 = vmul.f32 %v600, %v600
      %v655 = vmul.f32 %v603, %v603
      %v656 = vmul.f32 %v608, %v608
      %v657 = vmul.f32 %v611, %v611
      %v658 = vmul.f32 %v616, %v616
      %v659 = vmul.f32 %v619, %v619
      %v660 = vmul.f32 %v624, %v624
      %v661 = vmul.f32 %v627, %v627
      %v662 = vpack.c.bf16 %v631, %v630
      %v663 = vpack.c.bf16 %v633, %v632
      %v664 = vpack.c.bf16 %v635, %v634
      %v665 = vpack.c.bf16 %v637, %v636
      %v666 = vpack.c.bf16 %v639, %v638
      %v667 = vpack.c.bf16 %v641, %v640
      %v668 = vpack.c.bf16 %v643, %v642
      %v669 = vpack.c.bf16 %v645, %v644
      %v670 = vpack.c.bf16 %v647, %v646
      %v671 = vpack.c.bf16 %v649, %v648
      %v672 = vpack.c.bf16 %v651, %v650
      %v673 = vpack.c.bf16 %v653, %v652
      %v674 = vpack.c.bf16 %v655, %v654
      %v675 = vpack.c.bf16 %v657, %v656
      %v676 = vpack.c.bf16 %v659, %v658
      %v677 = vpack.c.bf16 %v661, %v660
      %v678 = vld [vmem:[%s3] sm:$0xf]
      %v679 = vld [vmem:[%s3 + $0x4] sm:$0xf]
      %v680 = vld [vmem:[%s3 + $0x8] sm:$0xf]
      %v681 = vld [vmem:[%s3 + $0xc] sm:$0xf]
      %v682 = vld [vmem:[%s3 + $0x10] sm:$0xf]
      %v683 = vld [vmem:[%s3 + $0x14] sm:$0xf]
      %v684 = vld [vmem:[%s3 + $0x18] sm:$0xf]
      %v685 = vld [vmem:[%s3 + $0x1c] sm:$0xf]
      %v686 = vld [vmem:[%s3 + $0x20] sm:$0xf]
      %v687 = vld [vmem:[%s3 + $0x24] sm:$0xf]
      %v688 = vld [vmem:[%s3 + $0x28] sm:$0xf]
      %v689 = vld [vmem:[%s3 + $0x2c] sm:$0xf]
      %v690 = vld [vmem:[%s3 + $0x30] sm:$0xf]
      %v691 = vld [vmem:[%s3 + $0x34] sm:$0xf]
      %v692 = vld [vmem:[%s3 + $0x38] sm:$0xf]
      %v693 = vld [vmem:[%s3 + $0x3c] sm:$0xf]
      %v694 = vld [vmem:[%s4] sm:$0x1]
      %v696 = vlaneseq
      %v697 = vshrl.u32 %v696, 7
      %v698 = vsub.s32 0, %v697
      %v699 = vrot.slane %v694, %v698
      %v717 = vunpack.c.l.b16 %v678
      %v718 = vunpack.c.l.b16 %v679
      %v719 = vunpack.c.l.b16 %v680
      %v720 = vunpack.c.l.b16 %v681
      %v721 = vunpack.c.l.b16 %v682
      %v722 = vunpack.c.l.b16 %v683
      %v723 = vunpack.c.l.b16 %v684
      %v724 = vunpack.c.l.b16 %v685
      %v725 = vunpack.c.l.b16 %v686
      %v726 = vunpack.c.l.b16 %v687
      %v727 = vunpack.c.l.b16 %v688
      %v728 = vunpack.c.l.b16 %v689
      %v729 = vunpack.c.l.b16 %v690
      %v730 = vunpack.c.l.b16 %v691
      %v731 = vunpack.c.l.b16 %v692
      %v732 = vunpack.c.l.b16 %v693
      %v733 = vpack.c.b16 %v718, %v717
      %v734 = vpack.c.b16 %v720, %v719
      %v735 = vpack.c.b16 %v722, %v721
      %v736 = vpack.c.b16 %v724, %v723
      %v737 = vpack.c.b16 %v726, %v725
      %v738 = vpack.c.b16 %v728, %v727
      %v739 = vpack.c.b16 %v730, %v729
      %v740 = vpack.c.b16 %v732, %v731
      %749 = vmatprep.subr.bf16.mxu0 0
      %750 = vmatpush1.bf16.msra.mxu0 %v733
      %751 = vmatprep.subr.bf16.mxu0 0
      %752 = vmatpush1.bf16.msra.mxu0 %v734
      %753 = vmatprep.subr.bf16.mxu0 0
      %754 = vmatpush1.bf16.msra.mxu0 %v735
      %755 = vmatprep.subr.bf16.mxu0 0
      %756 = vmatpush1.bf16.msra.mxu0 %v736
      %757 = vmatprep.subr.bf16.mxu0 0
      %758 = vmatpush1.bf16.msra.mxu0 %v737
      %759 = vmatprep.subr.bf16.mxu0 0
      %760 = vmatpush1.bf16.msra.mxu0 %v738
      %761 = vmatprep.subr.bf16.mxu0 0
      %762 = vmatpush1.bf16.msra.mxu0 %v739
      %763 = vmatprep.subr.bf16.mxu0 0
      %764 = vmatpush1.bf16.msra.mxu0 %v740
      %765 = vmatprep.subr.bf16.mxu0 0
      %766 = vmatpush1.bf16.msra.mxu0 0
      %767 = vmatprep.subr.bf16.mxu0 0
      %768 = vmatpush1.bf16.msra.mxu0 0
      %769 = vmatprep.subr.bf16.mxu0 0
      %770 = vmatpush1.bf16.msra.mxu0 0
      %771 = vmatprep.subr.bf16.mxu0 0
      %772 = vmatpush1.bf16.msra.mxu0 0
      %773 = vmatprep.subr.bf16.mxu0 0
      %774 = vmatpush1.bf16.msra.mxu0 0
      %775 = vmatprep.subr.bf16.mxu0 0
      %776 = vmatpush1.bf16.msra.mxu0 0
      %777 = vmatprep.subr.bf16.mxu0 0
      %778 = vmatpush1.bf16.msra.mxu0 0
      %779 = vmatprep.subr.bf16.mxu0 0
      %780 = vmatpush1.bf16.msra.mxu0 0
      %781 = vmatprep.mubr.bf16.mxu0 0
      %782 = vmatmul.mubr.bf16.gmra.mrb[0].mxu0 %v662
      %v783 = vpop.f32.mrb[0].mxu0
      %v784 = vadd.f32 %v699, %v783
      %v785 = vpop.f32.mrb[0].mxu0
      %v786 = vpop.f32.mrb[0].mxu0
      %v787 = vadd.f32 %v699, %v786
      %v788 = vpop.f32.mrb[0].mxu0
      %789 = vmatprep.mubr.bf16.mxu0 0
      %790 = vmatmul.mubr.bf16.gmra.mrb[0].mxu0 %v663
      %v791 = vpop.f32.mrb[0].mxu0
      %v792 = vadd.f32 %v699, %v791
      %v793 = vpop.f32.mrb[0].mxu0
      %v794 = vpop.f32.mrb[0].mxu0
      %v795 = vadd.f32 %v699, %v794
      %v796 = vpop.f32.mrb[0].mxu0
      %797 = vmatprep.mubr.bf16.mxu0 0
      %798 = vmatmul.mubr.bf16.gmra.mrb[0].mxu0 %v664
      %v799 = vpop.f32.mrb[0].mxu0
      %v800 = vadd.f32 %v699, %v799
      %v801 = vpop.f32.mrb[0].mxu0
      %v802 = vpop.f32.mrb[0].mxu0
      %v803 = vadd.f32 %v699, %v802
      %v804 = vpop.f32.mrb[0].mxu0
      %805 = vmatprep.mubr.bf16.mxu0 0
      %806 = vmatmul.mubr.bf16.gmra.mrb[0].mxu0 %v665
      %v807 = vpop.f32.mrb[0].mxu0
      %v808 = vadd.f32 %v699, %v807
      %v809 = vpop.f32.mrb[0].mxu0
      %v810 = vpop.f32.mrb[0].mxu0
      %v811 = vadd.f32 %v699, %v810
      %v812 = vpop.f32.mrb[0].mxu0
      %813 = vmatprep.mubr.bf16.mxu0 0
      %814 = vmatmul.mubr.bf16.gmra.mrb[0].mxu0 %v666
      %v815 = vpop.f32.mrb[0].mxu0
      %v816 = vadd.f32 %v699, %v815
      %v817 = vpop.f32.mrb[0].mxu0
      %v818 = vpop.f32.mrb[0].mxu0
      %v819 = vadd.f32 %v699, %v818
      %v820 = vpop.f32.mrb[0].mxu0
      %821 = vmatprep.mubr.bf16.mxu0 0
      %822 = vmatmul.mubr.bf16.gmra.mrb[0].mxu0 %v667
      %v823 = vpop.f32.mrb[0].mxu0
      %v824 = vadd.f32 %v699, %v823
      %v825 = vpop.f32.mrb[0].mxu0
      %v826 = vpop.f32.mrb[0].mxu0
      %v827 = vadd.f32 %v699, %v826
      %v828 = vpop.f32.mrb[0].mxu0
      %829 = vmatprep.mubr.bf16.mxu0 0
      %830 = vmatmul.mubr.bf16.gmra.mrb[0].mxu0 %v668
      %v831 = vpop.f32.mrb[0].mxu0
      %v832 = vadd.f32 %v699, %v831
      %v833 = vpop.f32.mrb[0].mxu0
      %v834 = vpop.f32.mrb[0].mxu0
      %v835 = vadd.f32 %v699, %v834
      %v836 = vpop.f32.mrb[0].mxu0
      %837 = vmatprep.mubr.bf16.mxu0 0
      %838 = vmatmul.mubr.bf16.gmra.mrb[0].mxu0 %v669
      %v839 = vpop.f32.mrb[0].mxu0
      %v840 = vadd.f32 %v699, %v839
      %v841 = vpop.f32.mrb[0].mxu0
      %v842 = vpop.f32.mrb[0].mxu0
      %v843 = vadd.f32 %v699, %v842
      %v844 = vpop.f32.mrb[0].mxu0
      %845 = vmatprep.mubr.bf16.mxu0 0
      %846 = vmatmul.mubr.bf16.gmra.mrb[0].mxu0 %v670
      %v847 = vpop.f32.mrb[0].mxu0
      %v848 = vadd.f32 %v699, %v847
      %v849 = vpop.f32.mrb[0].mxu0
      %v850 = vpop.f32.mrb[0].mxu0
      %v851 = vadd.f32 %v699, %v850
      %v852 = vpop.f32.mrb[0].mxu0
      %853 = vmatprep.mubr.bf16.mxu0 0
      %854 = vmatmul.mubr.bf16.gmra.mrb[0].mxu0 %v671
      %v855 = vpop.f32.mrb[0].mxu0
      %v856 = vadd.f32 %v699, %v855
      %v857 = vpop.f32.mrb[0].mxu0
      %v858 = vpop.f32.mrb[0].mxu0
      %v859 = vadd.f32 %v699, %v858
      %v860 = vpop.f32.mrb[0].mxu0
      %861 = vmatprep.mubr.bf16.mxu0 0
      %862 = vmatmul.mubr.bf16.gmra.mrb[0].mxu0 %v672
      %v863 = vpop.f32.mrb[0].mxu0
      %v864 = vadd.f32 %v699, %v863
      %v865 = vpop.f32.mrb[0].mxu0
      %v866 = vpop.f32.mrb[0].mxu0
      %v867 = vadd.f32 %v699, %v866
      %v868 = vpop.f32.mrb[0].mxu0
      %869 = vmatprep.mubr.bf16.mxu0 0
      %870 = vmatmul.mubr.bf16.gmra.mrb[0].mxu0 %v673
      %v871 = vpop.f32.mrb[0].mxu0
      %v872 = vadd.f32 %v699, %v871
      %v873 = vpop.f32.mrb[0].mxu0
      %v874 = vpop.f32.mrb[0].mxu0
      %v875 = vadd.f32 %v699, %v874
      %v876 = vpop.f32.mrb[0].mxu0
      %877 = vmatprep.mubr.bf16.mxu0 0
      %878 = vmatmul.mubr.bf16.gmra.mrb[0].mxu0 %v674
      %v879 = vpop.f32.mrb[0].mxu0
      %v880 = vadd.f32 %v699, %v879
      %v881 = vpop.f32.mrb[0].mxu0
      %v882 = vpop.f32.mrb[0].mxu0
      %v883 = vadd.f32 %v699, %v882
      %v884 = vpop.f32.mrb[0].mxu0
      %885 = vmatprep.mubr.bf16.mxu0 0
      %886 = vmatmul.mubr.bf16.gmra.mrb[0].mxu0 %v675
      %v887 = vpop.f32.mrb[0].mxu0
      %v888 = vadd.f32 %v699, %v887
      %v889 = vpop.f32.mrb[0].mxu0
      %v890 = vpop.f32.mrb[0].mxu0
      %v891 = vadd.f32 %v699, %v890
      %v892 = vpop.f32.mrb[0].mxu0
      %893 = vmatprep.mubr.bf16.mxu0 0
      %894 = vmatmul.mubr.bf16.gmra.mrb[0].mxu0 %v676
      %v895 = vpop.f32.mrb[0].mxu0
      %v896 = vadd.f32 %v699, %v895
      %v897 = vpop.f32.mrb[0].mxu0
      %v898 = vpop.f32.mrb[0].mxu0
      %v899 = vadd.f32 %v699, %v898
      %v900 = vpop.f32.mrb[0].mxu0
      %901 = vmatprep.mubr.bf16.mxu0 0
      %902 = vmatmul.mubr.bf16.gmra.mrb[0].mxu0 %v677
      %v903 = vpop.f32.mrb[0].mxu0
      %v904 = vadd.f32 %v699, %v903
      %v905 = vpop.f32.mrb[0].mxu0
      %v906 = vpop.f32.mrb[0].mxu0
      %v907 = vadd.f32 %v699, %v906
      %v908 = vpop.f32.mrb[0].mxu0
      %909 = vdwg.mxu0
      %v910 = vmax.f32 %v784, 1e-06
      %v911 = vmax.f32 %v787, 1e-06
      %v912 = vmax.f32 %v792, 1e-06
      %v913 = vmax.f32 %v795, 1e-06
      %v914 = vmax.f32 %v800, 1e-06
      %v915 = vmax.f32 %v803, 1e-06
      %v916 = vmax.f32 %v808, 1e-06
      %v917 = vmax.f32 %v811, 1e-06
      %v918 = vmax.f32 %v816, 1e-06
      %v919 = vmax.f32 %v819, 1e-06
      %v920 = vmax.f32 %v824, 1e-06
      %v921 = vmax.f32 %v827, 1e-06
      %v922 = vmax.f32 %v832, 1e-06
      %v923 = vmax.f32 %v835, 1e-06
      %v924 = vmax.f32 %v840, 1e-06
      %v925 = vmax.f32 %v843, 1e-06
      %v926 = vmax.f32 %v848, 1e-06
      %v927 = vmax.f32 %v851, 1e-06
      %v928 = vmax.f32 %v856, 1e-06
      %v929 = vmax.f32 %v859, 1e-06
      %v930 = vmax.f32 %v864, 1e-06
      %v931 = vmax.f32 %v867, 1e-06
      %v932 = vmax.f32 %v872, 1e-06
      %v933 = vmax.f32 %v875, 1e-06
      %v934 = vmax.f32 %v880, 1e-06
      %v935 = vmax.f32 %v883, 1e-06
      %v936 = vmax.f32 %v888, 1e-06
      %v937 = vmax.f32 %v891, 1e-06
      %v938 = vmax.f32 %v896, 1e-06
      %v939 = vmax.f32 %v899, 1e-06
      %v940 = vmax.f32 %v904, 1e-06
      %v941 = vmax.f32 %v907, 1e-06
      %v942 = vrsqrt.pop %v910
      %v943 = vrsqrt.pop %v911
      %v944 = vrsqrt.pop %v912
      %v945 = vrsqrt.pop %v913
      %v946 = vrsqrt.pop %v914
      %v947 = vrsqrt.pop %v915
      %v948 = vrsqrt.pop %v916
      %v949 = vrsqrt.pop %v917
      %v950 = vrsqrt.pop %v918
      %v951 = vrsqrt.pop %v919
      %v952 = vrsqrt.pop %v920
      %v953 = vrsqrt.pop %v921
      %v954 = vrsqrt.pop %v922
      %v955 = vrsqrt.pop %v923
      %v956 = vrsqrt.pop %v924
      %v957 = vrsqrt.pop %v925
      %v958 = vrsqrt.pop %v926
      %v959 = vrsqrt.pop %v927
      %v960 = vrsqrt.pop %v928
      %v961 = vrsqrt.pop %v929
      %v962 = vrsqrt.pop %v930
      %v963 = vrsqrt.pop %v931
      %v964 = vrsqrt.pop %v932
      %v965 = vrsqrt.pop %v933
      %v966 = vrsqrt.pop %v934
      %v967 = vrsqrt.pop %v935
      %v968 = vrsqrt.pop %v936
      %v969 = vrsqrt.pop %v937
      %v970 = vrsqrt.pop %v938
      %v971 = vrsqrt.pop %v939
      %v972 = vrsqrt.pop %v940
      %v973 = vrsqrt.pop %v941
      %v974 = vmul.f32 %v504, %v942
      %v975 = vmul.f32 %v507, %v943
      %v976 = vmul.f32 %v512, %v944
      %v977 = vmul.f32 %v515, %v945
      %v978 = vmul.f32 %v520, %v946
      %v979 = vmul.f32 %v523, %v947
      %v980 = vmul.f32 %v528, %v948
      %v981 = vmul.f32 %v531, %v949
      %v982 = vmul.f32 %v536, %v950
      %v983 = vmul.f32 %v539, %v951
      %v984 = vmul.f32 %v544, %v952
      %v985 = vmul.f32 %v547, %v953
      %v986 = vmul.f32 %v552, %v954
      %v987 = vmul.f32 %v555, %v955
      %v988 = vmul.f32 %v560, %v956
      %v989 = vmul.f32 %v563, %v957
      %v990 = vmul.f32 %v568, %v958
      %v991 = vmul.f32 %v571, %v959
      %v992 = vmul.f32 %v576, %v960
      %v993 = vmul.f32 %v579, %v961
      %v994 = vmul.f32 %v584, %v962
      %v995 = vmul.f32 %v587, %v963
      %v996 = vmul.f32 %v592, %v964
      %v997 = vmul.f32 %v595, %v965
      %v998 = vmul.f32 %v600, %v966
      %v999 = vmul.f32 %v603, %v967
      %v1000 = vmul.f32 %v608, %v968
      %v1001 = vmul.f32 %v611, %v969
      %v1002 = vmul.f32 %v616, %v970
      %v1003 = vmul.f32 %v619, %v971
      %v1004 = vmul.f32 %v624, %v972
      %v1005 = vmul.f32 %v627, %v973
      %v1006 = vpack.c.bf16 %v975, %v974
      %v1007 = vpack.c.bf16 %v977, %v976
      %v1008 = vpack.c.bf16 %v979, %v978
      %v1009 = vpack.c.bf16 %v981, %v980
      %v1010 = vpack.c.bf16 %v983, %v982
      %v1011 = vpack.c.bf16 %v985, %v984
      %v1012 = vpack.c.bf16 %v987, %v986
      %v1013 = vpack.c.bf16 %v989, %v988
      %v1014 = vpack.c.bf16 %v991, %v990
      %v1015 = vpack.c.bf16 %v993, %v992
      %v1016 = vpack.c.bf16 %v995, %v994
      %v1017 = vpack.c.bf16 %v997, %v996
      %v1018 = vpack.c.bf16 %v999, %v998
      %v1019 = vpack.c.bf16 %v1001, %v1000
      %v1020 = vpack.c.bf16 %v1003, %v1002
      %v1021 = vpack.c.bf16 %v1005, %v1004
      %v1038 = vunpack.c.l.b16 %v1006
      %v1039 = vunpack.c.h.b16 %v1006
      %v1040 = vunpack.c.l.b16 %v1007
      %v1041 = vunpack.c.h.b16 %v1007
      %v1042 = vunpack.c.l.b16 %v1008
      %v1043 = vunpack.c.h.b16 %v1008
      %v1044 = vunpack.c.l.b16 %v1009
      %v1045 = vunpack.c.h.b16 %v1009
      %v1046 = vunpack.c.l.b16 %v1010
      %v1047 = vunpack.c.h.b16 %v1010
      %v1048 = vunpack.c.l.b16 %v1011
      %v1049 = vunpack.c.h.b16 %v1011
      %v1050 = vunpack.c.l.b16 %v1012
      %v1051 = vunpack.c.h.b16 %v1012
      %v1052 = vunpack.c.l.b16 %v1013
      %v1053 = vunpack.c.h.b16 %v1013
      %v1054 = vunpack.c.l.b16 %v1014
      %v1055 = vunpack.c.h.b16 %v1014
      %v1056 = vunpack.c.l.b16 %v1015
      %v1057 = vunpack.c.h.b16 %v1015
      %v1058 = vunpack.c.l.b16 %v1016
      %v1059 = vunpack.c.h.b16 %v1016
      %v1060 = vunpack.c.l.b16 %v1017
      %v1061 = vunpack.c.h.b16 %v1017
      %v1062 = vunpack.c.l.b16 %v1018
      %v1063 = vunpack.c.h.b16 %v1018
      %v1064 = vunpack.c.l.b16 %v1019
      %v1065 = vunpack.c.h.b16 %v1019
      %v1066 = vunpack.c.l.b16 %v1020
      %v1067 = vunpack.c.h.b16 %v1020
      %v1068 = vunpack.c.l.b16 %v1021
      %v1069 = vunpack.c.h.b16 %v1021
      %v1070 = vpack.c.b16 %v1038, %v1038
      %v1071 = vpack.c.b16 %v1039, %v1039
      %v1072 = vpack.c.b16 %v1040, %v1040
      %v1073 = vpack.c.b16 %v1041, %v1041
      %v1074 = vpack.c.b16 %v1042, %v1042
      %v1075 = vpack.c.b16 %v1043, %v1043
      %v1076 = vpack.c.b16 %v1044, %v1044
      %v1077 = vpack.c.b16 %v1045, %v1045
      %v1078 = vpack.c.b16 %v1046, %v1046
      %v1079 = vpack.c.b16 %v1047, %v1047
      %v1080 = vpack.c.b16 %v1048, %v1048
      %v1081 = vpack.c.b16 %v1049, %v1049
      %v1082 = vpack.c.b16 %v1050, %v1050
      %v1083 = vpack.c.b16 %v1051, %v1051
      %v1084 = vpack.c.b16 %v1052, %v1052
      %v1085 = vpack.c.b16 %v1053, %v1053
      %v1086 = vpack.c.b16 %v1054, %v1054
      %v1087 = vpack.c.b16 %v1055, %v1055
      %v1088 = vpack.c.b16 %v1056, %v1056
      %v1089 = vpack.c.b16 %v1057, %v1057
      %v1090 = vpack.c.b16 %v1058, %v1058
      %v1091 = vpack.c.b16 %v1059, %v1059
      %v1092 = vpack.c.b16 %v1060, %v1060
      %v1093 = vpack.c.b16 %v1061, %v1061
      %v1094 = vpack.c.b16 %v1062, %v1062
      %v1095 = vpack.c.b16 %v1063, %v1063
      %v1096 = vpack.c.b16 %v1064, %v1064
      %v1097 = vpack.c.b16 %v1065, %v1065
      %v1098 = vpack.c.b16 %v1066, %v1066
      %v1099 = vpack.c.b16 %v1067, %v1067
      %v1100 = vpack.c.b16 %v1068, %v1068
      %v1101 = vpack.c.b16 %v1069, %v1069
      %1134 = vst [vmem:[%s267] sm:$0xf] %v1070
      %1135 = vst [vmem:[%s267 + $0x4] sm:$0xf] %v1071
      %1136 = vst [vmem:[%s267 + $0x8] sm:$0xf] %v1072
      %1137 = vst [vmem:[%s267 + $0xc] sm:$0xf] %v1073
      %1138 = vst [vmem:[%s267 + $0x10] sm:$0xf] %v1074
      %1139 = vst [vmem:[%s267 + $0x14] sm:$0xf] %v1075
      %1140 = vst [vmem:[%s267 + $0x18] sm:$0xf] %v1076
      %1141 = vst [vmem:[%s267 + $0x1c] sm:$0xf] %v1077
      %1142 = vst [vmem:[%s267 + $0x20] sm:$0xf] %v1078
      %1143 = vst [vmem:[%s267 + $0x24] sm:$0xf] %v1079
      %1144 = vst [vmem:[%s267 + $0x28] sm:$0xf] %v1080
      %1145 = vst [vmem:[%s267 + $0x2c] sm:$0xf] %v1081
      %1146 = vst [vmem:[%s267 + $0x30] sm:$0xf] %v1082
      %1147 = vst [vmem:[%s267 + $0x34] sm:$0xf] %v1083
      %1148 = vst [vmem:[%s267 + $0x38] sm:$0xf] %v1084
      %1149 = vst [vmem:[%s267 + $0x3c] sm:$0xf] %v1085
      %1150 = vst [vmem:[%s267 + $0x40] sm:$0xf] %v1086
      %1151 = vst [vmem:[%s267 + $0x44] sm:$0xf] %v1087
      %1152 = vst [vmem:[%s267 + $0x48] sm:$0xf] %v1088
      %1153 = vst [vmem:[%s267 + $0x4c] sm:$0xf] %v1089
      %1154 = vst [vmem:[%s267 + $0x50] sm:$0xf] %v1090
      %1155 = vst [vmem:[%s267 + $0x54] sm:$0xf] %v1091
      %1156 = vst [vmem:[%s267 + $0x58] sm:$0xf] %v1092
      %1157 = vst [vmem:[%s267 + $0x5c] sm:$0xf] %v1093
      %1158 = vst [vmem:[%s267 + $0x60] sm:$0xf] %v1094
      %1159 = vst [vmem:[%s267 + $0x64] sm:$0xf] %v1095
      %1160 = vst [vmem:[%s267 + $0x68] sm:$0xf] %v1096
      %1161 = vst [vmem:[%s267 + $0x6c] sm:$0xf] %v1097
      %1162 = vst [vmem:[%s267 + $0x70] sm:$0xf] %v1098
      %1163 = vst [vmem:[%s267 + $0x74] sm:$0xf] %v1099
      %1164 = vst [vmem:[%s267 + $0x78] sm:$0xf] %v1100
      %1165 = vst [vmem:[%s267 + $0x7c] sm:$0xf] %v1101
      %s1166 = smul.u32 16, %s21
      %p1167 = scmp.lt.s32.totalorder %s20, 1
      %s1168 = scalar_select %p1167, %s20, 1
      %p1169 = scmp.lt.s32.totalorder %s1166, 15
      %s1170 = scalar_select %p1169, %s1166, 15
      %s1171 = smul.addr %s1170, 2
      %s1172 = smul.addr %s1168, 32
      %s1173 = sadd.s32 %s1171, %s1172
      %s1174 = smul.addr %s1173, 4
      %s1175 = scalar_lea.vmem %s5, %s1174
      // Predicated region
      $region41: #{encoder_forward.4} parent=39 // pred_check
        %p1176 = pneg %p160
      $region42: #{encoder_forward.4} parent=39 // pred_check_branch
        %1178 = sbr.rel (%p1176) target = $region44
      $region43: #{encoder_forward.4} parent=39 // pred_region
        %s1179 = smul.u32 16, %s21
      $region44: #{encoder_forward.4} parent=39 // pred_fallthru
        _
    $region40: #{encoder_forward.4} parent=5 // pred_fallthru
      _
    %p1180 = scmp.le.s32.totalorder 2, %s11
    // Predicated region
    $region45: #{encoder_forward.4} parent=5 // pred_check
      %p1181 = pneg %p1180
    $region46: #{encoder_forward.4} parent=5 // pred_check_branch
      %1183 = sbr.rel (%p1181) target = $region48
    $region47: #{encoder_forward.4} parent=5 // pred_region
      %s1184 = ssub.s32 %s11, 2
      // Predicated region
      $region49: #{encoder_forward.4} parent=47 // pred_check
        %p1185 = pneg %p166
      $region50: #{encoder_forward.4} parent=47 // pred_check_branch
        %1187 = sbr.rel (%p1185) target = $region52
      $region51: #{encoder_forward.4} parent=47 // pred_region
        %s1188 = smul.u32 16, %s23
        %p1189 = scmp.lt.s32.totalorder %s22, 1
        %s1190 = scalar_select %p1189, %s22, 1
        %p1191 = scmp.lt.s32.totalorder %s1188, 15
        %s1192 = scalar_select %p1191, %s1188, 15
        %s1193 = smul.addr %s1192, 2
        %s1194 = smul.addr %s1190, 32
        %s1195 = sadd.s32 %s1193, %s1194
        %s1196 = smul.addr %s1195, 4
        %s1197 = scalar_lea.vmem %s5, %s1196
      $region52: #{encoder_forward.4} parent=47 // pred_fallthru
        _
    $region48: #{encoder_forward.4} parent=5 // pred_fallthru
      _
  $region6: #{encoder_forward.4} parent=0 // loop_footer
    %s15 = sadd.s32 1, %s11
  $region7: #{encoder_forward.4} parent=0 // loop_footer_branch
    %10 = sbr.rel target = $region3
  $region8: #{encoder_forward.4} parent=0 // loop_exit
    _

// kernel: encoder_forward.5
$region0: #{encoder_forward.5}
  #allocation0 [shape = 'u32[]', space=smem, size = 0x4, offset = 0x4, fixed_abs, tag = 'smem constant byte address 0x4 - core index']
  #allocation1 [shape = 'u32[144,128]{1,0:T(1,128)}', space=vmem, size = 0x12000, scoped, tag = 'internal scratch']
  %s0 = inlined_call_operand.vmem [shape: bf16[2,1,10,10,32], index: 0, kind: input, shape index: {}]
  %s1 = inlined_call_operand.vmem [shape: bf16[3,3,32,128], index: 1, kind: input, shape index: {}]
  %s2 = inlined_call_operand.vmem [shape: f32[1,128], index: 2, kind: input, shape index: {}]
  %s3 = inlined_call_operand.vmem [shape: bf16[128,128], index: 3, kind: input, shape index: {}]
  %s4 = inlined_call_operand.vmem [shape: f32[1,128], index: 4, kind: input, shape index: {}]
  %s5 = inlined_call_operand.vmem [shape: bf16[2,8,8,128], index: 5, kind: output, shape index: {}]
  %s6 = sld [smem:[#allocation0]]
  $region53: #{encoder_forward.5} parent=0
    _
  %s8 = ssub.s32 1, %s6
  %s9 = scalar_select 0, %s8, %s6
  loop: start=0, step=1, limit=4
  $region2: #{encoder_forward.5} parent=0 // loop_pre_header
    _
  $region3: #{encoder_forward.5} parent=0 // loop_header
    %s11 = sphi 0, %s15
    %p12 = scmp.ge.s32.totalorder %s11, 4
    %s18 = sphi 0, %s30
    %s19 = sphi 0, %s26
    %s20 = sphi 0, %s18
    %s21 = sphi 0, %s19
    %s22 = sphi 0, %s20
    %s23 = sphi 0, %s21
    %s35 = sphi 0, %s37
    %s38 = sphi 0, %s35
    %s39 = sphi 0, %s38
    %s55 = sphi 0, %s39
    %s59 = sphi 0, %s59
    %s61 = sphi 0, %s59
    %s62 = sphi 0, %s61
    %s76 = sphi 0, %s62
    %s80 = sphi 0, %s80
    %s82 = sphi 0, %s80
    %s83 = sphi 0, %s82
    %s97 = sphi 0, %s83
    %s101 = sphi 0, %s101
    %s103 = sphi 0, %s101
    %s104 = sphi 0, %s103
    %s118 = sphi 0, %s104
    %s122 = sphi 0, %s122
    %s124 = sphi 0, %s122
    %s125 = sphi 0, %s124
    %s139 = sphi 0, %s125
    %s147 = sphi 0, %s149
    %s150 = sphi 0, %s147
    %s151 = sphi 0, %s150
    %s167 = sphi 0, %s151
  $region4: #{encoder_forward.5} parent=0 // loop_header_branch
    %14 = sbr.rel (%p12) target = $region8
  $region5: #{encoder_forward.5} parent=0 // loop_body
    %s16 = ssub.s32 %s11, 1
    %s17 = ssub.s32 %s11, 2
    %s24 = sadd.s32 1, %s19
    %p25 = scmp.ge.s32.totalorder %s24, 1
    %s26 = scalar_select %p25, 0, %s24
    %s27 = sadd.s32 1, %s18
    %s28 = scalar_select %p25, %s27, %s18
    %p29 = scmp.ge.s32.totalorder %s28, 2
    %s30 = scalar_select %p29, 0, %s28
    %s31 = ssub.s32 %s18, %s30
    %s32 = ssub.s32 %s19, %s26
    %s33 = sor.u32 %s31, %s32
    %p34 = scmp.eq.s32.totalorder %s33, 0
    %s36 = sadd.s32 %s35, 1
    %s37 = scalar_select %p34, %s35, %s36
    %p40 = pneg %p34
    %p41 = scmp.eq.s32.totalorder %s11, 1
    %p42 = por %p40, %p41
    %p43 = scmp.ne.s32.totalorder %s35, %s38
    %p44 = scmp.eq.s32.totalorder %s11, 0
    %p45 = por %p43, %p44
    %p46 = scmp.ne.s32.totalorder %s35, %s38
    %p47 = scmp.eq.s32.totalorder %s16, 1
    %p48 = por %p46, %p47
    %p49 = scmp.ne.s32.totalorder %s38, %s39
    %p50 = scmp.eq.s32.totalorder %s16, 0
    %p51 = por %p49, %p50
    %p52 = scmp.ne.s32.totalorder %s38, %s39
    %p53 = scmp.eq.s32.totalorder %s17, 1
    %p54 = por %p52, %p53
    %p56 = scmp.ne.s32.totalorder %s39, %s55
    %p57 = scmp.eq.s32.totalorder %s17, 0
    %p58 = por %p56, %p57
    %s60 = sadd.s32 %s59, 1
    %p63 = scmp.eq.s32.totalorder %s11, 1
    %p64 = scmp.ne.s32.totalorder %s59, %s61
    %p65 = scmp.eq.s32.totalorder %s11, 0
    %p66 = por %p64, %p65
    %p67 = scmp.ne.s32.totalorder %s59, %s61
    %p68 = scmp.eq.s32.totalorder %s16, 1
    %p69 = por %p67, %p68
    %p70 = scmp.ne.s32.totalorder %s61, %s62
    %p71 = scmp.eq.s32.totalorder %s16, 0
    %p72 = por %p70, %p71
    %p73 = scmp.ne.s32.totalorder %s61, %s62
    %p74 = scmp.eq.s32.totalorder %s17, 1
    %p75 = por %p73, %p74
    %p77 = scmp.ne.s32.totalorder %s62, %s76
    %p78 = scmp.eq.s32.totalorder %s17, 0
    %p79 = por %p77, %p78
    %s81 = sadd.s32 %s80, 1
    %p84 = scmp.eq.s32.totalorder %s11, 1
    %p85 = scmp.ne.s32.totalorder %s80, %s82
    %p86 = scmp.eq.s32.totalorder %s11, 0
    %p87 = por %p85, %p86
    %p88 = scmp.ne.s32.totalorder %s80, %s82
    %p89 = scmp.eq.s32.totalorder %s16, 1
    %p90 = por %p88, %p89
    %p91 = scmp.ne.s32.totalorder %s82, %s83
    %p92 = scmp.eq.s32.totalorder %s16, 0
    %p93 = por %p91, %p92
    %p94 = scmp.ne.s32.totalorder %s82, %s83
    %p95 = scmp.eq.s32.totalorder %s17, 1
    %p96 = por %p94, %p95
    %p98 = scmp.ne.s32.totalorder %s83, %s97
    %p99 = scmp.eq.s32.totalorder %s17, 0
    %p100 = por %p98, %p99
    %s102 = sadd.s32 %s101, 1
    %p105 = scmp.eq.s32.totalorder %s11, 1
    %p106 = scmp.ne.s32.totalorder %s101, %s103
    %p107 = scmp.eq.s32.totalorder %s11, 0
    %p108 = por %p106, %p107
    %p109 = scmp.ne.s32.totalorder %s101, %s103
    %p110 = scmp.eq.s32.totalorder %s16, 1
    %p111 = por %p109, %p110
    %p112 = scmp.ne.s32.totalorder %s103, %s104
    %p113 = scmp.eq.s32.totalorder %s16, 0
    %p114 = por %p112, %p113
    %p115 = scmp.ne.s32.totalorder %s103, %s104
    %p116 = scmp.eq.s32.totalorder %s17, 1
    %p117 = por %p115, %p116
    %p119 = scmp.ne.s32.totalorder %s104, %s118
    %p120 = scmp.eq.s32.totalorder %s17, 0
    %p121 = por %p119, %p120
    %s123 = sadd.s32 %s122, 1
    %p126 = scmp.eq.s32.totalorder %s11, 1
    %p127 = scmp.ne.s32.totalorder %s122, %s124
    %p128 = scmp.eq.s32.totalorder %s11, 0
    %p129 = por %p127, %p128
    %p130 = scmp.ne.s32.totalorder %s122, %s124
    %p131 = scmp.eq.s32.totalorder %s16, 1
    %p132 = por %p130, %p131
    %p133 = scmp.ne.s32.totalorder %s124, %s125
    %p134 = scmp.eq.s32.totalorder %s16, 0
    %p135 = por %p133, %p134
    %p136 = scmp.ne.s32.totalorder %s124, %s125
    %p137 = scmp.eq.s32.totalorder %s17, 1
    %p138 = por %p136, %p137
    %p140 = scmp.ne.s32.totalorder %s125, %s139
    %p141 = scmp.eq.s32.totalorder %s17, 0
    %p142 = por %p140, %p141
    %s143 = ssub.s32 %s18, %s30
    %s144 = ssub.s32 %s19, %s26
    %s145 = sor.u32 %s143, %s144
    %p146 = scmp.eq.s32.totalorder %s145, 0
    %s148 = sadd.s32 %s147, 1
    %s149 = scalar_select %p146, %s147, %s148
    %p152 = pneg %p146
    %p153 = scmp.eq.s32.totalorder %s11, 1
    %p154 = por %p152, %p153
    %p155 = scmp.ne.s32.totalorder %s147, %s150
    %p156 = scmp.eq.s32.totalorder %s11, 0
    %p157 = por %p155, %p156
    %p158 = scmp.ne.s32.totalorder %s147, %s150
    %p159 = scmp.eq.s32.totalorder %s16, 1
    %p160 = por %p158, %p159
    %p161 = scmp.ne.s32.totalorder %s150, %s151
    %p162 = scmp.eq.s32.totalorder %s16, 0
    %p163 = por %p161, %p162
    %p164 = scmp.ne.s32.totalorder %s150, %s151
    %p165 = scmp.eq.s32.totalorder %s17, 1
    %p166 = por %p164, %p165
    %p168 = scmp.ne.s32.totalorder %s151, %s167
    %p169 = scmp.eq.s32.totalorder %s17, 0
    %p170 = por %p168, %p169
    %p171 = scmp.le.s32.totalorder 1, %s11
    %p172 = scmp.lt.s32.totalorder %s11, 3
    %p173 = pnand %p171, %p172
    %p174 = pneg %p173
    // Predicated region
    $region9: #{encoder_forward.5} parent=5 // pred_check
      _
    $region10: #{encoder_forward.5} parent=5 // pred_check_branch
      %176 = sbr.rel (%p173) target = $region12
    $region11: #{encoder_forward.5} parent=5 // pred_region
      %s177 = ssub.s32 %s11, 1
      // Predicated region
      $region13: #{encoder_forward.5} parent=11 // pred_check
        %p178 = pneg %p72
      $region14: #{encoder_forward.5} parent=11 // pred_check_branch
        %180 = sbr.rel (%p178) target = $region16
      $region15: #{encoder_forward.5} parent=11 // pred_region
        _
      $region16: #{encoder_forward.5} parent=11 // pred_fallthru
        _
      // Predicated region
      $region17: #{encoder_forward.5} parent=11 // pred_check
        %p181 = pneg %p93
      $region18: #{encoder_forward.5} parent=11 // pred_check_branch
        %183 = sbr.rel (%p181) target = $region20
      $region19: #{encoder_forward.5} parent=11 // pred_region
        _
      $region20: #{encoder_forward.5} parent=11 // pred_fallthru
        _
      // Predicated region
      $region21: #{encoder_forward.5} parent=11 // pred_check
        %p184 = pneg %p114
      $region22: #{encoder_forward.5} parent=11 // pred_check_branch
        %186 = sbr.rel (%p184) target = $region24
      $region23: #{encoder_forward.5} parent=11 // pred_region
        _
      $region24: #{encoder_forward.5} parent=11 // pred_fallthru
        _
      // Predicated region
      $region25: #{encoder_forward.5} parent=11 // pred_check
        %p187 = pneg %p135
      $region26: #{encoder_forward.5} parent=11 // pred_check_branch
        %189 = sbr.rel (%p187) target = $region28
      $region27: #{encoder_forward.5} parent=11 // pred_region
        _
      $region28: #{encoder_forward.5} parent=11 // pred_fallthru
        _
    $region12: #{encoder_forward.5} parent=5 // pred_fallthru
      _
    %p190 = scmp.lt.s32.totalorder %s11, 2
    // Predicated region
    $region29: #{encoder_forward.5} parent=5 // pred_check
      %p191 = pneg %p190
    $region30: #{encoder_forward.5} parent=5 // pred_check_branch
      %193 = sbr.rel (%p191) target = $region32
    $region31: #{encoder_forward.5} parent=5 // pred_region
      // Predicated region
      $region33: #{encoder_forward.5} parent=31 // pred_check
        %p194 = pneg %p45
      $region34: #{encoder_forward.5} parent=31 // pred_check_branch
        %196 = sbr.rel (%p194) target = $region36
      $region35: #{encoder_forward.5} parent=31 // pred_region
        %p197 = scmp.lt.s32.totalorder %s18, 1
        %s198 = scalar_select %p197, %s18, 1
        %p199 = scmp.lt.s32.totalorder %s19, 0
        %s200 = scalar_select %p199, %s19, 0
        %s201 = smul.addr %s200, 20
        %s202 = smul.addr %s198, 20
        %s203 = sadd.s32 %s201, %s202
        %s204 = smul.addr %s203, 4
        %s205 = scalar_lea.vmem %s0, %s204
      $region36: #{encoder_forward.5} parent=31 // pred_fallthru
        _
    $region32: #{encoder_forward.5} parent=5 // pred_fallthru
      _
    %p206 = scmp.le.s32.totalorder 1, %s11
    %p207 = scmp.lt.s32.totalorder %s11, 3
    %p208 = pnand %p206, %p207
    %p209 = pneg %p208
    // Predicated region
    $region37: #{encoder_forward.5} parent=5 // pred_check
      _
    $region38: #{encoder_forward.5} parent=5 // pred_check_branch
      %211 = sbr.rel (%p208) target = $region40
    $region39: #{encoder_forward.5} parent=5 // pred_region
      %s212 = ssub.s32 %s11, 1
      %p213 = scmp.lt.s32.totalorder %s20, 1
      %s214 = scalar_select %p213, %s20, 1
      %p215 = scmp.lt.s32.totalorder %s21, 0
      %s216 = scalar_select %p215, %s21, 0
      %s217 = smul.addr %s216, 20
      %s218 = smul.addr %s214, 20
      %s219 = sadd.s32 %s217, %s218
      %s220 = smul.addr %s219, 4
      %s221 = scalar_lea.vmem %s0, %s220
      %p222 = pneg %p51
      %p223 = pneg %p48
      %p224 = pneg %p72
      %p225 = pneg %p69
      %p226 = pneg %p93
      %p227 = pneg %p90
      %p228 = pneg %p114
      %p229 = pneg %p111
      %p230 = pneg %p135
      %p231 = pneg %p132
      %p232 = pneg %p163
      %p233 = pneg %p160
      %s234 = smul.u32 8, %s21
      %p235 = scmp.lt.s32.totalorder %s20, 1
      %s236 = scalar_select %p235, %s20, 1
      %p237 = scmp.lt.s32.totalorder %s234, 7
      %s238 = scalar_select %p237, %s234, 7
      %s239 = smul.addr %s236, 8
      %s240 = sadd.s32 %s238, %s239
      %s241 = smul.addr %s240, 4
      %s242 = scalar_lea.vmem %s5, %s241
      %p243 = scmp.lt.s32.totalorder %s20, 1
      %s244 = scalar_select %p243, %s20, 1
      %p245 = scmp.lt.s32.totalorder %s21, 0
      %s246 = scalar_select %p245, %s21, 0
      %s247 = smul.addr %s246, 20
      %s248 = smul.addr %s244, 20
      %s249 = sadd.s32 %s247, %s248
      %s250 = smul.addr %s249, 4
      %s251 = scalar_lea.vmem %s0, %s250
      %s252 = smul.u32 8, %s21
      %p253 = scmp.lt.s32.totalorder %s20, 1
      %s254 = scalar_select %p253, %s20, 1
      %p255 = scmp.lt.s32.totalorder %s252, 7
      %s256 = scalar_select %p255, %s252, 7
      %s257 = smul.addr %s254, 8
      %s258 = sadd.s32 %s256, %s257
      %s259 = smul.addr %s258, 4
      %s260 = scalar_lea.vmem %s5, %s259
      %s261 = smul.u32 8, %s21
      %v263 = vld [vmem:[%s251] sm:$0xf]
      %v264 = vld [vmem:[%s251 + $0x8] sm:$0xf]
      %v265 = vld [vmem:[%s251 + $0x10] sm:$0xf]
      %v266 = vld [vmem:[%s251 + $0x18] sm:$0xf]
      %v267 = vld [vmem:[%s251 + $0x20] sm:$0xf]
      %v268 = vld [vmem:[%s251 + $0x28] sm:$0xf]
      %v269 = vld [vmem:[%s251 + $0x30] sm:$0xf]
      %v270 = vld [vmem:[%s251 + $0x38] sm:$0xf]
      %v271 = vld [vmem:[%s1] sm:$0xf]
      %v272 = vld [vmem:[%s1 + $0x4] sm:$0xf]
      %v273 = vld [vmem:[%s1 + $0x8] sm:$0xf]
      %v274 = vld [vmem:[%s1 + $0xc] sm:$0xf]
      %v275 = vld [vmem:[%s251 + $0x4] sm:$0x1]
      %v276 = vld [vmem:[%s251 + $0xc] sm:$0x1]
      %v277 = vld [vmem:[%s251 + $0x14] sm:$0x1]
      %v278 = vld [vmem:[%s251 + $0x1c] sm:$0x1]
      %v279 = vld [vmem:[%s251 + $0x24] sm:$0x1]
      %v280 = vld [vmem:[%s251 + $0x2c] sm:$0x1]
      %v281 = vld [vmem:[%s251 + $0x34] sm:$0x1]
      %v282 = vld [vmem:[%s251 + $0x3c] sm:$0x1]
      %vm283 = vsmask.f32 3328
      %vm284 = vsmask.f32 7440
      %vm285 = vmor %vm283, %vm284
      %v287 = vshrl.u32 %v263, 16
      %v289 = vrot.slane %v287, 4
      %v290 = vshll.u32 %v263, 16
      %v292 = vrot.slane %v290, 5
      %v293 = vor.u32 %v289, %v292
      %v294 = vrot.slane %v293, 4
      %v296 = vshll.u32 %v275, 16
      %v298 = vrot.slane %v296, 5
      %v299 = vsel %vm285, %v294, %v298
      %v301 = vshrl.u32 %v264, 16
      %v303 = vrot.slane %v301, 4
      %v304 = vshll.u32 %v264, 16
      %v306 = vrot.slane %v304, 5
      %v307 = vor.u32 %v303, %v306
      %v308 = vrot.slane %v307, 4
      %v310 = vshll.u32 %v276, 16
      %v312 = vrot.slane %v310, 5
      %v313 = vsel %vm285, %v308, %v312
      %v315 = vshrl.u32 %v265, 16
      %v317 = vrot.slane %v315, 4
      %v318 = vshll.u32 %v265, 16
      %v320 = vrot.slane %v318, 5
      %v321 = vor.u32 %v317, %v320
      %v322 = vrot.slane %v321, 4
      %v324 = vshll.u32 %v277, 16
      %v326 = vrot.slane %v324, 5
      %v327 = vsel %vm285, %v322, %v326
      %v329 = vshrl.u32 %v266, 16
      %v331 = vrot.slane %v329, 4
      %v332 = vshll.u32 %v266, 16
      %v334 = vrot.slane %v332, 5
      %v335 = vor.u32 %v331, %v334
      %v336 = vrot.slane %v335, 4
      %v338 = vshll.u32 %v278, 16
      %v340 = vrot.slane %v338, 5
      %v341 = vsel %vm285, %v336, %v340
      %v343 = vshrl.u32 %v267, 16
      %v345 = vrot.slane %v343, 4
      %v346 = vshll.u32 %v267, 16
      %v348 = vrot.slane %v346, 5
      %v349 = vor.u32 %v345, %v348
      %v350 = vrot.slane %v349, 4
      %v352 = vshll.u32 %v279, 16
      %v354 = vrot.slane %v352, 5
      %v355 = vsel %vm285, %v350, %v354
      %v357 = vshrl.u32 %v268, 16
      %v359 = vrot.slane %v357, 4
      %v360 = vshll.u32 %v268, 16
      %v362 = vrot.slane %v360, 5
      %v363 = vor.u32 %v359, %v362
      %v364 = vrot.slane %v363, 4
      %v366 = vshll.u32 %v280, 16
      %v368 = vrot.slane %v366, 5
      %v369 = vsel %vm285, %v364, %v368
      %v371 = vshrl.u32 %v269, 16
      %v373 = vrot.slane %v371, 4
      %v374 = vshll.u32 %v269, 16
      %v376 = vrot.slane %v374, 5
      %v377 = vor.u32 %v373, %v376
      %v378 = vrot.slane %v377, 4
      %v380 = vshll.u32 %v281, 16
      %v382 = vrot.slane %v380, 5
      %v383 = vsel %vm285, %v378, %v382
      %v385 = vshrl.u32 %v270, 16
      %v387 = vrot.slane %v385, 4
      %v388 = vshll.u32 %v270, 16
      %v390 = vrot.slane %v388, 5
      %v391 = vor.u32 %v387, %v390
      %v392 = vrot.slane %v391, 4
      %v394 = vshll.u32 %v282, 16
      %v396 = vrot.slane %v394, 5
      %v397 = vsel %vm285, %v392, %v396
      %s398 = scalar_lea.vmem %s1, 16
      %v399 = vld [vmem:[%s398] sm:$0xf]
      %v400 = vld [vmem:[%s398 + $0x4] sm:$0xf]
      %v401 = vld [vmem:[%s398 + $0x8] sm:$0xf]
      %v402 = vld [vmem:[%s398 + $0xc] sm:$0xf]
      %v403 = vunpack.c.l.b16 %v299
      %v404 = vunpack.c.l.b16 %v313
      %v405 = vunpack.c.l.b16 %v327
      %v406 = vunpack.c.l.b16 %v341
      %v407 = vunpack.c.l.b16 %v355
      %v408 = vunpack.c.l.b16 %v369
      %v409 = vunpack.c.l.b16 %v383
      %v410 = vunpack.c.l.b16 %v397
      %v411 = vpack.c.b16 %v404, %v403
      %v412 = vpack.c.b16 %v406, %v405
      %v413 = vpack.c.b16 %v408, %v407
      %v414 = vpack.c.b16 %v410, %v409
      %v419 = vunpack.c.l.b16 %v399
      %v420 = vunpack.c.l.b16 %v400
      %v421 = vunpack.c.l.b16 %v401
      %v422 = vunpack.c.l.b16 %v402
      %v423 = vpack.c.b16 %v420, %v419
      %v424 = vpack.c.b16 %v422, %v421
      %vm427 = vcmask 261120
      %v429 = vsel %vm427, %v411, 0
      %v432 = vsel %vm427, %v412, 0
      %v435 = vsel %vm427, %v413, 0
      %v438 = vsel %vm427, %v414, 0
      %440 = vmatprep.subr.bf16.mxu0 0
      %441 = vmatpush1.bf16.msra.mxu0 %v423
      %442 = vmatprep.subr.bf16.mxu0 0
      %443 = vmatpush1.bf16.msra.mxu0 %v424
      %444 = vmatprep.subr.bf16.mxu0 0
      %445 = vmatpush1.bf16.msra.mxu0 0
      %446 = vmatprep.subr.bf16.mxu0 0
      %447 = vmatpush1.bf16.msra.mxu0 0
      %448 = vmatprep.subr.bf16.mxu0 0
      %449 = vmatpush1.bf16.msra.mxu0 0
      %450 = vmatprep.subr.bf16.mxu0 0
      %451 = vmatpush1.bf16.msra.mxu0 0
      %452 = vmatprep.subr.bf16.mxu0 0
      %453 = vmatpush1.bf16.msra.mxu0 0
      %454 = vmatprep.subr.bf16.mxu0 0
      %455 = vmatpush1.bf16.msra.mxu0 0
      %456 = vmatprep.subr.bf16.mxu0 0
      %457 = vmatpush1.bf16.msra.mxu0 0
      %458 = vmatprep.subr.bf16.mxu0 0
      %459 = vmatpush1.bf16.msra.mxu0 0
      %460 = vmatprep.subr.bf16.mxu0 0
      %461 = vmatpush1.bf16.msra.mxu0 0
      %462 = vmatprep.subr.bf16.mxu0 0
      %463 = vmatpush1.bf16.msra.mxu0 0
      %464 = vmatprep.subr.bf16.mxu0 0
      %465 = vmatpush1.bf16.msra.mxu0 0
      %466 = vmatprep.subr.bf16.mxu0 0
      %467 = vmatpush1.bf16.msra.mxu0 0
      %468 = vmatprep.subr.bf16.mxu0 0
      %469 = vmatpush1.bf16.msra.mxu0 0
      %470 = vmatprep.subr.bf16.mxu0 0
      %471 = vmatpush1.bf16.msra.mxu0 0
      %472 = vmatprep.mubr.bf16.mxu0 0
      %473 = vmatmul.mubr.bf16.gmra.mrb[0].mxu0 %v429
      %v474 = vpop.f32.mrb[0].mxu0
      %v475 = vadd.f32 0.0, %v474
      %v476 = vpop.f32.mrb[0].mxu0
      %v477 = vpop.f32.mrb[0].mxu0
      %v478 = vadd.f32 0.0, %v477
      %v479 = vpop.f32.mrb[0].mxu0
      %480 = vmatprep.mubr.bf16.mxu0 0
      %481 = vmatmul.mubr.bf16.gmra.mrb[0].mxu0 %v432
      %v482 = vpop.f32.mrb[0].mxu0
      %v483 = vadd.f32 0.0, %v482
      %v484 = vpop.f32.mrb[0].mxu0
      %v485 = vpop.f32.mrb[0].mxu0
      %v486 = vadd.f32 0.0, %v485
      %v487 = vpop.f32.mrb[0].mxu0
      %488 = vmatprep.mubr.bf16.mxu0 0
      %489 = vmatmul.mubr.bf16.gmra.mrb[0].mxu0 %v435
      %v490 = vpop.f32.mrb[0].mxu0
      %v491 = vadd.f32 0.0, %v490
      %v492 = vpop.f32.mrb[0].mxu0
      %v493 = vpop.f32.mrb[0].mxu0
      %v494 = vadd.f32 0.0, %v493
      %v495 = vpop.f32.mrb[0].mxu0
      %496 = vmatprep.mubr.bf16.mxu0 0
      %497 = vmatmul.mubr.bf16.gmra.mrb[0].mxu0 %v438
      %v498 = vpop.f32.mrb[0].mxu0
      %v499 = vadd.f32 0.0, %v498
      %v500 = vpop.f32.mrb[0].mxu0
      %v501 = vpop.f32.mrb[0].mxu0
      %v502 = vadd.f32 0.0, %v501
      %v503 = vpop.f32.mrb[0].mxu0
      %504 = vdwg.mxu0
      %v513 = vunpack.c.l.b16 %v263
      %v514 = vunpack.c.l.b16 %v264
      %v515 = vunpack.c.l.b16 %v265
      %v516 = vunpack.c.l.b16 %v266
      %v517 = vunpack.c.l.b16 %v267
      %v518 = vunpack.c.l.b16 %v268
      %v519 = vunpack.c.l.b16 %v269
      %v520 = vunpack.c.l.b16 %v270
      %v521 = vpack.c.b16 %v514, %v513
      %v522 = vpack.c.b16 %v516, %v515
      %v523 = vpack.c.b16 %v518, %v517
      %v524 = vpack.c.b16 %v520, %v519
      %v529 = vunpack.c.l.b16 %v271
      %v530 = vunpack.c.l.b16 %v272
      %v531 = vunpack.c.l.b16 %v273
      %v532 = vunpack.c.l.b16 %v274
      %v533 = vpack.c.b16 %v530, %v529
      %v534 = vpack.c.b16 %v532, %v531
      %v538 = vsel %vm427, %v521, 0
      %v541 = vsel %vm427, %v522, 0
      %v544 = vsel %vm427, %v523, 0
      %v547 = vsel %vm427, %v524, 0
      %549 = vmatprep.subr.bf16.mxu0 0
      %550 = vmatpush1.bf16.msra.mxu0 %v533
      %551 = vmatprep.subr.bf16.mxu0 0
      %552 = vmatpush1.bf16.msra.mxu0 %v534
      %553 = vmatprep.subr.bf16.mxu0 0
      %554 = vmatpush1.bf16.msra.mxu0 0
      %555 = vmatprep.subr.bf16.mxu0 0
      %556 = vmatpush1.bf16.msra.mxu0 0
      %557 = vmatprep.subr.bf16.mxu0 0
      %558 = vmatpush1.bf16.msra.mxu0 0
      %559 = vmatprep.subr.bf16.mxu0 0
      %560 = vmatpush1.bf16.msra.mxu0 0
      %561 = vmatprep.subr.bf16.mxu0 0
      %562 = vmatpush1.bf16.msra.mxu0 0
      %563 = vmatprep.subr.bf16.mxu0 0
      %564 = vmatpush1.bf16.msra.mxu0 0
      %565 = vmatprep.subr.bf16.mxu0 0
      %566 = vmatpush1.bf16.msra.mxu0 0
      %567 = vmatprep.subr.bf16.mxu0 0
      %568 = vmatpush1.bf16.msra.mxu0 0
      %569 = vmatprep.subr.bf16.mxu0 0
      %570 = vmatpush1.bf16.msra.mxu0 0
      %571 = vmatprep.subr.bf16.mxu0 0
      %572 = vmatpush1.bf16.msra.mxu0 0
      %573 = vmatprep.subr.bf16.mxu0 0
      %574 = vmatpush1.bf16.msra.mxu0 0
      %575 = vmatprep.subr.bf16.mxu0 0
      %576 = vmatpush1.bf16.msra.mxu0 0
      %577 = vmatprep.subr.bf16.mxu0 0
      %578 = vmatpush1.bf16.msra.mxu0 0
      %579 = vmatprep.subr.bf16.mxu0 0
      %580 = vmatpush1.bf16.msra.mxu0 0
      %581 = vmatprep.mubr.bf16.mxu0 0
      %582 = vmatmul.mubr.bf16.gmra.mrb[0].mxu0 %v538
      %v583 = vpop.f32.mrb[0].mxu0
      %v584 = vadd.f32 %v475, %v583
      %v585 = vpop.f32.mrb[0].mxu0
      %v586 = vpop.f32.mrb[0].mxu0
      %v587 = vadd.f32 %v478, %v586
      %v588 = vpop.f32.mrb[0].mxu0
      %589 = vmatprep.mubr.bf16.mxu0 0
      %590 = vmatmul.mubr.bf16.gmra.mrb[0].mxu0 %v541
      %v591 = vpop.f32.mrb[0].mxu0
      %v592 = vadd.f32 %v483, %v591
      %v593 = vpop.f32.mrb[0].mxu0
      %v594 = vpop.f32.mrb[0].mxu0
      %v595 = vadd.f32 %v486, %v594
      %v596 = vpop.f32.mrb[0].mxu0
      %597 = vmatprep.mubr.bf16.mxu0 0
      %598 = vmatmul.mubr.bf16.gmra.mrb[0].mxu0 %v544
      %v599 = vpop.f32.mrb[0].mxu0
      %v600 = vadd.f32 %v491, %v599
      %v601 = vpop.f32.mrb[0].mxu0
      %v602 = vpop.f32.mrb[0].mxu0
      %v603 = vadd.f32 %v494, %v602
      %v604 = vpop.f32.mrb[0].mxu0
      %605 = vmatprep.mubr.bf16.mxu0 0
      %606 = vmatmul.mubr.bf16.gmra.mrb[0].mxu0 %v547
      %v607 = vpop.f32.mrb[0].mxu0
      %v608 = vadd.f32 %v499, %v607
      %v609 = vpop.f32.mrb[0].mxu0
      %v610 = vpop.f32.mrb[0].mxu0
      %v611 = vadd.f32 %v502, %v610
      %v612 = vpop.f32.mrb[0].mxu0
      %613 = vdwg.mxu0
      %v614 = vld [vmem:[%s251] sm:$0xe]
      %v615 = vld [vmem:[%s251 + $0x8] sm:$0xe]
      %v616 = vld [vmem:[%s251 + $0x10] sm:$0xe]
      %v617 = vld [vmem:[%s251 + $0x18] sm:$0xe]
      %v618 = vld [vmem:[%s251 + $0x20] sm:$0xe]
      %v619 = vld [vmem:[%s251 + $0x28] sm:$0xe]
      %v620 = vld [vmem:[%s251 + $0x30] sm:$0xe]
      %v621 = vld [vmem:[%s251 + $0x38] sm:$0xe]
      %vm638 = vcmask 1042432
      %vm639 = vcmask 1046532
      %vm640 = vmor %vm638, %vm639
      %v641 = vrot.slane %v614, 5
      %v642 = vrot.slane %v641, 4
      %v643 = vrot.slane %v275, 5
      %v644 = vsel %vm640, %v642, %v643
      %v645 = vrot.slane %v615, 5
      %v646 = vrot.slane %v645, 4
      %v647 = vrot.slane %v276, 5
      %v648 = vsel %vm640, %v646, %v647
      %v649 = vrot.slane %v616, 5
      %v650 = vrot.slane %v649, 4
      %v651 = vrot.slane %v277, 5
      %v652 = vsel %vm640, %v650, %v651
      %v653 = vrot.slane %v617, 5
      %v654 = vrot.slane %v653, 4
      %v655 = vrot.slane %v278, 5
      %v656 = vsel %vm640, %v654, %v655
      %v657 = vrot.slane %v618, 5
      %v658 = vrot.slane %v657, 4
      %v659 = vrot.slane %v279, 5
      %v660 = vsel %vm640, %v658, %v659
      %v661 = vrot.slane %v619, 5
      %v662 = vrot.slane %v661, 4
      %v663 = vrot.slane %v280, 5
      %v664 = vsel %vm640, %v662, %v663
      %v665 = vrot.slane %v620, 5
      %v666 = vrot.slane %v665, 4
      %v667 = vrot.slane %v281, 5
      %v668 = vsel %vm640, %v666, %v667
      %v669 = vrot.slane %v621, 5
      %v670 = vrot.slane %v669, 4
      %v671 = vrot.slane %v282, 5
      %v672 = vsel %vm640, %v670, %v671
      %s673 = scalar_lea.vmem %s1, 32
      %v674 = vld [vmem:[%s673] sm:$0xf]
      %v675 = vld [vmem:[%s673 + $0x4] sm:$0xf]
      %v676 = vld [vmem:[%s673 + $0x8] sm:$0xf]
      %v677 = vld [vmem:[%s673 + $0xc] sm:$0xf]
      %v678 = vunpack.c.l.b16 %v644
      %v679 = vunpack.c.l.b16 %v648
      %v680 = vunpack.c.l.b16 %v652
      %v681 = vunpack.c.l.b16 %v656
      %v682 = vunpack.c.l.b16 %v660
      %v683 = vunpack.c.l.b16 %v664
      %v684 = vunpack.c.l.b16 %v668
      %v685 = vunpack.c.l.b16 %v672
      %v686 = vpack.c.b16 %v679, %v678
      %v687 = vpack.c.b16 %v681, %v680
      %v688 = vpack.c.b16 %v683, %v682
      %v689 = vpack.c.b16 %v685, %v684
      %v694 = vunpack.c.l.b16 %v674
      %v695 = vunpack.c.l.b16 %v675
      %v696 = vunpack.c.l.b16 %v676
      %v697 = vunpack.c.l.b16 %v677
      %v698 = vpack.c.b16 %v695, %v694
      %v699 = vpack.c.b16 %v697, %v696
      %v703 = vsel %vm427, %v686, 0
      %v706 = vsel %vm427, %v687, 0
      %v709 = vsel %vm427, %v688, 0
      %v712 = vsel %vm427, %v689, 0
      %714 = vmatprep.subr.bf16.mxu0 0
      %715 = vmatpush1.bf16.msra.mxu0 %v698
      %716 = vmatprep.subr.bf16.mxu0 0
      %717 = vmatpush1.bf16.msra.mxu0 %v699
      %718 = vmatprep.subr.bf16.mxu0 0
      %719 = vmatpush1.bf16.msra.mxu0 0
      %720 = vmatprep.subr.bf16.mxu0 0
      %721 = vmatpush1.bf16.msra.mxu0 0
      %722 = vmatprep.subr.bf16.mxu0 0
      %723 = vmatpush1.bf16.msra.mxu0 0
      %724 = vmatprep.subr.bf16.mxu0 0
      %725 = vmatpush1.bf16.msra.mxu0 0
      %726 = vmatprep.subr.bf16.mxu0 0
      %727 = vmatpush1.bf16.msra.mxu0 0
      %728 = vmatprep.subr.bf16.mxu0 0
      %729 = vmatpush1.bf16.msra.mxu0 0
      %730 = vmatprep.subr.bf16.mxu0 0
      %731 = vmatpush1.bf16.msra.mxu0 0
      %732 = vmatprep.subr.bf16.mxu0 0
      %733 = vmatpush1.bf16.msra.mxu0 0
      %734 = vmatprep.subr.bf16.mxu0 0
      %735 = vmatpush1.bf16.msra.mxu0 0
      %736 = vmatprep.subr.bf16.mxu0 0
      %737 = vmatpush1.bf16.msra.mxu0 0
      %738 = vmatprep.subr.bf16.mxu0 0
      %739 = vmatpush1.bf16.msra.mxu0 0
      %740 = vmatprep.subr.bf16.mxu0 0
      %741 = vmatpush1.bf16.msra.mxu0 0
      %742 = vmatprep.subr.bf16.mxu0 0
      %743 = vmatpush1.bf16.msra.mxu0 0
      %744 = vmatprep.subr.bf16.mxu0 0
      %745 = vmatpush1.bf16.msra.mxu0 0
      %746 = vmatprep.mubr.bf16.mxu0 0
      %747 = vmatmul.mubr.bf16.gmra.mrb[0].mxu0 %v703
      %v748 = vpop.f32.mrb[0].mxu0
      %v749 = vadd.f32 0.0, %v748
      %v750 = vpop.f32.mrb[0].mxu0
      %v751 = vpop.f32.mrb[0].mxu0
      %v752 = vadd.f32 0.0, %v751
      %v753 = vpop.f32.mrb[0].mxu0
      %754 = vmatprep.mubr.bf16.mxu0 0
      %755 = vmatmul.mubr.bf16.gmra.mrb[0].mxu0 %v706
      %v756 = vpop.f32.mrb[0].mxu0
      %v757 = vadd.f32 0.0, %v756
      %v758 = vpop.f32.mrb[0].mxu0
      %v759 = vpop.f32.mrb[0].mxu0
      %v760 = vadd.f32 0.0, %v759
      %v761 = vpop.f32.mrb[0].mxu0
      %762 = vmatprep.mubr.bf16.mxu0 0
      %763 = vmatmul.mubr.bf16.gmra.mrb[0].mxu0 %v709
      %v764 = vpop.f32.mrb[0].mxu0
      %v765 = vadd.f32 0.0, %v764
      %v766 = vpop.f32.mrb[0].mxu0
      %v767 = vpop.f32.mrb[0].mxu0
      %v768 = vadd.f32 0.0, %v767
      %v769 = vpop.f32.mrb[0].mxu0
      %770 = vmatprep.mubr.bf16.mxu0 0
      %771 = vmatmul.mubr.bf16.gmra.mrb[0].mxu0 %v712
      %v772 = vpop.f32.mrb[0].mxu0
      %v773 = vadd.f32 0.0, %v772
      %v774 = vpop.f32.mrb[0].mxu0
      %v775 = vpop.f32.mrb[0].mxu0
      %v776 = vadd.f32 0.0, %v775
      %v777 = vpop.f32.mrb[0].mxu0
      %778 = vdwg.mxu0
      %v779 = vadd.f32 %v584, %v749
      %v780 = vadd.f32 %v587, %v752
      %v781 = vadd.f32 %v592, %v757
      %v782 = vadd.f32 %v595, %v760
      %v783 = vadd.f32 %v600, %v765
      %v784 = vadd.f32 %v603, %v768
      %v785 = vadd.f32 %v608, %v773
      %v786 = vadd.f32 %v611, %v776
      %s787 = scalar_lea.vmem %s251, 8
      %v788 = vld [vmem:[%s787] sm:$0xf]
      %v789 = vld [vmem:[%s787 + $0x8] sm:$0xf]
      %v790 = vld [vmem:[%s787 + $0x10] sm:$0xf]
      %v791 = vld [vmem:[%s787 + $0x18] sm:$0xf]
      %v792 = vld [vmem:[%s787 + $0x20] sm:$0xf]
      %v793 = vld [vmem:[%s787 + $0x28] sm:$0xf]
      %v794 = vld [vmem:[%s787 + $0x30] sm:$0xf]
      %v795 = vld [vmem:[%s787 + $0x38] sm:$0xf]
      %s796 = scalar_lea.vmem %s1, 48
      %v797 = vld [vmem:[%s796] sm:$0xf]
      %v798 = vld [vmem:[%s796 + $0x4] sm:$0xf]
      %v799 = vld [vmem:[%s796 + $0x8] sm:$0xf]
      %v800 = vld [vmem:[%s796 + $0xc] sm:$0xf]
      %v809 = vunpack.c.l.b16 %v788
      %v810 = vunpack.c.l.b16 %v789
      %v811 = vunpack.c.l.b16 %v790
      %v812 = vunpack.c.l.b16 %v791
      %v813 = vunpack.c.l.b16 %v792
      %v814 = vunpack.c.l.b16 %v793
      %v815 = vunpack.c.l.b16 %v794
      %v816 = vunpack.c.l.b16 %v795
      %v817 = vpack.c.b16 %v810, %v809
      %v818 = vpack.c.b16 %v812, %v811
      %v819 = vpack.c.b16 %v814, %v813
      %v820 = vpack.c.b16 %v816, %v815
      %v825 = vunpack.c.l.b16 %v797
      %v826 = vunpack.c.l.b16 %v798
      %v827 = vunpack.c.l.b16 %v799
      %v828 = vunpack.c.l.b16 %v800
      %v829 = vpack.c.b16 %v826, %v825
      %v830 = vpack.c.b16 %v828, %v827
      %v834 = vsel %vm427, %v817, 0
      %v837 = vsel %vm427, %v818, 0
      %v840 = vsel %vm427, %v819, 0
      %v843 = vsel %vm427, %v820, 0
      %845 = vmatprep.subr.bf16.mxu0 0
      %846 = vmatpush1.bf16.msra.mxu0 %v829
      %847 = vmatprep.subr.bf16.mxu0 0
      %848 = vmatpush1.bf16.msra.mxu0 %v830
      %849 = vmatprep.subr.bf16.mxu0 0
      %850 = vmatpush1.bf16.msra.mxu0 0
      %851 = vmatprep.subr.bf16.mxu0 0
      %852 = vmatpush1.bf16.msra.mxu0 0
      %853 = vmatprep.subr.bf16.mxu0 0
      %854 = vmatpush1.bf16.msra.mxu0 0
      %855 = vmatprep.subr.bf16.mxu0 0
      %856 = vmatpush1.bf16.msra.mxu0 0
      %857 = vmatprep.subr.bf16.mxu0 0
      %858 = vmatpush1.bf16.msra.mxu0 0
      %859 = vmatprep.subr.bf16.mxu0 0
      %860 = vmatpush1.bf16.msra.mxu0 0
      %861 = vmatprep.subr.bf16.mxu0 0
      %862 = vmatpush1.bf16.msra.mxu0 0
      %863 = vmatprep.subr.bf16.mxu0 0
      %864 = vmatpush1.bf16.msra.mxu0 0
      %865 = vmatprep.subr.bf16.mxu0 0
      %866 = vmatpush1.bf16.msra.mxu0 0
      %867 = vmatprep.subr.bf16.mxu0 0
      %868 = vmatpush1.bf16.msra.mxu0 0
      %869 = vmatprep.subr.bf16.mxu0 0
      %870 = vmatpush1.bf16.msra.mxu0 0
      %871 = vmatprep.subr.bf16.mxu0 0
      %872 = vmatpush1.bf16.msra.mxu0 0
      %873 = vmatprep.subr.bf16.mxu0 0
      %874 = vmatpush1.bf16.msra.mxu0 0
      %875 = vmatprep.subr.bf16.mxu0 0
      %876 = vmatpush1.bf16.msra.mxu0 0
      %877 = vmatprep.mubr.bf16.mxu0 0
      %878 = vmatmul.mubr.bf16.gmra.mrb[0].mxu0 %v834
      %v879 = vpop.f32.mrb[0].mxu0
      %v880 = vadd.f32 0.0, %v879
      %v881 = vpop.f32.mrb[0].mxu0
      %v882 = vpop.f32.mrb[0].mxu0
      %v883 = vadd.f32 0.0, %v882
      %v884 = vpop.f32.mrb[0].mxu0
      %885 = vmatprep.mubr.bf16.mxu0 0
      %886 = vmatmul.mubr.bf16.gmra.mrb[0].mxu0 %v837
      %v887 = vpop.f32.mrb[0].mxu0
      %v888 = vadd.f32 0.0, %v887
      %v889 = vpop.f32.mrb[0].mxu0
      %v890 = vpop.f32.mrb[0].mxu0
      %v891 = vadd.f32 0.0, %v890
      %v892 = vpop.f32.mrb[0].mxu0
      %893 = vmatprep.mubr.bf16.mxu0 0
      %894 = vmatmul.mubr.bf16.gmra.mrb[0].mxu0 %v840
      %v895 = vpop.f32.mrb[0].mxu0
      %v896 = vadd.f32 0.0, %v895
      %v897 = vpop.f32.mrb[0].mxu0
      %v898 = vpop.f32.mrb[0].mxu0
      %v899 = vadd.f32 0.0, %v898
      %v900 = vpop.f32.mrb[0].mxu0
      %901 = vmatprep.mubr.bf16.mxu0 0
      %902 = vmatmul.mubr.bf16.gmra.mrb[0].mxu0 %v843
      %v903 = vpop.f32.mrb[0].mxu0
      %v904 = vadd.f32 0.0, %v903
      %v905 = vpop.f32.mrb[0].mxu0
      %v906 = vpop.f32.mrb[0].mxu0
      %v907 = vadd.f32 0.0, %v906
      %v908 = vpop.f32.mrb[0].mxu0
      %909 = vdwg.mxu0
      %v910 = vadd.f32 %v779, %v880
      %v911 = vadd.f32 %v780, %v883
      %v912 = vadd.f32 %v781, %v888
      %v913 = vadd.f32 %v782, %v891
      %v914 = vadd.f32 %v783, %v896
      %v915 = vadd.f32 %v784, %v899
      %v916 = vadd.f32 %v785, %v904
      %v917 = vadd.f32 %v786, %v907
      %v918 = vld [vmem:[%s787] sm:$0xf]
      %v919 = vld [vmem:[%s787 + $0x4] sm:$0x1]
      %v920 = vld [vmem:[%s787 + $0x8] sm:$0xf]
      %v921 = vld [vmem:[%s787 + $0xc] sm:$0x1]
      %v922 = vld [vmem:[%s787 + $0x10] sm:$0xf]
      %v923 = vld [vmem:[%s787 + $0x14] sm:$0x1]
      %v924 = vld [vmem:[%s787 + $0x18] sm:$0xf]
      %v925 = vld [vmem:[%s787 + $0x1c] sm:$0x1]
      %v926 = vld [vmem:[%s787 + $0x20] sm:$0xf]
      %v927 = vld [vmem:[%s787 + $0x24] sm:$0x1]
      %v928 = vld [vmem:[%s787 + $0x28] sm:$0xf]
      %v929 = vld [vmem:[%s787 + $0x2c] sm:$0x1]
      %v930 = vld [vmem:[%s787 + $0x30] sm:$0xf]
      %v931 = vld [vmem:[%s787 + $0x34] sm:$0x1]
      %v932 = vld [vmem:[%s787 + $0x38] sm:$0xf]
      %v933 = vld [vmem:[%s787 + $0x3c] sm:$0x1]
      %v935 = vshrl.u32 %v918, 16
      %v937 = vrot.slane %v935, 4
      %v938 = vshll.u32 %v918, 16
      %v940 = vrot.slane %v938, 5
      %v941 = vor.u32 %v937, %v940
      %v942 = vrot.slane %v941, 4
      %v944 = vshll.u32 %v919, 16
      %v946 = vrot.slane %v944, 5
      %v947 = vsel %vm285, %v942, %v946
      %v949 = vshrl.u32 %v920, 16
      %v951 = vrot.slane %v949, 4
      %v952 = vshll.u32 %v920, 16
      %v954 = vrot.slane %v952, 5
      %v955 = vor.u32 %v951, %v954
      %v956 = vrot.slane %v955, 4
      %v958 = vshll.u32 %v921, 16
      %v960 = vrot.slane %v958, 5
      %v961 = vsel %vm285, %v956, %v960
      %v963 = vshrl.u32 %v922, 16
      %v965 = vrot.slane %v963, 4
      %v966 = vshll.u32 %v922, 16
      %v968 = vrot.slane %v966, 5
      %v969 = vor.u32 %v965, %v968
      %v970 = vrot.slane %v969, 4
      %v972 = vshll.u32 %v923, 16
      %v974 = vrot.slane %v972, 5
      %v975 = vsel %vm285, %v970, %v974
      %v977 = vshrl.u32 %v924, 16
      %v979 = vrot.slane %v977, 4
      %v980 = vshll.u32 %v924, 16
      %v982 = vrot.slane %v980, 5
      %v983 = vor.u32 %v979, %v982
      %v984 = vrot.slane %v983, 4
      %v986 = vshll.u32 %v925, 16
      %v988 = vrot.slane %v986, 5
      %v989 = vsel %vm285, %v984, %v988
      %v991 = vshrl.u32 %v926, 16
      %v993 = vrot.slane %v991, 4
      %v994 = vshll.u32 %v926, 16
      %v996 = vrot.slane %v994, 5
      %v997 = vor.u32 %v993, %v996
      %v998 = vrot.slane %v997, 4
      %v1000 = vshll.u32 %v927, 16
      %v1002 = vrot.slane %v1000, 5
      %v1003 = vsel %vm285, %v998, %v1002
      %v1005 = vshrl.u32 %v928, 16
      %v1007 = vrot.slane %v1005, 4
      %v1008 = vshll.u32 %v928, 16
      %v1010 = vrot.slane %v1008, 5
      %v1011 = vor.u32 %v1007, %v1010
      %v1012 = vrot.slane %v1011, 4
      %v1014 = vshll.u32 %v929, 16
      %v1016 = vrot.slane %v1014, 5
      %v1017 = vsel %vm285, %v1012, %v1016
      %v1019 = vshrl.u32 %v930, 16
      %v1021 = vrot.slane %v1019, 4
      %v1022 = vshll.u32 %v930, 16
      %v1024 = vrot.slane %v1022, 5
      %v1025 = vor.u32 %v1021, %v1024
      %v1026 = vrot.slane %v1025, 4
      %v1028 = vshll.u32 %v931, 16
      %v1030 = vrot.slane %v1028, 5
      %v1031 = vsel %vm285, %v1026, %v1030
      %v1033 = vshrl.u32 %v932, 16
      %v1035 = vrot.slane %v1033, 4
      %v1036 = vshll.u32 %v932, 16
      %v1038 = vrot.slane %v1036, 5
      %v1039 = vor.u32 %v1035, %v1038
      %v1040 = vrot.slane %v1039, 4
      %v1042 = vshll.u32 %v933, 16
      %v1044 = vrot.slane %v1042, 5
      %v1045 = vsel %vm285, %v1040, %v1044
      %s1046 = scalar_lea.vmem %s1, 64
      %v1047 = vld [vmem:[%s1046] sm:$0xf]
      %v1048 = vld [vmem:[%s1046 + $0x4] sm:$0xf]
      %v1049 = vld [vmem:[%s1046 + $0x8] sm:$0xf]
      %v1050 = vld [vmem:[%s1046 + $0xc] sm:$0xf]
      %v1051 = vunpack.c.l.b16 %v947
      %v1052 = vunpack.c.l.b16 %v961
      %v1053 = vunpack.c.l.b16 %v975
      %v1054 = vunpack.c.l.b16 %v989
      %v1055 = vunpack.c.l.b16 %v1003
      %v1056 = vunpack.c.l.b16 %v1017
      %v1057 = vunpack.c.l.b16 %v1031
      %v1058 = vunpack.c.l.b16 %v1045
      %v1059 = vpack.c.b16 %v1052, %v1051
      %v1060 = vpack.c.b16 %v1054, %v1053
      %v1061 = vpack.c.b16 %v1056, %v1055
      %v1062 = vpack.c.b16 %v1058, %v1057
      %v1067 = vunpack.c.l.b16 %v1047
      %v1068 = vunpack.c.l.b16 %v1048
      %v1069 = vunpack.c.l.b16 %v1049
      %v1070 = vunpack.c.l.b16 %v1050
      %v1071 = vpack.c.b16 %v1068, %v1067
      %v1072 = vpack.c.b16 %v1070, %v1069
      %v1076 = vsel %vm427, %v1059, 0
      %v1079 = vsel %vm427, %v1060, 0
      %v1082 = vsel %vm427, %v1061, 0
      %v1085 = vsel %vm427, %v1062, 0
      %1087 = vmatprep.subr.bf16.mxu0 0
      %1088 = vmatpush1.bf16.msra.mxu0 %v1071
      %1089 = vmatprep.subr.bf16.mxu0 0
      %1090 = vmatpush1.bf16.msra.mxu0 %v1072
      %1091 = vmatprep.subr.bf16.mxu0 0
      %1092 = vmatpush1.bf16.msra.mxu0 0
      %1093 = vmatprep.subr.bf16.mxu0 0
      %1094 = vmatpush1.bf16.msra.mxu0 0
      %1095 = vmatprep.subr.bf16.mxu0 0
      %1096 = vmatpush1.bf16.msra.mxu0 0
      %1097 = vmatprep.subr.bf16.mxu0 0
      %1098 = vmatpush1.bf16.msra.mxu0 0
      %1099 = vmatprep.subr.bf16.mxu0 0
      %1100 = vmatpush1.bf16.msra.mxu0 0
      %1101 = vmatprep.subr.bf16.mxu0 0
      %1102 = vmatpush1.bf16.msra.mxu0 0
      %1103 = vmatprep.subr.bf16.mxu0 0
      %1104 = vmatpush1.bf16.msra.mxu0 0
      %1105 = vmatprep.subr.bf16.mxu0 0
      %1106 = vmatpush1.bf16.msra.mxu0 0
      %1107 = vmatprep.subr.bf16.mxu0 0
      %1108 = vmatpush1.bf16.msra.mxu0 0
      %1109 = vmatprep.subr.bf16.mxu0 0
      %1110 = vmatpush1.bf16.msra.mxu0 0
      %1111 = vmatprep.subr.bf16.mxu0 0
      %1112 = vmatpush1.bf16.msra.mxu0 0
      %1113 = vmatprep.subr.bf16.mxu0 0
      %1114 = vmatpush1.bf16.msra.mxu0 0
      %1115 = vmatprep.subr.bf16.mxu0 0
      %1116 = vmatpush1.bf16.msra.mxu0 0
      %1117 = vmatprep.subr.bf16.mxu0 0
      %1118 = vmatpush1.bf16.msra.mxu0 0
      %1119 = vmatprep.mubr.bf16.mxu0 0
      %1120 = vmatmul.mubr.bf16.gmra.mrb[0].mxu0 %v1076
      %v1121 = vpop.f32.mrb[0].mxu0
      %v1122 = vadd.f32 0.0, %v1121
      %v1123 = vpop.f32.mrb[0].mxu0
      %v1124 = vpop.f32.mrb[0].mxu0
      %v1125 = vadd.f32 0.0, %v1124
      %v1126 = vpop.f32.mrb[0].mxu0
      %1127 = vmatprep.mubr.bf16.mxu0 0
      %1128 = vmatmul.mubr.bf16.gmra.mrb[0].mxu0 %v1079
      %v1129 = vpop.f32.mrb[0].mxu0
      %v1130 = vadd.f32 0.0, %v1129
      %v1131 = vpop.f32.mrb[0].mxu0
      %v1132 = vpop.f32.mrb[0].mxu0
      %v1133 = vadd.f32 0.0, %v1132
      %v1134 = vpop.f32.mrb[0].mxu0
      %1135 = vmatprep.mubr.bf16.mxu0 0
      %1136 = vmatmul.mubr.bf16.gmra.mrb[0].mxu0 %v1082
      %v1137 = vpop.f32.mrb[0].mxu0
      %v1138 = vadd.f32 0.0, %v1137
      %v1139 = vpop.f32.mrb[0].mxu0
      %v1140 = vpop.f32.mrb[0].mxu0
      %v1141 = vadd.f32 0.0, %v1140
      %v1142 = vpop.f32.mrb[0].mxu0
      %1143 = vmatprep.mubr.bf16.mxu0 0
      %1144 = vmatmul.mubr.bf16.gmra.mrb[0].mxu0 %v1085
      %v1145 = vpop.f32.mrb[0].mxu0
      %v1146 = vadd.f32 0.0, %v1145
      %v1147 = vpop.f32.mrb[0].mxu0
      %v1148 = vpop.f32.mrb[0].mxu0
      %v1149 = vadd.f32 0.0, %v1148
      %v1150 = vpop.f32.mrb[0].mxu0
      %1151 = vdwg.mxu0
      %v1152 = vadd.f32 %v910, %v1122
      %v1153 = vadd.f32 %v911, %v1125
      %v1154 = vadd.f32 %v912, %v1130
      %v1155 = vadd.f32 %v913, %v1133
      %v1156 = vadd.f32 %v914, %v1138
      %v1157 = vadd.f32 %v915, %v1141
      %v1158 = vadd.f32 %v916, %v1146
      %v1159 = vadd.f32 %v917, %v1149
      %v1160 = vld [vmem:[%s787] sm:$0xe]
      %v1161 = vld [vmem:[%s787 + $0x8] sm:$0xe]
      %v1162 = vld [vmem:[%s787 + $0x10] sm:$0xe]
      %v1163 = vld [vmem:[%s787 + $0x18] sm:$0xe]
      %v1164 = vld [vmem:[%s787 + $0x20] sm:$0xe]
      %v1165 = vld [vmem:[%s787 + $0x28] sm:$0xe]
      %v1166 = vld [vmem:[%s787 + $0x30] sm:$0xe]
      %v1167 = vld [vmem:[%s787 + $0x38] sm:$0xe]
      %v1184 = vrot.slane %v1160, 5
      %v1185 = vrot.slane %v1184, 4
      %v1186 = vrot.slane %v919, 5
      %v1187 = vsel %vm640, %v1185, %v1186
      %v1188 = vrot.slane %v1161, 5
      %v1189 = vrot.slane %v1188, 4
      %v1190 = vrot.slane %v921, 5
      %v1191 = vsel %vm640, %v1189, %v1190
      %v1192 = vrot.slane %v1162, 5
      %v1193 = vrot.slane %v1192, 4
      %v1194 = vrot.slane %v923, 5
      %v1195 = vsel %vm640, %v1193, %v1194
      %v1196 = vrot.slane %v1163, 5
      %v1197 = vrot.slane %v1196, 4
      %v1198 = vrot.slane %v925, 5
      %v1199 = vsel %vm640, %v1197, %v1198
      %v1200 = vrot.slane %v1164, 5
      %v1201 = vrot.slane %v1200, 4
      %v1202 = vrot.slane %v927, 5
      %v1203 = vsel %vm640, %v1201, %v1202
      %v1204 = vrot.slane %v1165, 5
      %v1205 = vrot.slane %v1204, 4
      %v1206 = vrot.slane %v929, 5
      %v1207 = vsel %vm640, %v1205, %v1206
      %v1208 = vrot.slane %v1166, 5
      %v1209 = vrot.slane %v1208, 4
      %v1210 = vrot.slane %v931, 5
      %v1211 = vsel %vm640, %v1209, %v1210
      %v1212 = vrot.slane %v1167, 5
      %v1213 = vrot.slane %v1212, 4
      %v1214 = vrot.slane %v933, 5
      %v1215 = vsel %vm640, %v1213, %v1214
      %s1216 = scalar_lea.vmem %s1, 80
      %v1217 = vld [vmem:[%s1216] sm:$0xf]
      %v1218 = vld [vmem:[%s1216 + $0x4] sm:$0xf]
      %v1219 = vld [vmem:[%s1216 + $0x8] sm:$0xf]
      %v1220 = vld [vmem:[%s1216 + $0xc] sm:$0xf]
      %v1221 = vunpack.c.l.b16 %v1187
      %v1222 = vunpack.c.l.b16 %v1191
      %v1223 = vunpack.c.l.b16 %v1195
      %v1224 = vunpack.c.l.b16 %v1199
      %v1225 = vunpack.c.l.b16 %v1203
      %v1226 = vunpack.c.l.b16 %v1207
      %v1227 = vunpack.c.l.b16 %v1211
      %v1228 = vunpack.c.l.b16 %v1215
      %v1229 = vpack.c.b16 %v1222, %v1221
      %v1230 = vpack.c.b16 %v1224, %v1223
      %v1231 = vpack.c.b16 %v1226, %v1225
      %v1232 = vpack.c.b16 %v1228, %v1227
      %v1237 = vunpack.c.l.b16 %v1217
      %v1238 = vunpack.c.l.b16 %v1218
      %v1239 = vunpack.c.l.b16 %v1219
      %v1240 = vunpack.c.l.b16 %v1220
      %v1241 = vpack.c.b16 %v1238, %v1237
      %v1242 = vpack.c.b16 %v1240, %v1239
      %v1246 = vsel %vm427, %v1229, 0
      %v1249 = vsel %vm427, %v1230, 0
      %v1252 = vsel %vm427, %v1231, 0
      %v1255 = vsel %vm427, %v1232, 0
      %1257 = vmatprep.subr.bf16.mxu0 0
      %1258 = vmatpush1.bf16.msra.mxu0 %v1241
      %1259 = vmatprep.subr.bf16.mxu0 0
      %1260 = vmatpush1.bf16.msra.mxu0 %v1242
      %1261 = vmatprep.subr.bf16.mxu0 0
      %1262 = vmatpush1.bf16.msra.mxu0 0
      %1263 = vmatprep.subr.bf16.mxu0 0
      %1264 = vmatpush1.bf16.msra.mxu0 0
      %1265 = vmatprep.subr.bf16.mxu0 0
      %1266 = vmatpush1.bf16.msra.mxu0 0
      %1267 = vmatprep.subr.bf16.mxu0 0
      %1268 = vmatpush1.bf16.msra.mxu0 0
      %1269 = vmatprep.subr.bf16.mxu0 0
      %1270 = vmatpush1.bf16.msra.mxu0 0
      %1271 = vmatprep.subr.bf16.mxu0 0
      %1272 = vmatpush1.bf16.msra.mxu0 0
      %1273 = vmatprep.subr.bf16.mxu0 0
      %1274 = vmatpush1.bf16.msra.mxu0 0
      %1275 = vmatprep.subr.bf16.mxu0 0
      %1276 = vmatpush1.bf16.msra.mxu0 0
      %1277 = vmatprep.subr.bf16.mxu0 0
      %1278 = vmatpush1.bf16.msra.mxu0 0
      %1279 = vmatprep.subr.bf16.mxu0 0
      %1280 = vmatpush1.bf16.msra.mxu0 0
      %1281 = vmatprep.subr.bf16.mxu0 0
      %1282 = vmatpush1.bf16.msra.mxu0 0
      %1283 = vmatprep.subr.bf16.mxu0 0
      %1284 = vmatpush1.bf16.msra.mxu0 0
      %1285 = vmatprep.subr.bf16.mxu0 0
      %1286 = vmatpush1.bf16.msra.mxu0 0
      %1287 = vmatprep.subr.bf16.mxu0 0
      %1288 = vmatpush1.bf16.msra.mxu0 0
      %1289 = vmatprep.mubr.bf16.mxu0 0
      %1290 = vmatmul.mubr.bf16.gmra.mrb[0].mxu0 %v1246
      %v1291 = vpop.f32.mrb[0].mxu0
      %v1292 = vadd.f32 0.0, %v1291
      %v1293 = vpop.f32.mrb[0].mxu0
      %v1294 = vpop.f32.mrb[0].mxu0
      %v1295 = vadd.f32 0.0, %v1294
      %v1296 = vpop.f32.mrb[0].mxu0
      %1297 = vmatprep.mubr.bf16.mxu0 0
      %1298 = vmatmul.mubr.bf16.gmra.mrb[0].mxu0 %v1249
      %v1299 = vpop.f32.mrb[0].mxu0
      %v1300 = vadd.f32 0.0, %v1299
      %v1301 = vpop.f32.mrb[0].mxu0
      %v1302 = vpop.f32.mrb[0].mxu0
      %v1303 = vadd.f32 0.0, %v1302
      %v1304 = vpop.f32.mrb[0].mxu0
      %1305 = vmatprep.mubr.bf16.mxu0 0
      %1306 = vmatmul.mubr.bf16.gmra.mrb[0].mxu0 %v1252
      %v1307 = vpop.f32.mrb[0].mxu0
      %v1308 = vadd.f32 0.0, %v1307
      %v1309 = vpop.f32.mrb[0].mxu0
      %v1310 = vpop.f32.mrb[0].mxu0
      %v1311 = vadd.f32 0.0, %v1310
      %v1312 = vpop.f32.mrb[0].mxu0
      %1313 = vmatprep.mubr.bf16.mxu0 0
      %1314 = vmatmul.mubr.bf16.gmra.mrb[0].mxu0 %v1255
      %v1315 = vpop.f32.mrb[0].mxu0
      %v1316 = vadd.f32 0.0, %v1315
      %v1317 = vpop.f32.mrb[0].mxu0
      %v1318 = vpop.f32.mrb[0].mxu0
      %v1319 = vadd.f32 0.0, %v1318
      %v1320 = vpop.f32.mrb[0].mxu0
      %1321 = vdwg.mxu0
      %v1322 = vadd.f32 %v1152, %v1292
      %v1323 = vadd.f32 %v1153, %v1295
      %v1324 = vadd.f32 %v1154, %v1300
      %v1325 = vadd.f32 %v1155, %v1303
      %v1326 = vadd.f32 %v1156, %v1308
      %v1327 = vadd.f32 %v1157, %v1311
      %v1328 = vadd.f32 %v1158, %v1316
      %v1329 = vadd.f32 %v1159, %v1319
      %s1330 = scalar_lea.vmem %s251, 16
      %v1331 = vld [vmem:[%s1330] sm:$0xf]
      %v1332 = vld [vmem:[%s1330 + $0x8] sm:$0xf]
      %v1333 = vld [vmem:[%s1330 + $0x10] sm:$0xf]
      %v1334 = vld [vmem:[%s1330 + $0x18] sm:$0xf]
      %v1335 = vld [vmem:[%s1330 + $0x20] sm:$0xf]
      %v1336 = vld [vmem:[%s1330 + $0x28] sm:$0xf]
      %v1337 = vld [vmem:[%s1330 + $0x30] sm:$0xf]
      %v1338 = vld [vmem:[%s1330 + $0x38] sm:$0xf]
      %s1339 = scalar_lea.vmem %s1, 96
      %v1340 = vld [vmem:[%s1339] sm:$0xf]
      %v1341 = vld [vmem:[%s1339 + $0x4] sm:$0xf]
      %v1342 = vld [vmem:[%s1339 + $0x8] sm:$0xf]
      %v1343 = vld [vmem:[%s1339 + $0xc] sm:$0xf]
      %v1352 = vunpack.c.l.b16 %v1331
      %v1353 = vunpack.c.l.b16 %v1332
      %v1354 = vunpack.c.l.b16 %v1333
      %v1355 = vunpack.c.l.b16 %v1334
      %v1356 = vunpack.c.l.b16 %v1335
      %v1357 = vunpack.c.l.b16 %v1336
      %v1358 = vunpack.c.l.b16 %v1337
      %v1359 = vunpack.c.l.b16 %v1338
      %v1360 = vpack.c.b16 %v1353, %v1352
      %v1361 = vpack.c.b16 %v1355, %v1354
      %v1362 = vpack.c.b16 %v1357, %v1356
      %v1363 = vpack.c.b16 %v1359, %v1358
      %v1368 = vunpack.c.l.b16 %v1340
      %v1369 = vunpack.c.l.b16 %v1341
      %v1370 = vunpack.c.l.b16 %v1342
      %v1371 = vunpack.c.l.b16 %v1343
      %v1372 = vpack.c.b16 %v1369, %v1368
      %v1373 = vpack.c.b16 %v1371, %v1370
      %v1377 = vsel %vm427, %v1360, 0
      %v1380 = vsel %vm427, %v1361, 0
      %v1383 = vsel %vm427, %v1362, 0
      %v1386 = vsel %vm427, %v1363, 0
      %1388 = vmatprep.subr.bf16.mxu0 0
      %1389 = vmatpush1.bf16.msra.mxu0 %v1372
      %1390 = vmatprep.subr.bf16.mxu0 0
      %1391 = vmatpush1.bf16.msra.mxu0 %v1373
      %1392 = vmatprep.subr.bf16.mxu0 0
      %1393 = vmatpush1.bf16.msra.mxu0 0
      %1394 = vmatprep.subr.bf16.mxu0 0
      %1395 = vmatpush1.bf16.msra.mxu0 0
      %1396 = vmatprep.subr.bf16.mxu0 0
      %1397 = vmatpush1.bf16.msra.mxu0 0
      %1398 = vmatprep.subr.bf16.mxu0 0
      %1399 = vmatpush1.bf16.msra.mxu0 0
      %1400 = vmatprep.subr.bf16.mxu0 0
      %1401 = vmatpush1.bf16.msra.mxu0 0
      %1402 = vmatprep.subr.bf16.mxu0 0
      %1403 = vmatpush1.bf16.msra.mxu0 0
      %1404 = vmatprep.subr.bf16.mxu0 0
      %1405 = vmatpush1.bf16.msra.mxu0 0
      %1406 = vmatprep.subr.bf16.mxu0 0
      %1407 = vmatpush1.bf16.msra.mxu0 0
      %1408 = vmatprep.subr.bf16.mxu0 0
      %1409 = vmatpush1.bf16.msra.mxu0 0
      %1410 = vmatprep.subr.bf16.mxu0 0
      %1411 = vmatpush1.bf16.msra.mxu0 0
      %1412 = vmatprep.subr.bf16.mxu0 0
      %1413 = vmatpush1.bf16.msra.mxu0 0
      %1414 = vmatprep.subr.bf16.mxu0 0
      %1415 = vmatpush1.bf16.msra.mxu0 0
      %1416 = vmatprep.subr.bf16.mxu0 0
      %1417 = vmatpush1.bf16.msra.mxu0 0
      %1418 = vmatprep.subr.bf16.mxu0 0
      %1419 = vmatpush1.bf16.msra.mxu0 0
      %1420 = vmatprep.mubr.bf16.mxu0 0
      %1421 = vmatmul.mubr.bf16.gmra.mrb[0].mxu0 %v1377
      %v1422 = vpop.f32.mrb[0].mxu0
      %v1423 = vadd.f32 0.0, %v1422
      %v1424 = vpop.f32.mrb[0].mxu0
      %v1425 = vpop.f32.mrb[0].mxu0
      %v1426 = vadd.f32 0.0, %v1425
      %v1427 = vpop.f32.mrb[0].mxu0
      %1428 = vmatprep.mubr.bf16.mxu0 0
      %1429 = vmatmul.mubr.bf16.gmra.mrb[0].mxu0 %v1380
      %v1430 = vpop.f32.mrb[0].mxu0
      %v1431 = vadd.f32 0.0, %v1430
      %v1432 = vpop.f32.mrb[0].mxu0
      %v1433 = vpop.f32.mrb[0].mxu0
      %v1434 = vadd.f32 0.0, %v1433
      %v1435 = vpop.f32.mrb[0].mxu0
      %1436 = vmatprep.mubr.bf16.mxu0 0
      %1437 = vmatmul.mubr.bf16.gmra.mrb[0].mxu0 %v1383
      %v1438 = vpop.f32.mrb[0].mxu0
      %v1439 = vadd.f32 0.0, %v1438
      %v1440 = vpop.f32.mrb[0].mxu0
      %v1441 = vpop.f32.mrb[0].mxu0
      %v1442 = vadd.f32 0.0, %v1441
      %v1443 = vpop.f32.mrb[0].mxu0
      %1444 = vmatprep.mubr.bf16.mxu0 0
      %1445 = vmatmul.mubr.bf16.gmra.mrb[0].mxu0 %v1386
      %v1446 = vpop.f32.mrb[0].mxu0
      %v1447 = vadd.f32 0.0, %v1446
      %v1448 = vpop.f32.mrb[0].mxu0
      %v1449 = vpop.f32.mrb[0].mxu0
      %v1450 = vadd.f32 0.0, %v1449
      %v1451 = vpop.f32.mrb[0].mxu0
      %1452 = vdwg.mxu0
      %v1453 = vadd.f32 %v1322, %v1423
      %v1454 = vadd.f32 %v1323, %v1426
      %v1455 = vadd.f32 %v1324, %v1431
      %v1456 = vadd.f32 %v1325, %v1434
      %v1457 = vadd.f32 %v1326, %v1439
      %v1458 = vadd.f32 %v1327, %v1442
      %v1459 = vadd.f32 %v1328, %v1447
      %v1460 = vadd.f32 %v1329, %v1450
      %v1461 = vld [vmem:[%s1330] sm:$0xf]
      %v1462 = vld [vmem:[%s1330 + $0x4] sm:$0x1]
      %v1463 = vld [vmem:[%s1330 + $0x8] sm:$0xf]
      %v1464 = vld [vmem:[%s1330 + $0xc] sm:$0x1]
      %v1465 = vld [vmem:[%s1330 + $0x10] sm:$0xf]
      %v1466 = vld [vmem:[%s1330 + $0x14] sm:$0x1]
      %v1467 = vld [vmem:[%s1330 + $0x18] sm:$0xf]
      %v1468 = vld [vmem:[%s1330 + $0x1c] sm:$0x1]
      %v1469 = vld [vmem:[%s1330 + $0x20] sm:$0xf]
      %v1470 = vld [vmem:[%s1330 + $0x24] sm:$0x1]
      %v1471 = vld [vmem:[%s1330 + $0x28] sm:$0xf]
      %v1472 = vld [vmem:[%s1330 + $0x2c] sm:$0x1]
      %v1473 = vld [vmem:[%s1330 + $0x30] sm:$0xf]
      %v1474 = vld [vmem:[%s1330 + $0x34] sm:$0x1]
      %v1475 = vld [vmem:[%s1330 + $0x38] sm:$0xf]
      %v1476 = vld [vmem:[%s1330 + $0x3c] sm:$0x1]
      %v1478 = vshrl.u32 %v1461, 16
      %v1480 = vrot.slane %v1478, 4
      %v1481 = vshll.u32 %v1461, 16
      %v1483 = vrot.slane %v1481, 5
      %v1484 = vor.u32 %v1480, %v1483
      %v1485 = vrot.slane %v1484, 4
      %v1487 = vshll.u32 %v1462, 16
      %v1489 = vrot.slane %v1487, 5
      %v1490 = vsel %vm285, %v1485, %v1489
      %v1492 = vshrl.u32 %v1463, 16
      %v1494 = vrot.slane %v1492, 4
      %v1495 = vshll.u32 %v1463, 16
      %v1497 = vrot.slane %v1495, 5
      %v1498 = vor.u32 %v1494, %v1497
      %v1499 = vrot.slane %v1498, 4
      %v1501 = vshll.u32 %v1464, 16
      %v1503 = vrot.slane %v1501, 5
      %v1504 = vsel %vm285, %v1499, %v1503
      %v1506 = vshrl.u32 %v1465, 16
      %v1508 = vrot.slane %v1506, 4
      %v1509 = vshll.u32 %v1465, 16
      %v1511 = vrot.slane %v1509, 5
      %v1512 = vor.u32 %v1508, %v1511
      %v1513 = vrot.slane %v1512, 4
      %v1515 = vshll.u32 %v1466, 16
      %v1517 = vrot.slane %v1515, 5
      %v1518 = vsel %vm285, %v1513, %v1517
      %v1520 = vshrl.u32 %v1467, 16
      %v1522 = vrot.slane %v1520, 4
      %v1523 = vshll.u32 %v1467, 16
      %v1525 = vrot.slane %v1523, 5
      %v1526 = vor.u32 %v1522, %v1525
      %v1527 = vrot.slane %v1526, 4
      %v1529 = vshll.u32 %v1468, 16
      %v1531 = vrot.slane %v1529, 5
      %v1532 = vsel %vm285, %v1527, %v1531
      %v1534 = vshrl.u32 %v1469, 16
      %v1536 = vrot.slane %v1534, 4
      %v1537 = vshll.u32 %v1469, 16
      %v1539 = vrot.slane %v1537, 5
      %v1540 = vor.u32 %v1536, %v1539
      %v1541 = vrot.slane %v1540, 4
      %v1543 = vshll.u32 %v1470, 16
      %v1545 = vrot.slane %v1543, 5
      %v1546 = vsel %vm285, %v1541, %v1545
      %v1548 = vshrl.u32 %v1471, 16
      %v1550 = vrot.slane %v1548, 4
      %v1551 = vshll.u32 %v1471, 16
      %v1553 = vrot.slane %v1551, 5
      %v1554 = vor.u32 %v1550, %v1553
      %v1555 = vrot.slane %v1554, 4
      %v1557 = vshll.u32 %v1472, 16
      %v1559 = vrot.slane %v1557, 5
      %v1560 = vsel %vm285, %v1555, %v1559
      %v1562 = vshrl.u32 %v1473, 16
      %v1564 = vrot.slane %v1562, 4
      %v1565 = vshll.u32 %v1473, 16
      %v1567 = vrot.slane %v1565, 5
      %v1568 = vor.u32 %v1564, %v1567
      %v1569 = vrot.slane %v1568, 4
      %v1571 = vshll.u32 %v1474, 16
      %v1573 = vrot.slane %v1571, 5
      %v1574 = vsel %vm285, %v1569, %v1573
      %v1576 = vshrl.u32 %v1475, 16
      %v1578 = vrot.slane %v1576, 4
      %v1579 = vshll.u32 %v1475, 16
      %v1581 = vrot.slane %v1579, 5
      %v1582 = vor.u32 %v1578, %v1581
      %v1583 = vrot.slane %v1582, 4
      %v1585 = vshll.u32 %v1476, 16
      %v1587 = vrot.slane %v1585, 5
      %v1588 = vsel %vm285, %v1583, %v1587
      %s1589 = scalar_lea.vmem %s1, 112
      %v1590 = vld [vmem:[%s1589] sm:$0xf]
      %v1591 = vld [vmem:[%s1589 + $0x4] sm:$0xf]
      %v1592 = vld [vmem:[%s1589 + $0x8] sm:$0xf]
      %v1593 = vld [vmem:[%s1589 + $0xc] sm:$0xf]
      %v1594 = vunpack.c.l.b16 %v1490
      %v1595 = vunpack.c.l.b16 %v1504
      %v1596 = vunpack.c.l.b16 %v1518
      %v1597 = vunpack.c.l.b16 %v1532
      %v1598 = vunpack.c.l.b16 %v1546
      %v1599 = vunpack.c.l.b16 %v1560
      %v1600 = vunpack.c.l.b16 %v1574
      %v1601 = vunpack.c.l.b16 %v1588
      %v1602 = vpack.c.b16 %v1595, %v1594
      %v1603 = vpack.c.b16 %v1597, %v1596
      %v1604 = vpack.c.b16 %v1599, %v1598
      %v1605 = vpack.c.b16 %v1601, %v1600
      %v1610 = vunpack.c.l.b16 %v1590
      %v1611 = vunpack.c.l.b16 %v1591
      %v1612 = vunpack.c.l.b16 %v1592
      %v1613 = vunpack.c.l.b16 %v1593
      %v1614 = vpack.c.b16 %v1611, %v1610
      %v1615 = vpack.c.b16 %v1613, %v1612
      %v1619 = vsel %vm427, %v1602, 0
      %v1622 = vsel %vm427, %v1603, 0
      %v1625 = vsel %vm427, %v1604, 0
      %v1628 = vsel %vm427, %v1605, 0
      %1630 = vmatprep.subr.bf16.mxu0 0
      %1631 = vmatpush1.bf16.msra.mxu0 %v1614
      %1632 = vmatprep.subr.bf16.mxu0 0
      %1633 = vmatpush1.bf16.msra.mxu0 %v1615
      %1634 = vmatprep.subr.bf16.mxu0 0
      %1635 = vmatpush1.bf16.msra.mxu0 0
      %1636 = vmatprep.subr.bf16.mxu0 0
      %1637 = vmatpush1.bf16.msra.mxu0 0
      %1638 = vmatprep.subr.bf16.mxu0 0
      %1639 = vmatpush1.bf16.msra.mxu0 0
      %1640 = vmatprep.subr.bf16.mxu0 0
      %1641 = vmatpush1.bf16.msra.mxu0 0
      %1642 = vmatprep.subr.bf16.mxu0 0
      %1643 = vmatpush1.bf16.msra.mxu0 0
      %1644 = vmatprep.subr.bf16.mxu0 0
      %1645 = vmatpush1.bf16.msra.mxu0 0
      %1646 = vmatprep.subr.bf16.mxu0 0
      %1647 = vmatpush1.bf16.msra.mxu0 0
      %1648 = vmatprep.subr.bf16.mxu0 0
      %1649 = vmatpush1.bf16.msra.mxu0 0
      %1650 = vmatprep.subr.bf16.mxu0 0
      %1651 = vmatpush1.bf16.msra.mxu0 0
      %1652 = vmatprep.subr.bf16.mxu0 0
      %1653 = vmatpush1.bf16.msra.mxu0 0
      %1654 = vmatprep.subr.bf16.mxu0 0
      %1655 = vmatpush1.bf16.msra.mxu0 0
      %1656 = vmatprep.subr.bf16.mxu0 0
      %1657 = vmatpush1.bf16.msra.mxu0 0
      %1658 = vmatprep.subr.bf16.mxu0 0
      %1659 = vmatpush1.bf16.msra.mxu0 0
      %1660 = vmatprep.subr.bf16.mxu0 0
      %1661 = vmatpush1.bf16.msra.mxu0 0
      %1662 = vmatprep.mubr.bf16.mxu0 0
      %1663 = vmatmul.mubr.bf16.gmra.mrb[0].mxu0 %v1619
      %v1664 = vpop.f32.mrb[0].mxu0
      %v1665 = vadd.f32 0.0, %v1664
      %v1666 = vpop.f32.mrb[0].mxu0
      %v1667 = vpop.f32.mrb[0].mxu0
      %v1668 = vadd.f32 0.0, %v1667
      %v1669 = vpop.f32.mrb[0].mxu0
      %1670 = vmatprep.mubr.bf16.mxu0 0
      %1671 = vmatmul.mubr.bf16.gmra.mrb[0].mxu0 %v1622
      %v1672 = vpop.f32.mrb[0].mxu0
      %v1673 = vadd.f32 0.0, %v1672
      %v1674 = vpop.f32.mrb[0].mxu0
      %v1675 = vpop.f32.mrb[0].mxu0
      %v1676 = vadd.f32 0.0, %v1675
      %v1677 = vpop.f32.mrb[0].mxu0
      %1678 = vmatprep.mubr.bf16.mxu0 0
      %1679 = vmatmul.mubr.bf16.gmra.mrb[0].mxu0 %v1625
      %v1680 = vpop.f32.mrb[0].mxu0
      %v1681 = vadd.f32 0.0, %v1680
      %v1682 = vpop.f32.mrb[0].mxu0
      %v1683 = vpop.f32.mrb[0].mxu0
      %v1684 = vadd.f32 0.0, %v1683
      %v1685 = vpop.f32.mrb[0].mxu0
      %1686 = vmatprep.mubr.bf16.mxu0 0
      %1687 = vmatmul.mubr.bf16.gmra.mrb[0].mxu0 %v1628
      %v1688 = vpop.f32.mrb[0].mxu0
      %v1689 = vadd.f32 0.0, %v1688
      %v1690 = vpop.f32.mrb[0].mxu0
      %v1691 = vpop.f32.mrb[0].mxu0
      %v1692 = vadd.f32 0.0, %v1691
      %v1693 = vpop.f32.mrb[0].mxu0
      %1694 = vdwg.mxu0
      %v1695 = vadd.f32 %v1453, %v1665
      %v1696 = vadd.f32 %v1454, %v1668
      %v1697 = vadd.f32 %v1455, %v1673
      %v1698 = vadd.f32 %v1456, %v1676
      %v1699 = vadd.f32 %v1457, %v1681
      %v1700 = vadd.f32 %v1458, %v1684
      %v1701 = vadd.f32 %v1459, %v1689
      %v1702 = vadd.f32 %v1460, %v1692
      %v1703 = vld [vmem:[%s1330] sm:$0xe]
      %v1704 = vld [vmem:[%s1330 + $0x8] sm:$0xe]
      %v1705 = vld [vmem:[%s1330 + $0x10] sm:$0xe]
      %v1706 = vld [vmem:[%s1330 + $0x18] sm:$0xe]
      %v1707 = vld [vmem:[%s1330 + $0x20] sm:$0xe]
      %v1708 = vld [vmem:[%s1330 + $0x28] sm:$0xe]
      %v1709 = vld [vmem:[%s1330 + $0x30] sm:$0xe]
      %v1710 = vld [vmem:[%s1330 + $0x38] sm:$0xe]
      %v1727 = vrot.slane %v1703, 5
      %v1728 = vrot.slane %v1727, 4
      %v1729 = vrot.slane %v1462, 5
      %v1730 = vsel %vm640, %v1728, %v1729
      %v1731 = vrot.slane %v1704, 5
      %v1732 = vrot.slane %v1731, 4
      %v1733 = vrot.slane %v1464, 5
      %v1734 = vsel %vm640, %v1732, %v1733
      %v1735 = vrot.slane %v1705, 5
      %v1736 = vrot.slane %v1735, 4
      %v1737 = vrot.slane %v1466, 5
      %v1738 = vsel %vm640, %v1736, %v1737
      %v1739 = vrot.slane %v1706, 5
      %v1740 = vrot.slane %v1739, 4
      %v1741 = vrot.slane %v1468, 5
      %v1742 = vsel %vm640, %v1740, %v1741
      %v1743 = vrot.slane %v1707, 5
      %v1744 = vrot.slane %v1743, 4
      %v1745 = vrot.slane %v1470, 5
      %v1746 = vsel %vm640, %v1744, %v1745
      %v1747 = vrot.slane %v1708, 5
      %v1748 = vrot.slane %v1747, 4
      %v1749 = vrot.slane %v1472, 5
      %v1750 = vsel %vm640, %v1748, %v1749
      %v1751 = vrot.slane %v1709, 5
      %v1752 = vrot.slane %v1751, 4
      %v1753 = vrot.slane %v1474, 5
      %v1754 = vsel %vm640, %v1752, %v1753
      %v1755 = vrot.slane %v1710, 5
      %v1756 = vrot.slane %v1755, 4
      %v1757 = vrot.slane %v1476, 5
      %v1758 = vsel %vm640, %v1756, %v1757
      %s1759 = scalar_lea.vmem %s1, 128
      %v1760 = vld [vmem:[%s1759] sm:$0xf]
      %v1761 = vld [vmem:[%s1759 + $0x4] sm:$0xf]
      %v1762 = vld [vmem:[%s1759 + $0x8] sm:$0xf]
      %v1763 = vld [vmem:[%s1759 + $0xc] sm:$0xf]
      %v1764 = vunpack.c.l.b16 %v1730
      %v1765 = vunpack.c.l.b16 %v1734
      %v1766 = vunpack.c.l.b16 %v1738
      %v1767 = vunpack.c.l.b16 %v1742
      %v1768 = vunpack.c.l.b16 %v1746
      %v1769 = vunpack.c.l.b16 %v1750
      %v1770 = vunpack.c.l.b16 %v1754
      %v1771 = vunpack.c.l.b16 %v1758
      %v1772 = vpack.c.b16 %v1765, %v1764
      %v1773 = vpack.c.b16 %v1767, %v1766
      %v1774 = vpack.c.b16 %v1769, %v1768
      %v1775 = vpack.c.b16 %v1771, %v1770
      %v1780 = vunpack.c.l.b16 %v1760
      %v1781 = vunpack.c.l.b16 %v1761
      %v1782 = vunpack.c.l.b16 %v1762
      %v1783 = vunpack.c.l.b16 %v1763
      %v1784 = vpack.c.b16 %v1781, %v1780
      %v1785 = vpack.c.b16 %v1783, %v1782
      %v1789 = vsel %vm427, %v1772, 0
      %v1792 = vsel %vm427, %v1773, 0
      %v1795 = vsel %vm427, %v1774, 0
      %v1798 = vsel %vm427, %v1775, 0
      %1800 = vmatprep.subr.bf16.mxu0 0
      %1801 = vmatpush1.bf16.msra.mxu0 %v1784
      %1802 = vmatprep.subr.bf16.mxu0 0
      %1803 = vmatpush1.bf16.msra.mxu0 %v1785
      %1804 = vmatprep.subr.bf16.mxu0 0
      %1805 = vmatpush1.bf16.msra.mxu0 0
      %1806 = vmatprep.subr.bf16.mxu0 0
      %1807 = vmatpush1.bf16.msra.mxu0 0
      %1808 = vmatprep.subr.bf16.mxu0 0
      %1809 = vmatpush1.bf16.msra.mxu0 0
      %1810 = vmatprep.subr.bf16.mxu0 0
      %1811 = vmatpush1.bf16.msra.mxu0 0
      %1812 = vmatprep.subr.bf16.mxu0 0
      %1813 = vmatpush1.bf16.msra.mxu0 0
      %1814 = vmatprep.subr.bf16.mxu0 0
      %1815 = vmatpush1.bf16.msra.mxu0 0
      %1816 = vmatprep.subr.bf16.mxu0 0
      %1817 = vmatpush1.bf16.msra.mxu0 0
      %1818 = vmatprep.subr.bf16.mxu0 0
      %1819 = vmatpush1.bf16.msra.mxu0 0
      %1820 = vmatprep.subr.bf16.mxu0 0
      %1821 = vmatpush1.bf16.msra.mxu0 0
      %1822 = vmatprep.subr.bf16.mxu0 0
      %1823 = vmatpush1.bf16.msra.mxu0 0
      %1824 = vmatprep.subr.bf16.mxu0 0
      %1825 = vmatpush1.bf16.msra.mxu0 0
      %1826 = vmatprep.subr.bf16.mxu0 0
      %1827 = vmatpush1.bf16.msra.mxu0 0
      %1828 = vmatprep.subr.bf16.mxu0 0
      %1829 = vmatpush1.bf16.msra.mxu0 0
      %1830 = vmatprep.subr.bf16.mxu0 0
      %1831 = vmatpush1.bf16.msra.mxu0 0
      %1832 = vmatprep.mubr.bf16.mxu0 0
      %1833 = vmatmul.mubr.bf16.gmra.mrb[0].mxu0 %v1789
      %v1834 = vpop.f32.mrb[0].mxu0
      %v1835 = vadd.f32 0.0, %v1834
      %v1836 = vpop.f32.mrb[0].mxu0
      %v1837 = vpop.f32.mrb[0].mxu0
      %v1838 = vadd.f32 0.0, %v1837
      %v1839 = vpop.f32.mrb[0].mxu0
      %1840 = vmatprep.mubr.bf16.mxu0 0
      %1841 = vmatmul.mubr.bf16.gmra.mrb[0].mxu0 %v1792
      %v1842 = vpop.f32.mrb[0].mxu0
      %v1843 = vadd.f32 0.0, %v1842
      %v1844 = vpop.f32.mrb[0].mxu0
      %v1845 = vpop.f32.mrb[0].mxu0
      %v1846 = vadd.f32 0.0, %v1845
      %v1847 = vpop.f32.mrb[0].mxu0
      %1848 = vmatprep.mubr.bf16.mxu0 0
      %1849 = vmatmul.mubr.bf16.gmra.mrb[0].mxu0 %v1795
      %v1850 = vpop.f32.mrb[0].mxu0
      %v1851 = vadd.f32 0.0, %v1850
      %v1852 = vpop.f32.mrb[0].mxu0
      %v1853 = vpop.f32.mrb[0].mxu0
      %v1854 = vadd.f32 0.0, %v1853
      %v1855 = vpop.f32.mrb[0].mxu0
      %1856 = vmatprep.mubr.bf16.mxu0 0
      %1857 = vmatmul.mubr.bf16.gmra.mrb[0].mxu0 %v1798
      %v1858 = vpop.f32.mrb[0].mxu0
      %v1859 = vadd.f32 0.0, %v1858
      %v1860 = vpop.f32.mrb[0].mxu0
      %v1861 = vpop.f32.mrb[0].mxu0
      %v1862 = vadd.f32 0.0, %v1861
      %v1863 = vpop.f32.mrb[0].mxu0
      %1864 = vdwg.mxu0
      %v1865 = vadd.f32 %v1695, %v1835
      %v1866 = vadd.f32 %v1696, %v1838
      %v1867 = vadd.f32 %v1697, %v1843
      %v1868 = vadd.f32 %v1698, %v1846
      %v1869 = vadd.f32 %v1699, %v1851
      %v1870 = vadd.f32 %v1700, %v1854
      %v1871 = vadd.f32 %v1701, %v1859
      %v1872 = vadd.f32 %v1702, %v1862
      %v1873 = vld [vmem:[%s2] sm:$0x1]
      %v1875 = vlaneseq
      %v1876 = vshrl.u32 %v1875, 7
      %v1877 = vsub.s32 0, %v1876
      %v1878 = vrot.slane %v1873, %v1877
      %v1880 = vadd.f32 %v1865, %v1878
      %v1881 = vadd.f32 %v1866, %v1878
      %v1882 = vadd.f32 %v1867, %v1878
      %v1883 = vadd.f32 %v1868, %v1878
      %v1884 = vadd.f32 %v1869, %v1878
      %v1885 = vadd.f32 %v1870, %v1878
      %v1886 = vadd.f32 %v1871, %v1878
      %v1887 = vadd.f32 %v1872, %v1878
      %v1888 = vmul.f32 %v1880, %v1880
      %v1889 = vmul.f32 %v1881, %v1881
      %v1890 = vmul.f32 %v1882, %v1882
      %v1891 = vmul.f32 %v1883, %v1883
      %v1892 = vmul.f32 %v1884, %v1884
      %v1893 = vmul.f32 %v1885, %v1885
      %v1894 = vmul.f32 %v1886, %v1886
      %v1895 = vmul.f32 %v1887, %v1887
      %v1896 = vpack.c.bf16 %v1889, %v1888
      %v1897 = vpack.c.bf16 %v1891, %v1890
      %v1898 = vpack.c.bf16 %v1893, %v1892
      %v1899 = vpack.c.bf16 %v1895, %v1894
      %v1900 = vld [vmem:[%s3] sm:$0xf]
      %v1901 = vld [vmem:[%s3 + $0x4] sm:$0xf]
      %v1902 = vld [vmem:[%s3 + $0x8] sm:$0xf]
      %v1903 = vld [vmem:[%s3 + $0xc] sm:$0xf]
      %v1904 = vld [vmem:[%s3 + $0x10] sm:$0xf]
      %v1905 = vld [vmem:[%s3 + $0x14] sm:$0xf]
      %v1906 = vld [vmem:[%s3 + $0x18] sm:$0xf]
      %v1907 = vld [vmem:[%s3 + $0x1c] sm:$0xf]
      %v1908 = vld [vmem:[%s3 + $0x20] sm:$0xf]
      %v1909 = vld [vmem:[%s3 + $0x24] sm:$0xf]
      %v1910 = vld [vmem:[%s3 + $0x28] sm:$0xf]
      %v1911 = vld [vmem:[%s3 + $0x2c] sm:$0xf]
      %v1912 = vld [vmem:[%s3 + $0x30] sm:$0xf]
      %v1913 = vld [vmem:[%s3 + $0x34] sm:$0xf]
      %v1914 = vld [vmem:[%s3 + $0x38] sm:$0xf]
      %v1915 = vld [vmem:[%s3 + $0x3c] sm:$0xf]
      %v1916 = vld [vmem:[%s4] sm:$0x1]
      %v1918 = vlaneseq
      %v1919 = vshrl.u32 %v1918, 7
      %v1920 = vsub.s32 0, %v1919
      %v1921 = vrot.slane %v1916, %v1920
      %v1939 = vunpack.c.l.b16 %v1900
      %v1940 = vunpack.c.l.b16 %v1901
      %v1941 = vunpack.c.l.b16 %v1902
      %v1942 = vunpack.c.l.b16 %v1903
      %v1943 = vunpack.c.l.b16 %v1904
      %v1944 = vunpack.c.l.b16 %v1905
      %v1945 = vunpack.c.l.b16 %v1906
      %v1946 = vunpack.c.l.b16 %v1907
      %v1947 = vunpack.c.l.b16 %v1908
      %v1948 = vunpack.c.l.b16 %v1909
      %v1949 = vunpack.c.l.b16 %v1910
      %v1950 = vunpack.c.l.b16 %v1911
      %v1951 = vunpack.c.l.b16 %v1912
      %v1952 = vunpack.c.l.b16 %v1913
      %v1953 = vunpack.c.l.b16 %v1914
      %v1954 = vunpack.c.l.b16 %v1915
      %v1955 = vpack.c.b16 %v1940, %v1939
      %v1956 = vpack.c.b16 %v1942, %v1941
      %v1957 = vpack.c.b16 %v1944, %v1943
      %v1958 = vpack.c.b16 %v1946, %v1945
      %v1959 = vpack.c.b16 %v1948, %v1947
      %v1960 = vpack.c.b16 %v1950, %v1949
      %v1961 = vpack.c.b16 %v1952, %v1951
      %v1962 = vpack.c.b16 %v1954, %v1953
      %1971 = vmatprep.subr.bf16.mxu0 0
      %1972 = vmatpush1.bf16.msra.mxu0 %v1955
      %1973 = vmatprep.subr.bf16.mxu0 0
      %1974 = vmatpush1.bf16.msra.mxu0 %v1956
      %1975 = vmatprep.subr.bf16.mxu0 0
      %1976 = vmatpush1.bf16.msra.mxu0 %v1957
      %1977 = vmatprep.subr.bf16.mxu0 0
      %1978 = vmatpush1.bf16.msra.mxu0 %v1958
      %1979 = vmatprep.subr.bf16.mxu0 0
      %1980 = vmatpush1.bf16.msra.mxu0 %v1959
      %1981 = vmatprep.subr.bf16.mxu0 0
      %1982 = vmatpush1.bf16.msra.mxu0 %v1960
      %1983 = vmatprep.subr.bf16.mxu0 0
      %1984 = vmatpush1.bf16.msra.mxu0 %v1961
      %1985 = vmatprep.subr.bf16.mxu0 0
      %1986 = vmatpush1.bf16.msra.mxu0 %v1962
      %1987 = vmatprep.subr.bf16.mxu0 0
      %1988 = vmatpush1.bf16.msra.mxu0 0
      %1989 = vmatprep.subr.bf16.mxu0 0
      %1990 = vmatpush1.bf16.msra.mxu0 0
      %1991 = vmatprep.subr.bf16.mxu0 0
      %1992 = vmatpush1.bf16.msra.mxu0 0
      %1993 = vmatprep.subr.bf16.mxu0 0
      %1994 = vmatpush1.bf16.msra.mxu0 0
      %1995 = vmatprep.subr.bf16.mxu0 0
      %1996 = vmatpush1.bf16.msra.mxu0 0
      %1997 = vmatprep.subr.bf16.mxu0 0
      %1998 = vmatpush1.bf16.msra.mxu0 0
      %1999 = vmatprep.subr.bf16.mxu0 0
      %2000 = vmatpush1.bf16.msra.mxu0 0
      %2001 = vmatprep.subr.bf16.mxu0 0
      %2002 = vmatpush1.bf16.msra.mxu0 0
      %2003 = vmatprep.mubr.bf16.mxu0 0
      %2004 = vmatmul.mubr.bf16.gmra.mrb[0].mxu0 %v1896
      %v2005 = vpop.f32.mrb[0].mxu0
      %v2006 = vadd.f32 %v1921, %v2005
      %v2007 = vpop.f32.mrb[0].mxu0
      %v2008 = vpop.f32.mrb[0].mxu0
      %v2009 = vadd.f32 %v1921, %v2008
      %v2010 = vpop.f32.mrb[0].mxu0
      %2011 = vmatprep.mubr.bf16.mxu0 0
      %2012 = vmatmul.mubr.bf16.gmra.mrb[0].mxu0 %v1897
      %v2013 = vpop.f32.mrb[0].mxu0
      %v2014 = vadd.f32 %v1921, %v2013
      %v2015 = vpop.f32.mrb[0].mxu0
      %v2016 = vpop.f32.mrb[0].mxu0
      %v2017 = vadd.f32 %v1921, %v2016
      %v2018 = vpop.f32.mrb[0].mxu0
      %2019 = vmatprep.mubr.bf16.mxu0 0
      %2020 = vmatmul.mubr.bf16.gmra.mrb[0].mxu0 %v1898
      %v2021 = vpop.f32.mrb[0].mxu0
      %v2022 = vadd.f32 %v1921, %v2021
      %v2023 = vpop.f32.mrb[0].mxu0
      %v2024 = vpop.f32.mrb[0].mxu0
      %v2025 = vadd.f32 %v1921, %v2024
      %v2026 = vpop.f32.mrb[0].mxu0
      %2027 = vmatprep.mubr.bf16.mxu0 0
      %2028 = vmatmul.mubr.bf16.gmra.mrb[0].mxu0 %v1899
      %v2029 = vpop.f32.mrb[0].mxu0
      %v2030 = vadd.f32 %v1921, %v2029
      %v2031 = vpop.f32.mrb[0].mxu0
      %v2032 = vpop.f32.mrb[0].mxu0
      %v2033 = vadd.f32 %v1921, %v2032
      %v2034 = vpop.f32.mrb[0].mxu0
      %2035 = vdwg.mxu0
      %v2036 = vmax.f32 %v2006, 1e-06
      %v2037 = vmax.f32 %v2009, 1e-06
      %v2038 = vmax.f32 %v2014, 1e-06
      %v2039 = vmax.f32 %v2017, 1e-06
      %v2040 = vmax.f32 %v2022, 1e-06
      %v2041 = vmax.f32 %v2025, 1e-06
      %v2042 = vmax.f32 %v2030, 1e-06
      %v2043 = vmax.f32 %v2033, 1e-06
      %v2044 = vrsqrt.pop %v2036
      %v2045 = vrsqrt.pop %v2037
      %v2046 = vrsqrt.pop %v2038
      %v2047 = vrsqrt.pop %v2039
      %v2048 = vrsqrt.pop %v2040
      %v2049 = vrsqrt.pop %v2041
      %v2050 = vrsqrt.pop %v2042
      %v2051 = vrsqrt.pop %v2043
      %v2052 = vmul.f32 %v1880, %v2044
      %v2053 = vmul.f32 %v1881, %v2045
      %v2054 = vmul.f32 %v1882, %v2046
      %v2055 = vmul.f32 %v1883, %v2047
      %v2056 = vmul.f32 %v1884, %v2048
      %v2057 = vmul.f32 %v1885, %v2049
      %v2058 = vmul.f32 %v1886, %v2050
      %v2059 = vmul.f32 %v1887, %v2051
      %v2060 = vpack.c.bf16 %v2052, %v2052
      %v2061 = vpack.c.bf16 %v2053, %v2053
      %v2062 = vpack.c.bf16 %v2054, %v2054
      %v2063 = vpack.c.bf16 %v2055, %v2055
      %v2064 = vpack.c.bf16 %v2056, %v2056
      %v2065 = vpack.c.bf16 %v2057, %v2057
      %v2066 = vpack.c.bf16 %v2058, %v2058
      %v2067 = vpack.c.bf16 %v2059, %v2059
      %2068 = vst [vmem:[%s260] sm:$0xf] %v2060
      %2069 = vst [vmem:[%s260 + $0x4] sm:$0xf] %v2061
      %2070 = vst [vmem:[%s260 + $0x8] sm:$0xf] %v2062
      %2071 = vst [vmem:[%s260 + $0xc] sm:$0xf] %v2063
      %2072 = vst [vmem:[%s260 + $0x10] sm:$0xf] %v2064
      %2073 = vst [vmem:[%s260 + $0x14] sm:$0xf] %v2065
      %2074 = vst [vmem:[%s260 + $0x18] sm:$0xf] %v2066
      %2075 = vst [vmem:[%s260 + $0x1c] sm:$0xf] %v2067
      %s2076 = smul.u32 8, %s21
      %p2077 = scmp.lt.s32.totalorder %s20, 1
      %s2078 = scalar_select %p2077, %s20, 1
      %p2079 = scmp.lt.s32.totalorder %s2076, 7
      %s2080 = scalar_select %p2079, %s2076, 7
      %s2081 = smul.addr %s2078, 8
      %s2082 = sadd.s32 %s2080, %s2081
      %s2083 = smul.addr %s2082, 4
      %s2084 = scalar_lea.vmem %s5, %s2083
      // Predicated region
      $region41: #{encoder_forward.5} parent=39 // pred_check
        %p2085 = pneg %p160
      $region42: #{encoder_forward.5} parent=39 // pred_check_branch
        %2087 = sbr.rel (%p2085) target = $region44
      $region43: #{encoder_forward.5} parent=39 // pred_region
        %s2088 = smul.u32 8, %s21
      $region44: #{encoder_forward.5} parent=39 // pred_fallthru
        _
    $region40: #{encoder_forward.5} parent=5 // pred_fallthru
      _
    %p2089 = scmp.le.s32.totalorder 2, %s11
    // Predicated region
    $region45: #{encoder_forward.5} parent=5 // pred_check
      %p2090 = pneg %p2089
    $region46: #{encoder_forward.5} parent=5 // pred_check_branch
      %2092 = sbr.rel (%p2090) target = $region48
    $region47: #{encoder_forward.5} parent=5 // pred_region
      %s2093 = ssub.s32 %s11, 2
      // Predicated region
      $region49: #{encoder_forward.5} parent=47 // pred_check
        %p2094 = pneg %p166
      $region50: #{encoder_forward.5} parent=47 // pred_check_branch
        %2096 = sbr.rel (%p2094) target = $region52
      $region51: #{encoder_forward.5} parent=47 // pred_region
        %s2097 = smul.u32 8, %s23
        %p2098 = scmp.lt.s32.totalorder %s22, 1
        %s2099 = scalar_select %p2098, %s22, 1
        %p2100 = scmp.lt.s32.totalorder %s2097, 7
        %s2101 = scalar_select %p2100, %s2097, 7
        %s2102 = smul.addr %s2099, 8
        %s2103 = sadd.s32 %s2101, %s2102
        %s2104 = smul.addr %s2103, 4
        %s2105 = scalar_lea.vmem %s5, %s2104
      $region52: #{encoder_forward.5} parent=47 // pred_fallthru
        _
    $region48: #{encoder_forward.5} parent=5 // pred_fallthru
      _
  $region6: #{encoder_forward.5} parent=0 // loop_footer
    %s15 = sadd.s32 1, %s11
  $region7: #{encoder_forward.5} parent=0 // loop_footer_branch
    %10 = sbr.rel target = $region3
  $region8: #{encoder_forward.5} parent=0 // loop_exit
    _

// kernel: encoder_forward.6
$region0: #{encoder_forward.6}
  #allocation0 [shape = 'u32[]', space=smem, size = 0x4, offset = 0x4, fixed_abs, tag = 'smem constant byte address 0x4 - core index']
  #allocation1 [shape = 'u32[144,128]{1,0:T(1,128)}', space=vmem, size = 0x12000, scoped, tag = 'internal scratch']
  %s0 = inlined_call_operand.vmem [shape: bf16[2,1,6,10,32], index: 0, kind: input, shape index: {}]
  %s1 = inlined_call_operand.vmem [shape: bf16[3,3,32,128], index: 1, kind: input, shape index: {}]
  %s2 = inlined_call_operand.vmem [shape: f32[1,128], index: 2, kind: input, shape index: {}]
  %s3 = inlined_call_operand.vmem [shape: bf16[128,128], index: 3, kind: input, shape index: {}]
  %s4 = inlined_call_operand.vmem [shape: f32[1,128], index: 4, kind: input, shape index: {}]
  %s5 = inlined_call_operand.vmem [shape: bf16[2,4,8,128], index: 5, kind: output, shape index: {}]
  %s6 = sld [smem:[#allocation0]]
  $region53: #{encoder_forward.6} parent=0
    _
  %s8 = ssub.s32 1, %s6
  %s9 = scalar_select 0, %s8, %s6
  loop: start=0, step=1, limit=4
  $region2: #{encoder_forward.6} parent=0 // loop_pre_header
    _
  $region3: #{encoder_forward.6} parent=0 // loop_header
    %s11 = sphi 0, %s15
    %p12 = scmp.ge.s32.totalorder %s11, 4
    %s18 = sphi 0, %s30
    %s19 = sphi 0, %s26
    %s20 = sphi 0, %s18
    %s21 = sphi 0, %s19
    %s22 = sphi 0, %s20
    %s23 = sphi 0, %s21
    %s35 = sphi 0, %s37
    %s38 = sphi 0, %s35
    %s39 = sphi 0, %s38
    %s55 = sphi 0, %s39
    %s59 = sphi 0, %s59
    %s61 = sphi 0, %s59
    %s62 = sphi 0, %s61
    %s76 = sphi 0, %s62
    %s80 = sphi 0, %s80
    %s82 = sphi 0, %s80
    %s83 = sphi 0, %s82
    %s97 = sphi 0, %s83
    %s101 = sphi 0, %s101
    %s103 = sphi 0, %s101
    %s104 = sphi 0, %s103
    %s118 = sphi 0, %s104
    %s122 = sphi 0, %s122
    %s124 = sphi 0, %s122
    %s125 = sphi 0, %s124
    %s139 = sphi 0, %s125
    %s147 = sphi 0, %s149
    %s150 = sphi 0, %s147
    %s151 = sphi 0, %s150
    %s167 = sphi 0, %s151
  $region4: #{encoder_forward.6} parent=0 // loop_header_branch
    %14 = sbr.rel (%p12) target = $region8
  $region5: #{encoder_forward.6} parent=0 // loop_body
    %s16 = ssub.s32 %s11, 1
    %s17 = ssub.s32 %s11, 2
    %s24 = sadd.s32 1, %s19
    %p25 = scmp.ge.s32.totalorder %s24, 1
    %s26 = scalar_select %p25, 0, %s24
    %s27 = sadd.s32 1, %s18
    %s28 = scalar_select %p25, %s27, %s18
    %p29 = scmp.ge.s32.totalorder %s28, 2
    %s30 = scalar_select %p29, 0, %s28
    %s31 = ssub.s32 %s18, %s30
    %s32 = ssub.s32 %s19, %s26
    %s33 = sor.u32 %s31, %s32
    %p34 = scmp.eq.s32.totalorder %s33, 0
    %s36 = sadd.s32 %s35, 1
    %s37 = scalar_select %p34, %s35, %s36
    %p40 = pneg %p34
    %p41 = scmp.eq.s32.totalorder %s11, 1
    %p42 = por %p40, %p41
    %p43 = scmp.ne.s32.totalorder %s35, %s38
    %p44 = scmp.eq.s32.totalorder %s11, 0
    %p45 = por %p43, %p44
    %p46 = scmp.ne.s32.totalorder %s35, %s38
    %p47 = scmp.eq.s32.totalorder %s16, 1
    %p48 = por %p46, %p47
    %p49 = scmp.ne.s32.totalorder %s38, %s39
    %p50 = scmp.eq.s32.totalorder %s16, 0
    %p51 = por %p49, %p50
    %p52 = scmp.ne.s32.totalorder %s38, %s39
    %p53 = scmp.eq.s32.totalorder %s17, 1
    %p54 = por %p52, %p53
    %p56 = scmp.ne.s32.totalorder %s39, %s55
    %p57 = scmp.eq.s32.totalorder %s17, 0
    %p58 = por %p56, %p57
    %s60 = sadd.s32 %s59, 1
    %p63 = scmp.eq.s32.totalorder %s11, 1
    %p64 = scmp.ne.s32.totalorder %s59, %s61
    %p65 = scmp.eq.s32.totalorder %s11, 0
    %p66 = por %p64, %p65
    %p67 = scmp.ne.s32.totalorder %s59, %s61
    %p68 = scmp.eq.s32.totalorder %s16, 1
    %p69 = por %p67, %p68
    %p70 = scmp.ne.s32.totalorder %s61, %s62
    %p71 = scmp.eq.s32.totalorder %s16, 0
    %p72 = por %p70, %p71
    %p73 = scmp.ne.s32.totalorder %s61, %s62
    %p74 = scmp.eq.s32.totalorder %s17, 1
    %p75 = por %p73, %p74
    %p77 = scmp.ne.s32.totalorder %s62, %s76
    %p78 = scmp.eq.s32.totalorder %s17, 0
    %p79 = por %p77, %p78
    %s81 = sadd.s32 %s80, 1
    %p84 = scmp.eq.s32.totalorder %s11, 1
    %p85 = scmp.ne.s32.totalorder %s80, %s82
    %p86 = scmp.eq.s32.totalorder %s11, 0
    %p87 = por %p85, %p86
    %p88 = scmp.ne.s32.totalorder %s80, %s82
    %p89 = scmp.eq.s32.totalorder %s16, 1
    %p90 = por %p88, %p89
    %p91 = scmp.ne.s32.totalorder %s82, %s83
    %p92 = scmp.eq.s32.totalorder %s16, 0
    %p93 = por %p91, %p92
    %p94 = scmp.ne.s32.totalorder %s82, %s83
    %p95 = scmp.eq.s32.totalorder %s17, 1
    %p96 = por %p94, %p95
    %p98 = scmp.ne.s32.totalorder %s83, %s97
    %p99 = scmp.eq.s32.totalorder %s17, 0
    %p100 = por %p98, %p99
    %s102 = sadd.s32 %s101, 1
    %p105 = scmp.eq.s32.totalorder %s11, 1
    %p106 = scmp.ne.s32.totalorder %s101, %s103
    %p107 = scmp.eq.s32.totalorder %s11, 0
    %p108 = por %p106, %p107
    %p109 = scmp.ne.s32.totalorder %s101, %s103
    %p110 = scmp.eq.s32.totalorder %s16, 1
    %p111 = por %p109, %p110
    %p112 = scmp.ne.s32.totalorder %s103, %s104
    %p113 = scmp.eq.s32.totalorder %s16, 0
    %p114 = por %p112, %p113
    %p115 = scmp.ne.s32.totalorder %s103, %s104
    %p116 = scmp.eq.s32.totalorder %s17, 1
    %p117 = por %p115, %p116
    %p119 = scmp.ne.s32.totalorder %s104, %s118
    %p120 = scmp.eq.s32.totalorder %s17, 0
    %p121 = por %p119, %p120
    %s123 = sadd.s32 %s122, 1
    %p126 = scmp.eq.s32.totalorder %s11, 1
    %p127 = scmp.ne.s32.totalorder %s122, %s124
    %p128 = scmp.eq.s32.totalorder %s11, 0
    %p129 = por %p127, %p128
    %p130 = scmp.ne.s32.totalorder %s122, %s124
    %p131 = scmp.eq.s32.totalorder %s16, 1
    %p132 = por %p130, %p131
    %p133 = scmp.ne.s32.totalorder %s124, %s125
    %p134 = scmp.eq.s32.totalorder %s16, 0
    %p135 = por %p133, %p134
    %p136 = scmp.ne.s32.totalorder %s124, %s125
    %p137 = scmp.eq.s32.totalorder %s17, 1
    %p138 = por %p136, %p137
    %p140 = scmp.ne.s32.totalorder %s125, %s139
    %p141 = scmp.eq.s32.totalorder %s17, 0
    %p142 = por %p140, %p141
    %s143 = ssub.s32 %s18, %s30
    %s144 = ssub.s32 %s19, %s26
    %s145 = sor.u32 %s143, %s144
    %p146 = scmp.eq.s32.totalorder %s145, 0
    %s148 = sadd.s32 %s147, 1
    %s149 = scalar_select %p146, %s147, %s148
    %p152 = pneg %p146
    %p153 = scmp.eq.s32.totalorder %s11, 1
    %p154 = por %p152, %p153
    %p155 = scmp.ne.s32.totalorder %s147, %s150
    %p156 = scmp.eq.s32.totalorder %s11, 0
    %p157 = por %p155, %p156
    %p158 = scmp.ne.s32.totalorder %s147, %s150
    %p159 = scmp.eq.s32.totalorder %s16, 1
    %p160 = por %p158, %p159
    %p161 = scmp.ne.s32.totalorder %s150, %s151
    %p162 = scmp.eq.s32.totalorder %s16, 0
    %p163 = por %p161, %p162
    %p164 = scmp.ne.s32.totalorder %s150, %s151
    %p165 = scmp.eq.s32.totalorder %s17, 1
    %p166 = por %p164, %p165
    %p168 = scmp.ne.s32.totalorder %s151, %s167
    %p169 = scmp.eq.s32.totalorder %s17, 0
    %p170 = por %p168, %p169
    %p171 = scmp.le.s32.totalorder 1, %s11
    %p172 = scmp.lt.s32.totalorder %s11, 3
    %p173 = pnand %p171, %p172
    %p174 = pneg %p173
    // Predicated region
    $region9: #{encoder_forward.6} parent=5 // pred_check
      _
    $region10: #{encoder_forward.6} parent=5 // pred_check_branch
      %176 = sbr.rel (%p173) target = $region12
    $region11: #{encoder_forward.6} parent=5 // pred_region
      %s177 = ssub.s32 %s11, 1
      // Predicated region
      $region13: #{encoder_forward.6} parent=11 // pred_check
        %p178 = pneg %p72
      $region14: #{encoder_forward.6} parent=11 // pred_check_branch
        %180 = sbr.rel (%p178) target = $region16
      $region15: #{encoder_forward.6} parent=11 // pred_region
        _
      $region16: #{encoder_forward.6} parent=11 // pred_fallthru
        _
      // Predicated region
      $region17: #{encoder_forward.6} parent=11 // pred_check
        %p181 = pneg %p93
      $region18: #{encoder_forward.6} parent=11 // pred_check_branch
        %183 = sbr.rel (%p181) target = $region20
      $region19: #{encoder_forward.6} parent=11 // pred_region
        _
      $region20: #{encoder_forward.6} parent=11 // pred_fallthru
        _
      // Predicated region
      $region21: #{encoder_forward.6} parent=11 // pred_check
        %p184 = pneg %p114
      $region22: #{encoder_forward.6} parent=11 // pred_check_branch
        %186 = sbr.rel (%p184) target = $region24
      $region23: #{encoder_forward.6} parent=11 // pred_region
        _
      $region24: #{encoder_forward.6} parent=11 // pred_fallthru
        _
      // Predicated region
      $region25: #{encoder_forward.6} parent=11 // pred_check
        %p187 = pneg %p135
      $region26: #{encoder_forward.6} parent=11 // pred_check_branch
        %189 = sbr.rel (%p187) target = $region28
      $region27: #{encoder_forward.6} parent=11 // pred_region
        _
      $region28: #{encoder_forward.6} parent=11 // pred_fallthru
        _
    $region12: #{encoder_forward.6} parent=5 // pred_fallthru
      _
    %p190 = scmp.lt.s32.totalorder %s11, 2
    // Predicated region
    $region29: #{encoder_forward.6} parent=5 // pred_check
      %p191 = pneg %p190
    $region30: #{encoder_forward.6} parent=5 // pred_check_branch
      %193 = sbr.rel (%p191) target = $region32
    $region31: #{encoder_forward.6} parent=5 // pred_region
      // Predicated region
      $region33: #{encoder_forward.6} parent=31 // pred_check
        %p194 = pneg %p45
      $region34: #{encoder_forward.6} parent=31 // pred_check_branch
        %196 = sbr.rel (%p194) target = $region36
      $region35: #{encoder_forward.6} parent=31 // pred_region
        %p197 = scmp.lt.s32.totalorder %s18, 1
        %s198 = scalar_select %p197, %s18, 1
        %p199 = scmp.lt.s32.totalorder %s19, 0
        %s200 = scalar_select %p199, %s19, 0
        %s201 = smul.addr %s200, 12
        %s202 = smul.addr %s198, 12
        %s203 = sadd.s32 %s201, %s202
        %s204 = smul.addr %s203, 4
        %s205 = scalar_lea.vmem %s0, %s204
      $region36: #{encoder_forward.6} parent=31 // pred_fallthru
        _
    $region32: #{encoder_forward.6} parent=5 // pred_fallthru
      _
    %p206 = scmp.le.s32.totalorder 1, %s11
    %p207 = scmp.lt.s32.totalorder %s11, 3
    %p208 = pnand %p206, %p207
    %p209 = pneg %p208
    // Predicated region
    $region37: #{encoder_forward.6} parent=5 // pred_check
      _
    $region38: #{encoder_forward.6} parent=5 // pred_check_branch
      %211 = sbr.rel (%p208) target = $region40
    $region39: #{encoder_forward.6} parent=5 // pred_region
      %s212 = ssub.s32 %s11, 1
      %p213 = scmp.lt.s32.totalorder %s20, 1
      %s214 = scalar_select %p213, %s20, 1
      %p215 = scmp.lt.s32.totalorder %s21, 0
      %s216 = scalar_select %p215, %s21, 0
      %s217 = smul.addr %s216, 12
      %s218 = smul.addr %s214, 12
      %s219 = sadd.s32 %s217, %s218
      %s220 = smul.addr %s219, 4
      %s221 = scalar_lea.vmem %s0, %s220
      %p222 = pneg %p51
      %p223 = pneg %p48
      %p224 = pneg %p72
      %p225 = pneg %p69
      %p226 = pneg %p93
      %p227 = pneg %p90
      %p228 = pneg %p114
      %p229 = pneg %p111
      %p230 = pneg %p135
      %p231 = pneg %p132
      %p232 = pneg %p163
      %p233 = pneg %p160
      %s234 = smul.u32 4, %s21
      %p235 = scmp.lt.s32.totalorder %s20, 1
      %s236 = scalar_select %p235, %s20, 1
      %p237 = scmp.lt.s32.totalorder %s234, 3
      %s238 = scalar_select %p237, %s234, 3
      %s239 = smul.addr %s236, 4
      %s240 = sadd.s32 %s238, %s239
      %s241 = smul.addr %s240, 4
      %s242 = scalar_lea.vmem %s5, %s241
      %p243 = scmp.lt.s32.totalorder %s20, 1
      %s244 = scalar_select %p243, %s20, 1
      %p245 = scmp.lt.s32.totalorder %s21, 0
      %s246 = scalar_select %p245, %s21, 0
      %s247 = smul.addr %s246, 12
      %s248 = smul.addr %s244, 12
      %s249 = sadd.s32 %s247, %s248
      %s250 = smul.addr %s249, 4
      %s251 = scalar_lea.vmem %s0, %s250
      %s252 = smul.u32 4, %s21
      %p253 = scmp.lt.s32.totalorder %s20, 1
      %s254 = scalar_select %p253, %s20, 1
      %p255 = scmp.lt.s32.totalorder %s252, 3
      %s256 = scalar_select %p255, %s252, 3
      %s257 = smul.addr %s254, 4
      %s258 = sadd.s32 %s256, %s257
      %s259 = smul.addr %s258, 4
      %s260 = scalar_lea.vmem %s5, %s259
      %s261 = smul.u32 4, %s21
      %v263 = vld [vmem:[%s251] sm:$0xf]
      %v264 = vld [vmem:[%s251 + $0x8] sm:$0xf]
      %v265 = vld [vmem:[%s251 + $0x10] sm:$0xf]
      %v266 = vld [vmem:[%s251 + $0x18] sm:$0xf]
      %v267 = vld [vmem:[%s1] sm:$0xf]
      %v268 = vld [vmem:[%s1 + $0x4] sm:$0xf]
      %v269 = vld [vmem:[%s1 + $0x8] sm:$0xf]
      %v270 = vld [vmem:[%s1 + $0xc] sm:$0xf]
      %v271 = vld [vmem:[%s251 + $0x4] sm:$0x1]
      %v272 = vld [vmem:[%s251 + $0xc] sm:$0x1]
      %v273 = vld [vmem:[%s251 + $0x14] sm:$0x1]
      %v274 = vld [vmem:[%s251 + $0x1c] sm:$0x1]
      %vm275 = vsmask.f32 3328
      %vm276 = vsmask.f32 7440
      %vm277 = vmor %vm275, %vm276
      %v279 = vshrl.u32 %v263, 16
      %v281 = vrot.slane %v279, 4
      %v282 = vshll.u32 %v263, 16
      %v284 = vrot.slane %v282, 5
      %v285 = vor.u32 %v281, %v284
      %v286 = vrot.slane %v285, 4
      %v288 = vshll.u32 %v271, 16
      %v290 = vrot.slane %v288, 5
      %v291 = vsel %vm277, %v286, %v290
      %v293 = vshrl.u32 %v264, 16
      %v295 = vrot.slane %v293, 4
      %v296 = vshll.u32 %v264, 16
      %v298 = vrot.slane %v296, 5
      %v299 = vor.u32 %v295, %v298
      %v300 = vrot.slane %v299, 4
      %v302 = vshll.u32 %v272, 16
      %v304 = vrot.slane %v302, 5
      %v305 = vsel %vm277, %v300, %v304
      %v307 = vshrl.u32 %v265, 16
      %v309 = vrot.slane %v307, 4
      %v310 = vshll.u32 %v265, 16
      %v312 = vrot.slane %v310, 5
      %v313 = vor.u32 %v309, %v312
      %v314 = vrot.slane %v313, 4
      %v316 = vshll.u32 %v273, 16
      %v318 = vrot.slane %v316, 5
      %v319 = vsel %vm277, %v314, %v318
      %v321 = vshrl.u32 %v266, 16
      %v323 = vrot.slane %v321, 4
      %v324 = vshll.u32 %v266, 16
      %v326 = vrot.slane %v324, 5
      %v327 = vor.u32 %v323, %v326
      %v328 = vrot.slane %v327, 4
      %v330 = vshll.u32 %v274, 16
      %v332 = vrot.slane %v330, 5
      %v333 = vsel %vm277, %v328, %v332
      %s334 = scalar_lea.vmem %s1, 16
      %v335 = vld [vmem:[%s334] sm:$0xf]
      %v336 = vld [vmem:[%s334 + $0x4] sm:$0xf]
      %v337 = vld [vmem:[%s334 + $0x8] sm:$0xf]
      %v338 = vld [vmem:[%s334 + $0xc] sm:$0xf]
      %v339 = vunpack.c.l.b16 %v291
      %v340 = vunpack.c.l.b16 %v305
      %v341 = vunpack.c.l.b16 %v319
      %v342 = vunpack.c.l.b16 %v333
      %v343 = vpack.c.b16 %v340, %v339
      %v344 = vpack.c.b16 %v342, %v341
      %v349 = vunpack.c.l.b16 %v335
      %v350 = vunpack.c.l.b16 %v336
      %v351 = vunpack.c.l.b16 %v337
      %v352 = vunpack.c.l.b16 %v338
      %v353 = vpack.c.b16 %v350, %v349
      %v354 = vpack.c.b16 %v352, %v351
      %vm357 = vcmask 261120
      %v359 = vsel %vm357, %v343, 0
      %v362 = vsel %vm357, %v344, 0
      %364 = vmatprep.subr.bf16.mxu0 0
      %365 = vmatpush1.bf16.msra.mxu0 %v353
      %366 = vmatprep.subr.bf16.mxu0 0
      %367 = vmatpush1.bf16.msra.mxu0 %v354
      %368 = vmatprep.subr.bf16.mxu0 0
      %369 = vmatpush1.bf16.msra.mxu0 0
      %370 = vmatprep.subr.bf16.mxu0 0
      %371 = vmatpush1.bf16.msra.mxu0 0
      %372 = vmatprep.subr.bf16.mxu0 0
      %373 = vmatpush1.bf16.msra.mxu0 0
      %374 = vmatprep.subr.bf16.mxu0 0
      %375 = vmatpush1.bf16.msra.mxu0 0
      %376 = vmatprep.subr.bf16.mxu0 0
      %377 = vmatpush1.bf16.msra.mxu0 0
      %378 = vmatprep.subr.bf16.mxu0 0
      %379 = vmatpush1.bf16.msra.mxu0 0
      %380 = vmatprep.subr.bf16.mxu0 0
      %381 = vmatpush1.bf16.msra.mxu0 0
      %382 = vmatprep.subr.bf16.mxu0 0
      %383 = vmatpush1.bf16.msra.mxu0 0
      %384 = vmatprep.subr.bf16.mxu0 0
      %385 = vmatpush1.bf16.msra.mxu0 0
      %386 = vmatprep.subr.bf16.mxu0 0
      %387 = vmatpush1.bf16.msra.mxu0 0
      %388 = vmatprep.subr.bf16.mxu0 0
      %389 = vmatpush1.bf16.msra.mxu0 0
      %390 = vmatprep.subr.bf16.mxu0 0
      %391 = vmatpush1.bf16.msra.mxu0 0
      %392 = vmatprep.subr.bf16.mxu0 0
      %393 = vmatpush1.bf16.msra.mxu0 0
      %394 = vmatprep.subr.bf16.mxu0 0
      %395 = vmatpush1.bf16.msra.mxu0 0
      %396 = vmatprep.mubr.bf16.mxu0 0
      %397 = vmatmul.mubr.bf16.gmra.mrb[0].mxu0 %v359
      %v398 = vpop.f32.mrb[0].mxu0
      %v399 = vadd.f32 0.0, %v398
      %v400 = vpop.f32.mrb[0].mxu0
      %v401 = vpop.f32.mrb[0].mxu0
      %v402 = vadd.f32 0.0, %v401
      %v403 = vpop.f32.mrb[0].mxu0
      %404 = vmatprep.mubr.bf16.mxu0 0
      %405 = vmatmul.mubr.bf16.gmra.mrb[0].mxu0 %v362
      %v406 = vpop.f32.mrb[0].mxu0
      %v407 = vadd.f32 0.0, %v406
      %v408 = vpop.f32.mrb[0].mxu0
      %v409 = vpop.f32.mrb[0].mxu0
      %v410 = vadd.f32 0.0, %v409
      %v411 = vpop.f32.mrb[0].mxu0
      %412 = vdwg.mxu0
      %v417 = vunpack.c.l.b16 %v263
      %v418 = vunpack.c.l.b16 %v264
      %v419 = vunpack.c.l.b16 %v265
      %v420 = vunpack.c.l.b16 %v266
      %v421 = vpack.c.b16 %v418, %v417
      %v422 = vpack.c.b16 %v420, %v419
      %v427 = vunpack.c.l.b16 %v267
      %v428 = vunpack.c.l.b16 %v268
      %v429 = vunpack.c.l.b16 %v269
      %v430 = vunpack.c.l.b16 %v270
      %v431 = vpack.c.b16 %v428, %v427
      %v432 = vpack.c.b16 %v430, %v429
      %v436 = vsel %vm357, %v421, 0
      %v439 = vsel %vm357, %v422, 0
      %441 = vmatprep.subr.bf16.mxu0 0
      %442 = vmatpush1.bf16.msra.mxu0 %v431
      %443 = vmatprep.subr.bf16.mxu0 0
      %444 = vmatpush1.bf16.msra.mxu0 %v432
      %445 = vmatprep.subr.bf16.mxu0 0
      %446 = vmatpush1.bf16.msra.mxu0 0
      %447 = vmatprep.subr.bf16.mxu0 0
      %448 = vmatpush1.bf16.msra.mxu0 0
      %449 = vmatprep.subr.bf16.mxu0 0
      %450 = vmatpush1.bf16.msra.mxu0 0
      %451 = vmatprep.subr.bf16.mxu0 0
      %452 = vmatpush1.bf16.msra.mxu0 0
      %453 = vmatprep.subr.bf16.mxu0 0
      %454 = vmatpush1.bf16.msra.mxu0 0
      %455 = vmatprep.subr.bf16.mxu0 0
      %456 = vmatpush1.bf16.msra.mxu0 0
      %457 = vmatprep.subr.bf16.mxu0 0
      %458 = vmatpush1.bf16.msra.mxu0 0
      %459 = vmatprep.subr.bf16.mxu0 0
      %460 = vmatpush1.bf16.msra.mxu0 0
      %461 = vmatprep.subr.bf16.mxu0 0
      %462 = vmatpush1.bf16.msra.mxu0 0
      %463 = vmatprep.subr.bf16.mxu0 0
      %464 = vmatpush1.bf16.msra.mxu0 0
      %465 = vmatprep.subr.bf16.mxu0 0
      %466 = vmatpush1.bf16.msra.mxu0 0
      %467 = vmatprep.subr.bf16.mxu0 0
      %468 = vmatpush1.bf16.msra.mxu0 0
      %469 = vmatprep.subr.bf16.mxu0 0
      %470 = vmatpush1.bf16.msra.mxu0 0
      %471 = vmatprep.subr.bf16.mxu0 0
      %472 = vmatpush1.bf16.msra.mxu0 0
      %473 = vmatprep.mubr.bf16.mxu0 0
      %474 = vmatmul.mubr.bf16.gmra.mrb[0].mxu0 %v436
      %v475 = vpop.f32.mrb[0].mxu0
      %v476 = vadd.f32 %v399, %v475
      %v477 = vpop.f32.mrb[0].mxu0
      %v478 = vpop.f32.mrb[0].mxu0
      %v479 = vadd.f32 %v402, %v478
      %v480 = vpop.f32.mrb[0].mxu0
      %481 = vmatprep.mubr.bf16.mxu0 0
      %482 = vmatmul.mubr.bf16.gmra.mrb[0].mxu0 %v439
      %v483 = vpop.f32.mrb[0].mxu0
      %v484 = vadd.f32 %v407, %v483
      %v485 = vpop.f32.mrb[0].mxu0
      %v486 = vpop.f32.mrb[0].mxu0
      %v487 = vadd.f32 %v410, %v486
      %v488 = vpop.f32.mrb[0].mxu0
      %489 = vdwg.mxu0
      %v490 = vld [vmem:[%s251] sm:$0xe]
      %v491 = vld [vmem:[%s251 + $0x8] sm:$0xe]
      %v492 = vld [vmem:[%s251 + $0x10] sm:$0xe]
      %v493 = vld [vmem:[%s251 + $0x18] sm:$0xe]
      %vm502 = vcmask 1042432
      %vm503 = vcmask 1046532
      %vm504 = vmor %vm502, %vm503
      %v505 = vrot.slane %v490, 5
      %v506 = vrot.slane %v505, 4
      %v507 = vrot.slane %v271, 5
      %v508 = vsel %vm504, %v506, %v507
      %v509 = vrot.slane %v491, 5
      %v510 = vrot.slane %v509, 4
      %v511 = vrot.slane %v272, 5
      %v512 = vsel %vm504, %v510, %v511
      %v513 = vrot.slane %v492, 5
      %v514 = vrot.slane %v513, 4
      %v515 = vrot.slane %v273, 5
      %v516 = vsel %vm504, %v514, %v515
      %v517 = vrot.slane %v493, 5
      %v518 = vrot.slane %v517, 4
      %v519 = vrot.slane %v274, 5
      %v520 = vsel %vm504, %v518, %v519
      %s521 = scalar_lea.vmem %s1, 32
      %v522 = vld [vmem:[%s521] sm:$0xf]
      %v523 = vld [vmem:[%s521 + $0x4] sm:$0xf]
      %v524 = vld [vmem:[%s521 + $0x8] sm:$0xf]
      %v525 = vld [vmem:[%s521 + $0xc] sm:$0xf]
      %v526 = vunpack.c.l.b16 %v508
      %v527 = vunpack.c.l.b16 %v512
      %v528 = vunpack.c.l.b16 %v516
      %v529 = vunpack.c.l.b16 %v520
      %v530 = vpack.c.b16 %v527, %v526
      %v531 = vpack.c.b16 %v529, %v528
      %v536 = vunpack.c.l.b16 %v522
      %v537 = vunpack.c.l.b16 %v523
      %v538 = vunpack.c.l.b16 %v524
      %v539 = vunpack.c.l.b16 %v525
      %v540 = vpack.c.b16 %v537, %v536
      %v541 = vpack.c.b16 %v539, %v538
      %v545 = vsel %vm357, %v530, 0
      %v548 = vsel %vm357, %v531, 0
      %550 = vmatprep.subr.bf16.mxu0 0
      %551 = vmatpush1.bf16.msra.mxu0 %v540
      %552 = vmatprep.subr.bf16.mxu0 0
      %553 = vmatpush1.bf16.msra.mxu0 %v541
      %554 = vmatprep.subr.bf16.mxu0 0
      %555 = vmatpush1.bf16.msra.mxu0 0
      %556 = vmatprep.subr.bf16.mxu0 0
      %557 = vmatpush1.bf16.msra.mxu0 0
      %558 = vmatprep.subr.bf16.mxu0 0
      %559 = vmatpush1.bf16.msra.mxu0 0
      %560 = vmatprep.subr.bf16.mxu0 0
      %561 = vmatpush1.bf16.msra.mxu0 0
      %562 = vmatprep.subr.bf16.mxu0 0
      %563 = vmatpush1.bf16.msra.mxu0 0
      %564 = vmatprep.subr.bf16.mxu0 0
      %565 = vmatpush1.bf16.msra.mxu0 0
      %566 = vmatprep.subr.bf16.mxu0 0
      %567 = vmatpush1.bf16.msra.mxu0 0
      %568 = vmatprep.subr.bf16.mxu0 0
      %569 = vmatpush1.bf16.msra.mxu0 0
      %570 = vmatprep.subr.bf16.mxu0 0
      %571 = vmatpush1.bf16.msra.mxu0 0
      %572 = vmatprep.subr.bf16.mxu0 0
      %573 = vmatpush1.bf16.msra.mxu0 0
      %574 = vmatprep.subr.bf16.mxu0 0
      %575 = vmatpush1.bf16.msra.mxu0 0
      %576 = vmatprep.subr.bf16.mxu0 0
      %577 = vmatpush1.bf16.msra.mxu0 0
      %578 = vmatprep.subr.bf16.mxu0 0
      %579 = vmatpush1.bf16.msra.mxu0 0
      %580 = vmatprep.subr.bf16.mxu0 0
      %581 = vmatpush1.bf16.msra.mxu0 0
      %582 = vmatprep.mubr.bf16.mxu0 0
      %583 = vmatmul.mubr.bf16.gmra.mrb[0].mxu0 %v545
      %v584 = vpop.f32.mrb[0].mxu0
      %v585 = vadd.f32 0.0, %v584
      %v586 = vpop.f32.mrb[0].mxu0
      %v587 = vpop.f32.mrb[0].mxu0
      %v588 = vadd.f32 0.0, %v587
      %v589 = vpop.f32.mrb[0].mxu0
      %590 = vmatprep.mubr.bf16.mxu0 0
      %591 = vmatmul.mubr.bf16.gmra.mrb[0].mxu0 %v548
      %v592 = vpop.f32.mrb[0].mxu0
      %v593 = vadd.f32 0.0, %v592
      %v594 = vpop.f32.mrb[0].mxu0
      %v595 = vpop.f32.mrb[0].mxu0
      %v596 = vadd.f32 0.0, %v595
      %v597 = vpop.f32.mrb[0].mxu0
      %598 = vdwg.mxu0
      %v599 = vadd.f32 %v476, %v585
      %v600 = vadd.f32 %v479, %v588
      %v601 = vadd.f32 %v484, %v593
      %v602 = vadd.f32 %v487, %v596
      %s603 = scalar_lea.vmem %s251, 8
      %v604 = vld [vmem:[%s603] sm:$0xf]
      %v605 = vld [vmem:[%s603 + $0x8] sm:$0xf]
      %v606 = vld [vmem:[%s603 + $0x10] sm:$0xf]
      %v607 = vld [vmem:[%s603 + $0x18] sm:$0xf]
      %s608 = scalar_lea.vmem %s1, 48
      %v609 = vld [vmem:[%s608] sm:$0xf]
      %v610 = vld [vmem:[%s608 + $0x4] sm:$0xf]
      %v611 = vld [vmem:[%s608 + $0x8] sm:$0xf]
      %v612 = vld [vmem:[%s608 + $0xc] sm:$0xf]
      %v617 = vunpack.c.l.b16 %v604
      %v618 = vunpack.c.l.b16 %v605
      %v619 = vunpack.c.l.b16 %v606
      %v620 = vunpack.c.l.b16 %v607
      %v621 = vpack.c.b16 %v618, %v617
      %v622 = vpack.c.b16 %v620, %v619
      %v627 = vunpack.c.l.b16 %v609
      %v628 = vunpack.c.l.b16 %v610
      %v629 = vunpack.c.l.b16 %v611
      %v630 = vunpack.c.l.b16 %v612
      %v631 = vpack.c.b16 %v628, %v627
      %v632 = vpack.c.b16 %v630, %v629
      %v636 = vsel %vm357, %v621, 0
      %v639 = vsel %vm357, %v622, 0
      %641 = vmatprep.subr.bf16.mxu0 0
      %642 = vmatpush1.bf16.msra.mxu0 %v631
      %643 = vmatprep.subr.bf16.mxu0 0
      %644 = vmatpush1.bf16.msra.mxu0 %v632
      %645 = vmatprep.subr.bf16.mxu0 0
      %646 = vmatpush1.bf16.msra.mxu0 0
      %647 = vmatprep.subr.bf16.mxu0 0
      %648 = vmatpush1.bf16.msra.mxu0 0
      %649 = vmatprep.subr.bf16.mxu0 0
      %650 = vmatpush1.bf16.msra.mxu0 0
      %651 = vmatprep.subr.bf16.mxu0 0
      %652 = vmatpush1.bf16.msra.mxu0 0
      %653 = vmatprep.subr.bf16.mxu0 0
      %654 = vmatpush1.bf16.msra.mxu0 0
      %655 = vmatprep.subr.bf16.mxu0 0
      %656 = vmatpush1.bf16.msra.mxu0 0
      %657 = vmatprep.subr.bf16.mxu0 0
      %658 = vmatpush1.bf16.msra.mxu0 0
      %659 = vmatprep.subr.bf16.mxu0 0
      %660 = vmatpush1.bf16.msra.mxu0 0
      %661 = vmatprep.subr.bf16.mxu0 0
      %662 = vmatpush1.bf16.msra.mxu0 0
      %663 = vmatprep.subr.bf16.mxu0 0
      %664 = vmatpush1.bf16.msra.mxu0 0
      %665 = vmatprep.subr.bf16.mxu0 0
      %666 = vmatpush1.bf16.msra.mxu0 0
      %667 = vmatprep.subr.bf16.mxu0 0
      %668 = vmatpush1.bf16.msra.mxu0 0
      %669 = vmatprep.subr.bf16.mxu0 0
      %670 = vmatpush1.bf16.msra.mxu0 0
      %671 = vmatprep.subr.bf16.mxu0 0
      %672 = vmatpush1.bf16.msra.mxu0 0
      %673 = vmatprep.mubr.bf16.mxu0 0
      %674 = vmatmul.mubr.bf16.gmra.mrb[0].mxu0 %v636
      %v675 = vpop.f32.mrb[0].mxu0
      %v676 = vadd.f32 0.0, %v675
      %v677 = vpop.f32.mrb[0].mxu0
      %v678 = vpop.f32.mrb[0].mxu0
      %v679 = vadd.f32 0.0, %v678
      %v680 = vpop.f32.mrb[0].mxu0
      %681 = vmatprep.mubr.bf16.mxu0 0
      %682 = vmatmul.mubr.bf16.gmra.mrb[0].mxu0 %v639
      %v683 = vpop.f32.mrb[0].mxu0
      %v684 = vadd.f32 0.0, %v683
      %v685 = vpop.f32.mrb[0].mxu0
      %v686 = vpop.f32.mrb[0].mxu0
      %v687 = vadd.f32 0.0, %v686
      %v688 = vpop.f32.mrb[0].mxu0
      %689 = vdwg.mxu0
      %v690 = vadd.f32 %v599, %v676
      %v691 = vadd.f32 %v600, %v679
      %v692 = vadd.f32 %v601, %v684
      %v693 = vadd.f32 %v602, %v687
      %v694 = vld [vmem:[%s603] sm:$0xf]
      %v695 = vld [vmem:[%s603 + $0x4] sm:$0x1]
      %v696 = vld [vmem:[%s603 + $0x8] sm:$0xf]
      %v697 = vld [vmem:[%s603 + $0xc] sm:$0x1]
      %v698 = vld [vmem:[%s603 + $0x10] sm:$0xf]
      %v699 = vld [vmem:[%s603 + $0x14] sm:$0x1]
      %v700 = vld [vmem:[%s603 + $0x18] sm:$0xf]
      %v701 = vld [vmem:[%s603 + $0x1c] sm:$0x1]
      %v703 = vshrl.u32 %v694, 16
      %v705 = vrot.slane %v703, 4
      %v706 = vshll.u32 %v694, 16
      %v708 = vrot.slane %v706, 5
      %v709 = vor.u32 %v705, %v708
      %v710 = vrot.slane %v709, 4
      %v712 = vshll.u32 %v695, 16
      %v714 = vrot.slane %v712, 5
      %v715 = vsel %vm277, %v710, %v714
      %v717 = vshrl.u32 %v696, 16
      %v719 = vrot.slane %v717, 4
      %v720 = vshll.u32 %v696, 16
      %v722 = vrot.slane %v720, 5
      %v723 = vor.u32 %v719, %v722
      %v724 = vrot.slane %v723, 4
      %v726 = vshll.u32 %v697, 16
      %v728 = vrot.slane %v726, 5
      %v729 = vsel %vm277, %v724, %v728
      %v731 = vshrl.u32 %v698, 16
      %v733 = vrot.slane %v731, 4
      %v734 = vshll.u32 %v698, 16
      %v736 = vrot.slane %v734, 5
      %v737 = vor.u32 %v733, %v736
      %v738 = vrot.slane %v737, 4
      %v740 = vshll.u32 %v699, 16
      %v742 = vrot.slane %v740, 5
      %v743 = vsel %vm277, %v738, %v742
      %v745 = vshrl.u32 %v700, 16
      %v747 = vrot.slane %v745, 4
      %v748 = vshll.u32 %v700, 16
      %v750 = vrot.slane %v748, 5
      %v751 = vor.u32 %v747, %v750
      %v752 = vrot.slane %v751, 4
      %v754 = vshll.u32 %v701, 16
      %v756 = vrot.slane %v754, 5
      %v757 = vsel %vm277, %v752, %v756
      %s758 = scalar_lea.vmem %s1, 64
      %v759 = vld [vmem:[%s758] sm:$0xf]
      %v760 = vld [vmem:[%s758 + $0x4] sm:$0xf]
      %v761 = vld [vmem:[%s758 + $0x8] sm:$0xf]
      %v762 = vld [vmem:[%s758 + $0xc] sm:$0xf]
      %v763 = vunpack.c.l.b16 %v715
      %v764 = vunpack.c.l.b16 %v729
      %v765 = vunpack.c.l.b16 %v743
      %v766 = vunpack.c.l.b16 %v757
      %v767 = vpack.c.b16 %v764, %v763
      %v768 = vpack.c.b16 %v766, %v765
      %v773 = vunpack.c.l.b16 %v759
      %v774 = vunpack.c.l.b16 %v760
      %v775 = vunpack.c.l.b16 %v761
      %v776 = vunpack.c.l.b16 %v762
      %v777 = vpack.c.b16 %v774, %v773
      %v778 = vpack.c.b16 %v776, %v775
      %v782 = vsel %vm357, %v767, 0
      %v785 = vsel %vm357, %v768, 0
      %787 = vmatprep.subr.bf16.mxu0 0
      %788 = vmatpush1.bf16.msra.mxu0 %v777
      %789 = vmatprep.subr.bf16.mxu0 0
      %790 = vmatpush1.bf16.msra.mxu0 %v778
      %791 = vmatprep.subr.bf16.mxu0 0
      %792 = vmatpush1.bf16.msra.mxu0 0
      %793 = vmatprep.subr.bf16.mxu0 0
      %794 = vmatpush1.bf16.msra.mxu0 0
      %795 = vmatprep.subr.bf16.mxu0 0
      %796 = vmatpush1.bf16.msra.mxu0 0
      %797 = vmatprep.subr.bf16.mxu0 0
      %798 = vmatpush1.bf16.msra.mxu0 0
      %799 = vmatprep.subr.bf16.mxu0 0
      %800 = vmatpush1.bf16.msra.mxu0 0
      %801 = vmatprep.subr.bf16.mxu0 0
      %802 = vmatpush1.bf16.msra.mxu0 0
      %803 = vmatprep.subr.bf16.mxu0 0
      %804 = vmatpush1.bf16.msra.mxu0 0
      %805 = vmatprep.subr.bf16.mxu0 0
      %806 = vmatpush1.bf16.msra.mxu0 0
      %807 = vmatprep.subr.bf16.mxu0 0
      %808 = vmatpush1.bf16.msra.mxu0 0
      %809 = vmatprep.subr.bf16.mxu0 0
      %810 = vmatpush1.bf16.msra.mxu0 0
      %811 = vmatprep.subr.bf16.mxu0 0
      %812 = vmatpush1.bf16.msra.mxu0 0
      %813 = vmatprep.subr.bf16.mxu0 0
      %814 = vmatpush1.bf16.msra.mxu0 0
      %815 = vmatprep.subr.bf16.mxu0 0
      %816 = vmatpush1.bf16.msra.mxu0 0
      %817 = vmatprep.subr.bf16.mxu0 0
      %818 = vmatpush1.bf16.msra.mxu0 0
      %819 = vmatprep.mubr.bf16.mxu0 0
      %820 = vmatmul.mubr.bf16.gmra.mrb[0].mxu0 %v782
      %v821 = vpop.f32.mrb[0].mxu0
      %v822 = vadd.f32 0.0, %v821
      %v823 = vpop.f32.mrb[0].mxu0
      %v824 = vpop.f32.mrb[0].mxu0
      %v825 = vadd.f32 0.0, %v824
      %v826 = vpop.f32.mrb[0].mxu0
      %827 = vmatprep.mubr.bf16.mxu0 0
      %828 = vmatmul.mubr.bf16.gmra.mrb[0].mxu0 %v785
      %v829 = vpop.f32.mrb[0].mxu0
      %v830 = vadd.f32 0.0, %v829
      %v831 = vpop.f32.mrb[0].mxu0
      %v832 = vpop.f32.mrb[0].mxu0
      %v833 = vadd.f32 0.0, %v832
      %v834 = vpop.f32.mrb[0].mxu0
      %835 = vdwg.mxu0
      %v836 = vadd.f32 %v690, %v822
      %v837 = vadd.f32 %v691, %v825
      %v838 = vadd.f32 %v692, %v830
      %v839 = vadd.f32 %v693, %v833
      %v840 = vld [vmem:[%s603] sm:$0xe]
      %v841 = vld [vmem:[%s603 + $0x8] sm:$0xe]
      %v842 = vld [vmem:[%s603 + $0x10] sm:$0xe]
      %v843 = vld [vmem:[%s603 + $0x18] sm:$0xe]
      %v852 = vrot.slane %v840, 5
      %v853 = vrot.slane %v852, 4
      %v854 = vrot.slane %v695, 5
      %v855 = vsel %vm504, %v853, %v854
      %v856 = vrot.slane %v841, 5
      %v857 = vrot.slane %v856, 4
      %v858 = vrot.slane %v697, 5
      %v859 = vsel %vm504, %v857, %v858
      %v860 = vrot.slane %v842, 5
      %v861 = vrot.slane %v860, 4
      %v862 = vrot.slane %v699, 5
      %v863 = vsel %vm504, %v861, %v862
      %v864 = vrot.slane %v843, 5
      %v865 = vrot.slane %v864, 4
      %v866 = vrot.slane %v701, 5
      %v867 = vsel %vm504, %v865, %v866
      %s868 = scalar_lea.vmem %s1, 80
      %v869 = vld [vmem:[%s868] sm:$0xf]
      %v870 = vld [vmem:[%s868 + $0x4] sm:$0xf]
      %v871 = vld [vmem:[%s868 + $0x8] sm:$0xf]
      %v872 = vld [vmem:[%s868 + $0xc] sm:$0xf]
      %v873 = vunpack.c.l.b16 %v855
      %v874 = vunpack.c.l.b16 %v859
      %v875 = vunpack.c.l.b16 %v863
      %v876 = vunpack.c.l.b16 %v867
      %v877 = vpack.c.b16 %v874, %v873
      %v878 = vpack.c.b16 %v876, %v875
      %v883 = vunpack.c.l.b16 %v869
      %v884 = vunpack.c.l.b16 %v870
      %v885 = vunpack.c.l.b16 %v871
      %v886 = vunpack.c.l.b16 %v872
      %v887 = vpack.c.b16 %v884, %v883
      %v888 = vpack.c.b16 %v886, %v885
      %v892 = vsel %vm357, %v877, 0
      %v895 = vsel %vm357, %v878, 0
      %897 = vmatprep.subr.bf16.mxu0 0
      %898 = vmatpush1.bf16.msra.mxu0 %v887
      %899 = vmatprep.subr.bf16.mxu0 0
      %900 = vmatpush1.bf16.msra.mxu0 %v888
      %901 = vmatprep.subr.bf16.mxu0 0
      %902 = vmatpush1.bf16.msra.mxu0 0
      %903 = vmatprep.subr.bf16.mxu0 0
      %904 = vmatpush1.bf16.msra.mxu0 0
      %905 = vmatprep.subr.bf16.mxu0 0
      %906 = vmatpush1.bf16.msra.mxu0 0
      %907 = vmatprep.subr.bf16.mxu0 0
      %908 = vmatpush1.bf16.msra.mxu0 0
      %909 = vmatprep.subr.bf16.mxu0 0
      %910 = vmatpush1.bf16.msra.mxu0 0
      %911 = vmatprep.subr.bf16.mxu0 0
      %912 = vmatpush1.bf16.msra.mxu0 0
      %913 = vmatprep.subr.bf16.mxu0 0
      %914 = vmatpush1.bf16.msra.mxu0 0
      %915 = vmatprep.subr.bf16.mxu0 0
      %916 = vmatpush1.bf16.msra.mxu0 0
      %917 = vmatprep.subr.bf16.mxu0 0
      %918 = vmatpush1.bf16.msra.mxu0 0
      %919 = vmatprep.subr.bf16.mxu0 0
      %920 = vmatpush1.bf16.msra.mxu0 0
      %921 = vmatprep.subr.bf16.mxu0 0
      %922 = vmatpush1.bf16.msra.mxu0 0
      %923 = vmatprep.subr.bf16.mxu0 0
      %924 = vmatpush1.bf16.msra.mxu0 0
      %925 = vmatprep.subr.bf16.mxu0 0
      %926 = vmatpush1.bf16.msra.mxu0 0
      %927 = vmatprep.subr.bf16.mxu0 0
      %928 = vmatpush1.bf16.msra.mxu0 0
      %929 = vmatprep.mubr.bf16.mxu0 0
      %930 = vmatmul.mubr.bf16.gmra.mrb[0].mxu0 %v892
      %v931 = vpop.f32.mrb[0].mxu0
      %v932 = vadd.f32 0.0, %v931
      %v933 = vpop.f32.mrb[0].mxu0
      %v934 = vpop.f32.mrb[0].mxu0
      %v935 = vadd.f32 0.0, %v934
      %v936 = vpop.f32.mrb[0].mxu0
      %937 = vmatprep.mubr.bf16.mxu0 0
      %938 = vmatmul.mubr.bf16.gmra.mrb[0].mxu0 %v895
      %v939 = vpop.f32.mrb[0].mxu0
      %v940 = vadd.f32 0.0, %v939
      %v941 = vpop.f32.mrb[0].mxu0
      %v942 = vpop.f32.mrb[0].mxu0
      %v943 = vadd.f32 0.0, %v942
      %v944 = vpop.f32.mrb[0].mxu0
      %945 = vdwg.mxu0
      %v946 = vadd.f32 %v836, %v932
      %v947 = vadd.f32 %v837, %v935
      %v948 = vadd.f32 %v838, %v940
      %v949 = vadd.f32 %v839, %v943
      %s950 = scalar_lea.vmem %s251, 16
      %v951 = vld [vmem:[%s950] sm:$0xf]
      %v952 = vld [vmem:[%s950 + $0x8] sm:$0xf]
      %v953 = vld [vmem:[%s950 + $0x10] sm:$0xf]
      %v954 = vld [vmem:[%s950 + $0x18] sm:$0xf]
      %s955 = scalar_lea.vmem %s1, 96
      %v956 = vld [vmem:[%s955] sm:$0xf]
      %v957 = vld [vmem:[%s955 + $0x4] sm:$0xf]
      %v958 = vld [vmem:[%s955 + $0x8] sm:$0xf]
      %v959 = vld [vmem:[%s955 + $0xc] sm:$0xf]
      %v964 = vunpack.c.l.b16 %v951
      %v965 = vunpack.c.l.b16 %v952
      %v966 = vunpack.c.l.b16 %v953
      %v967 = vunpack.c.l.b16 %v954
      %v968 = vpack.c.b16 %v965, %v964
      %v969 = vpack.c.b16 %v967, %v966
      %v974 = vunpack.c.l.b16 %v956
      %v975 = vunpack.c.l.b16 %v957
      %v976 = vunpack.c.l.b16 %v958
      %v977 = vunpack.c.l.b16 %v959
      %v978 = vpack.c.b16 %v975, %v974
      %v979 = vpack.c.b16 %v977, %v976
      %v983 = vsel %vm357, %v968, 0
      %v986 = vsel %vm357, %v969, 0
      %988 = vmatprep.subr.bf16.mxu0 0
      %989 = vmatpush1.bf16.msra.mxu0 %v978
      %990 = vmatprep.subr.bf16.mxu0 0
      %991 = vmatpush1.bf16.msra.mxu0 %v979
      %992 = vmatprep.subr.bf16.mxu0 0
      %993 = vmatpush1.bf16.msra.mxu0 0
      %994 = vmatprep.subr.bf16.mxu0 0
      %995 = vmatpush1.bf16.msra.mxu0 0
      %996 = vmatprep.subr.bf16.mxu0 0
      %997 = vmatpush1.bf16.msra.mxu0 0
      %998 = vmatprep.subr.bf16.mxu0 0
      %999 = vmatpush1.bf16.msra.mxu0 0
      %1000 = vmatprep.subr.bf16.mxu0 0
      %1001 = vmatpush1.bf16.msra.mxu0 0
      %1002 = vmatprep.subr.bf16.mxu0 0
      %1003 = vmatpush1.bf16.msra.mxu0 0
      %1004 = vmatprep.subr.bf16.mxu0 0
      %1005 = vmatpush1.bf16.msra.mxu0 0
      %1006 = vmatprep.subr.bf16.mxu0 0
      %1007 = vmatpush1.bf16.msra.mxu0 0
      %1008 = vmatprep.subr.bf16.mxu0 0
      %1009 = vmatpush1.bf16.msra.mxu0 0
      %1010 = vmatprep.subr.bf16.mxu0 0
      %1011 = vmatpush1.bf16.msra.mxu0 0
      %1012 = vmatprep.subr.bf16.mxu0 0
      %1013 = vmatpush1.bf16.msra.mxu0 0
      %1014 = vmatprep.subr.bf16.mxu0 0
      %1015 = vmatpush1.bf16.msra.mxu0 0
      %1016 = vmatprep.subr.bf16.mxu0 0
      %1017 = vmatpush1.bf16.msra.mxu0 0
      %1018 = vmatprep.subr.bf16.mxu0 0
      %1019 = vmatpush1.bf16.msra.mxu0 0
      %1020 = vmatprep.mubr.bf16.mxu0 0
      %1021 = vmatmul.mubr.bf16.gmra.mrb[0].mxu0 %v983
      %v1022 = vpop.f32.mrb[0].mxu0
      %v1023 = vadd.f32 0.0, %v1022
      %v1024 = vpop.f32.mrb[0].mxu0
      %v1025 = vpop.f32.mrb[0].mxu0
      %v1026 = vadd.f32 0.0, %v1025
      %v1027 = vpop.f32.mrb[0].mxu0
      %1028 = vmatprep.mubr.bf16.mxu0 0
      %1029 = vmatmul.mubr.bf16.gmra.mrb[0].mxu0 %v986
      %v1030 = vpop.f32.mrb[0].mxu0
      %v1031 = vadd.f32 0.0, %v1030
      %v1032 = vpop.f32.mrb[0].mxu0
      %v1033 = vpop.f32.mrb[0].mxu0
      %v1034 = vadd.f32 0.0, %v1033
      %v1035 = vpop.f32.mrb[0].mxu0
      %1036 = vdwg.mxu0
      %v1037 = vadd.f32 %v946, %v1023
      %v1038 = vadd.f32 %v947, %v1026
      %v1039 = vadd.f32 %v948, %v1031
      %v1040 = vadd.f32 %v949, %v1034
      %v1041 = vld [vmem:[%s950] sm:$0xf]
      %v1042 = vld [vmem:[%s950 + $0x4] sm:$0x1]
      %v1043 = vld [vmem:[%s950 + $0x8] sm:$0xf]
      %v1044 = vld [vmem:[%s950 + $0xc] sm:$0x1]
      %v1045 = vld [vmem:[%s950 + $0x10] sm:$0xf]
      %v1046 = vld [vmem:[%s950 + $0x14] sm:$0x1]
      %v1047 = vld [vmem:[%s950 + $0x18] sm:$0xf]
      %v1048 = vld [vmem:[%s950 + $0x1c] sm:$0x1]
      %v1050 = vshrl.u32 %v1041, 16
      %v1052 = vrot.slane %v1050, 4
      %v1053 = vshll.u32 %v1041, 16
      %v1055 = vrot.slane %v1053, 5
      %v1056 = vor.u32 %v1052, %v1055
      %v1057 = vrot.slane %v1056, 4
      %v1059 = vshll.u32 %v1042, 16
      %v1061 = vrot.slane %v1059, 5
      %v1062 = vsel %vm277, %v1057, %v1061
      %v1064 = vshrl.u32 %v1043, 16
      %v1066 = vrot.slane %v1064, 4
      %v1067 = vshll.u32 %v1043, 16
      %v1069 = vrot.slane %v1067, 5
      %v1070 = vor.u32 %v1066, %v1069
      %v1071 = vrot.slane %v1070, 4
      %v1073 = vshll.u32 %v1044, 16
      %v1075 = vrot.slane %v1073, 5
      %v1076 = vsel %vm277, %v1071, %v1075
      %v1078 = vshrl.u32 %v1045, 16
      %v1080 = vrot.slane %v1078, 4
      %v1081 = vshll.u32 %v1045, 16
      %v1083 = vrot.slane %v1081, 5
      %v1084 = vor.u32 %v1080, %v1083
      %v1085 = vrot.slane %v1084, 4
      %v1087 = vshll.u32 %v1046, 16
      %v1089 = vrot.slane %v1087, 5
      %v1090 = vsel %vm277, %v1085, %v1089
      %v1092 = vshrl.u32 %v1047, 16
      %v1094 = vrot.slane %v1092, 4
      %v1095 = vshll.u32 %v1047, 16
      %v1097 = vrot.slane %v1095, 5
      %v1098 = vor.u32 %v1094, %v1097
      %v1099 = vrot.slane %v1098, 4
      %v1101 = vshll.u32 %v1048, 16
      %v1103 = vrot.slane %v1101, 5
      %v1104 = vsel %vm277, %v1099, %v1103
      %s1105 = scalar_lea.vmem %s1, 112
      %v1106 = vld [vmem:[%s1105] sm:$0xf]
      %v1107 = vld [vmem:[%s1105 + $0x4] sm:$0xf]
      %v1108 = vld [vmem:[%s1105 + $0x8] sm:$0xf]
      %v1109 = vld [vmem:[%s1105 + $0xc] sm:$0xf]
      %v1110 = vunpack.c.l.b16 %v1062
      %v1111 = vunpack.c.l.b16 %v1076
      %v1112 = vunpack.c.l.b16 %v1090
      %v1113 = vunpack.c.l.b16 %v1104
      %v1114 = vpack.c.b16 %v1111, %v1110
      %v1115 = vpack.c.b16 %v1113, %v1112
      %v1120 = vunpack.c.l.b16 %v1106
      %v1121 = vunpack.c.l.b16 %v1107
      %v1122 = vunpack.c.l.b16 %v1108
      %v1123 = vunpack.c.l.b16 %v1109
      %v1124 = vpack.c.b16 %v1121, %v1120
      %v1125 = vpack.c.b16 %v1123, %v1122
      %v1129 = vsel %vm357, %v1114, 0
      %v1132 = vsel %vm357, %v1115, 0
      %1134 = vmatprep.subr.bf16.mxu0 0
      %1135 = vmatpush1.bf16.msra.mxu0 %v1124
      %1136 = vmatprep.subr.bf16.mxu0 0
      %1137 = vmatpush1.bf16.msra.mxu0 %v1125
      %1138 = vmatprep.subr.bf16.mxu0 0
      %1139 = vmatpush1.bf16.msra.mxu0 0
      %1140 = vmatprep.subr.bf16.mxu0 0
      %1141 = vmatpush1.bf16.msra.mxu0 0
      %1142 = vmatprep.subr.bf16.mxu0 0
      %1143 = vmatpush1.bf16.msra.mxu0 0
      %1144 = vmatprep.subr.bf16.mxu0 0
      %1145 = vmatpush1.bf16.msra.mxu0 0
      %1146 = vmatprep.subr.bf16.mxu0 0
      %1147 = vmatpush1.bf16.msra.mxu0 0
      %1148 = vmatprep.subr.bf16.mxu0 0
      %1149 = vmatpush1.bf16.msra.mxu0 0
      %1150 = vmatprep.subr.bf16.mxu0 0
      %1151 = vmatpush1.bf16.msra.mxu0 0
      %1152 = vmatprep.subr.bf16.mxu0 0
      %1153 = vmatpush1.bf16.msra.mxu0 0
      %1154 = vmatprep.subr.bf16.mxu0 0
      %1155 = vmatpush1.bf16.msra.mxu0 0
      %1156 = vmatprep.subr.bf16.mxu0 0
      %1157 = vmatpush1.bf16.msra.mxu0 0
      %1158 = vmatprep.subr.bf16.mxu0 0
      %1159 = vmatpush1.bf16.msra.mxu0 0
      %1160 = vmatprep.subr.bf16.mxu0 0
      %1161 = vmatpush1.bf16.msra.mxu0 0
      %1162 = vmatprep.subr.bf16.mxu0 0
      %1163 = vmatpush1.bf16.msra.mxu0 0
      %1164 = vmatprep.subr.bf16.mxu0 0
      %1165 = vmatpush1.bf16.msra.mxu0 0
      %1166 = vmatprep.mubr.bf16.mxu0 0
      %1167 = vmatmul.mubr.bf16.gmra.mrb[0].mxu0 %v1129
      %v1168 = vpop.f32.mrb[0].mxu0
      %v1169 = vadd.f32 0.0, %v1168
      %v1170 = vpop.f32.mrb[0].mxu0
      %v1171 = vpop.f32.mrb[0].mxu0
      %v1172 = vadd.f32 0.0, %v1171
      %v1173 = vpop.f32.mrb[0].mxu0
      %1174 = vmatprep.mubr.bf16.mxu0 0
      %1175 = vmatmul.mubr.bf16.gmra.mrb[0].mxu0 %v1132
      %v1176 = vpop.f32.mrb[0].mxu0
      %v1177 = vadd.f32 0.0, %v1176
      %v1178 = vpop.f32.mrb[0].mxu0
      %v1179 = vpop.f32.mrb[0].mxu0
      %v1180 = vadd.f32 0.0, %v1179
      %v1181 = vpop.f32.mrb[0].mxu0
      %1182 = vdwg.mxu0
      %v1183 = vadd.f32 %v1037, %v1169
      %v1184 = vadd.f32 %v1038, %v1172
      %v1185 = vadd.f32 %v1039, %v1177
      %v1186 = vadd.f32 %v1040, %v1180
      %v1187 = vld [vmem:[%s950] sm:$0xe]
      %v1188 = vld [vmem:[%s950 + $0x8] sm:$0xe]
      %v1189 = vld [vmem:[%s950 + $0x10] sm:$0xe]
      %v1190 = vld [vmem:[%s950 + $0x18] sm:$0xe]
      %v1199 = vrot.slane %v1187, 5
      %v1200 = vrot.slane %v1199, 4
      %v1201 = vrot.slane %v1042, 5
      %v1202 = vsel %vm504, %v1200, %v1201
      %v1203 = vrot.slane %v1188, 5
      %v1204 = vrot.slane %v1203, 4
      %v1205 = vrot.slane %v1044, 5
      %v1206 = vsel %vm504, %v1204, %v1205
      %v1207 = vrot.slane %v1189, 5
      %v1208 = vrot.slane %v1207, 4
      %v1209 = vrot.slane %v1046, 5
      %v1210 = vsel %vm504, %v1208, %v1209
      %v1211 = vrot.slane %v1190, 5
      %v1212 = vrot.slane %v1211, 4
      %v1213 = vrot.slane %v1048, 5
      %v1214 = vsel %vm504, %v1212, %v1213
      %s1215 = scalar_lea.vmem %s1, 128
      %v1216 = vld [vmem:[%s1215] sm:$0xf]
      %v1217 = vld [vmem:[%s1215 + $0x4] sm:$0xf]
      %v1218 = vld [vmem:[%s1215 + $0x8] sm:$0xf]
      %v1219 = vld [vmem:[%s1215 + $0xc] sm:$0xf]
      %v1220 = vunpack.c.l.b16 %v1202
      %v1221 = vunpack.c.l.b16 %v1206
      %v1222 = vunpack.c.l.b16 %v1210
      %v1223 = vunpack.c.l.b16 %v1214
      %v1224 = vpack.c.b16 %v1221, %v1220
      %v1225 = vpack.c.b16 %v1223, %v1222
      %v1230 = vunpack.c.l.b16 %v1216
      %v1231 = vunpack.c.l.b16 %v1217
      %v1232 = vunpack.c.l.b16 %v1218
      %v1233 = vunpack.c.l.b16 %v1219
      %v1234 = vpack.c.b16 %v1231, %v1230
      %v1235 = vpack.c.b16 %v1233, %v1232
      %v1239 = vsel %vm357, %v1224, 0
      %v1242 = vsel %vm357, %v1225, 0
      %1244 = vmatprep.subr.bf16.mxu0 0
      %1245 = vmatpush1.bf16.msra.mxu0 %v1234
      %1246 = vmatprep.subr.bf16.mxu0 0
      %1247 = vmatpush1.bf16.msra.mxu0 %v1235
      %1248 = vmatprep.subr.bf16.mxu0 0
      %1249 = vmatpush1.bf16.msra.mxu0 0
      %1250 = vmatprep.subr.bf16.mxu0 0
      %1251 = vmatpush1.bf16.msra.mxu0 0
      %1252 = vmatprep.subr.bf16.mxu0 0
      %1253 = vmatpush1.bf16.msra.mxu0 0
      %1254 = vmatprep.subr.bf16.mxu0 0
      %1255 = vmatpush1.bf16.msra.mxu0 0
      %1256 = vmatprep.subr.bf16.mxu0 0
      %1257 = vmatpush1.bf16.msra.mxu0 0
      %1258 = vmatprep.subr.bf16.mxu0 0
      %1259 = vmatpush1.bf16.msra.mxu0 0
      %1260 = vmatprep.subr.bf16.mxu0 0
      %1261 = vmatpush1.bf16.msra.mxu0 0
      %1262 = vmatprep.subr.bf16.mxu0 0
      %1263 = vmatpush1.bf16.msra.mxu0 0
      %1264 = vmatprep.subr.bf16.mxu0 0
      %1265 = vmatpush1.bf16.msra.mxu0 0
      %1266 = vmatprep.subr.bf16.mxu0 0
      %1267 = vmatpush1.bf16.msra.mxu0 0
      %1268 = vmatprep.subr.bf16.mxu0 0
      %1269 = vmatpush1.bf16.msra.mxu0 0
      %1270 = vmatprep.subr.bf16.mxu0 0
      %1271 = vmatpush1.bf16.msra.mxu0 0
      %1272 = vmatprep.subr.bf16.mxu0 0
      %1273 = vmatpush1.bf16.msra.mxu0 0
      %1274 = vmatprep.subr.bf16.mxu0 0
      %1275 = vmatpush1.bf16.msra.mxu0 0
      %1276 = vmatprep.mubr.bf16.mxu0 0
      %1277 = vmatmul.mubr.bf16.gmra.mrb[0].mxu0 %v1239
      %v1278 = vpop.f32.mrb[0].mxu0
      %v1279 = vadd.f32 0.0, %v1278
      %v1280 = vpop.f32.mrb[0].mxu0
      %v1281 = vpop.f32.mrb[0].mxu0
      %v1282 = vadd.f32 0.0, %v1281
      %v1283 = vpop.f32.mrb[0].mxu0
      %1284 = vmatprep.mubr.bf16.mxu0 0
      %1285 = vmatmul.mubr.bf16.gmra.mrb[0].mxu0 %v1242
      %v1286 = vpop.f32.mrb[0].mxu0
      %v1287 = vadd.f32 0.0, %v1286
      %v1288 = vpop.f32.mrb[0].mxu0
      %v1289 = vpop.f32.mrb[0].mxu0
      %v1290 = vadd.f32 0.0, %v1289
      %v1291 = vpop.f32.mrb[0].mxu0
      %1292 = vdwg.mxu0
      %v1293 = vadd.f32 %v1183, %v1279
      %v1294 = vadd.f32 %v1184, %v1282
      %v1295 = vadd.f32 %v1185, %v1287
      %v1296 = vadd.f32 %v1186, %v1290
      %v1297 = vld [vmem:[%s2] sm:$0x1]
      %v1299 = vlaneseq
      %v1300 = vshrl.u32 %v1299, 7
      %v1301 = vsub.s32 0, %v1300
      %v1302 = vrot.slane %v1297, %v1301
      %v1304 = vadd.f32 %v1293, %v1302
      %v1305 = vadd.f32 %v1294, %v1302
      %v1306 = vadd.f32 %v1295, %v1302
      %v1307 = vadd.f32 %v1296, %v1302
      %v1308 = vmul.f32 %v1304, %v1304
      %v1309 = vmul.f32 %v1305, %v1305
      %v1310 = vmul.f32 %v1306, %v1306
      %v1311 = vmul.f32 %v1307, %v1307
      %v1312 = vpack.c.bf16 %v1309, %v1308
      %v1313 = vpack.c.bf16 %v1311, %v1310
      %v1314 = vld [vmem:[%s3] sm:$0xf]
      %v1315 = vld [vmem:[%s3 + $0x4] sm:$0xf]
      %v1316 = vld [vmem:[%s3 + $0x8] sm:$0xf]
      %v1317 = vld [vmem:[%s3 + $0xc] sm:$0xf]
      %v1318 = vld [vmem:[%s3 + $0x10] sm:$0xf]
      %v1319 = vld [vmem:[%s3 + $0x14] sm:$0xf]
      %v1320 = vld [vmem:[%s3 + $0x18] sm:$0xf]
      %v1321 = vld [vmem:[%s3 + $0x1c] sm:$0xf]
      %v1322 = vld [vmem:[%s3 + $0x20] sm:$0xf]
      %v1323 = vld [vmem:[%s3 + $0x24] sm:$0xf]
      %v1324 = vld [vmem:[%s3 + $0x28] sm:$0xf]
      %v1325 = vld [vmem:[%s3 + $0x2c] sm:$0xf]
      %v1326 = vld [vmem:[%s3 + $0x30] sm:$0xf]
      %v1327 = vld [vmem:[%s3 + $0x34] sm:$0xf]
      %v1328 = vld [vmem:[%s3 + $0x38] sm:$0xf]
      %v1329 = vld [vmem:[%s3 + $0x3c] sm:$0xf]
      %v1330 = vld [vmem:[%s4] sm:$0x1]
      %v1332 = vlaneseq
      %v1333 = vshrl.u32 %v1332, 7
      %v1334 = vsub.s32 0, %v1333
      %v1335 = vrot.slane %v1330, %v1334
      %v1353 = vunpack.c.l.b16 %v1314
      %v1354 = vunpack.c.l.b16 %v1315
      %v1355 = vunpack.c.l.b16 %v1316
      %v1356 = vunpack.c.l.b16 %v1317
      %v1357 = vunpack.c.l.b16 %v1318
      %v1358 = vunpack.c.l.b16 %v1319
      %v1359 = vunpack.c.l.b16 %v1320
      %v1360 = vunpack.c.l.b16 %v1321
      %v1361 = vunpack.c.l.b16 %v1322
      %v1362 = vunpack.c.l.b16 %v1323
      %v1363 = vunpack.c.l.b16 %v1324
      %v1364 = vunpack.c.l.b16 %v1325
      %v1365 = vunpack.c.l.b16 %v1326
      %v1366 = vunpack.c.l.b16 %v1327
      %v1367 = vunpack.c.l.b16 %v1328
      %v1368 = vunpack.c.l.b16 %v1329
      %v1369 = vpack.c.b16 %v1354, %v1353
      %v1370 = vpack.c.b16 %v1356, %v1355
      %v1371 = vpack.c.b16 %v1358, %v1357
      %v1372 = vpack.c.b16 %v1360, %v1359
      %v1373 = vpack.c.b16 %v1362, %v1361
      %v1374 = vpack.c.b16 %v1364, %v1363
      %v1375 = vpack.c.b16 %v1366, %v1365
      %v1376 = vpack.c.b16 %v1368, %v1367
      %1385 = vmatprep.subr.bf16.mxu0 0
      %1386 = vmatpush1.bf16.msra.mxu0 %v1369
      %1387 = vmatprep.subr.bf16.mxu0 0
      %1388 = vmatpush1.bf16.msra.mxu0 %v1370
      %1389 = vmatprep.subr.bf16.mxu0 0
      %1390 = vmatpush1.bf16.msra.mxu0 %v1371
      %1391 = vmatprep.subr.bf16.mxu0 0
      %1392 = vmatpush1.bf16.msra.mxu0 %v1372
      %1393 = vmatprep.subr.bf16.mxu0 0
      %1394 = vmatpush1.bf16.msra.mxu0 %v1373
      %1395 = vmatprep.subr.bf16.mxu0 0
      %1396 = vmatpush1.bf16.msra.mxu0 %v1374
      %1397 = vmatprep.subr.bf16.mxu0 0
      %1398 = vmatpush1.bf16.msra.mxu0 %v1375
      %1399 = vmatprep.subr.bf16.mxu0 0
      %1400 = vmatpush1.bf16.msra.mxu0 %v1376
      %1401 = vmatprep.subr.bf16.mxu0 0
      %1402 = vmatpush1.bf16.msra.mxu0 0
      %1403 = vmatprep.subr.bf16.mxu0 0
      %1404 = vmatpush1.bf16.msra.mxu0 0
      %1405 = vmatprep.subr.bf16.mxu0 0
      %1406 = vmatpush1.bf16.msra.mxu0 0
      %1407 = vmatprep.subr.bf16.mxu0 0
      %1408 = vmatpush1.bf16.msra.mxu0 0
      %1409 = vmatprep.subr.bf16.mxu0 0
      %1410 = vmatpush1.bf16.msra.mxu0 0
      %1411 = vmatprep.subr.bf16.mxu0 0
      %1412 = vmatpush1.bf16.msra.mxu0 0
      %1413 = vmatprep.subr.bf16.mxu0 0
      %1414 = vmatpush1.bf16.msra.mxu0 0
      %1415 = vmatprep.subr.bf16.mxu0 0
      %1416 = vmatpush1.bf16.msra.mxu0 0
      %1417 = vmatprep.mubr.bf16.mxu0 0
      %1418 = vmatmul.mubr.bf16.gmra.mrb[0].mxu0 %v1312
      %v1419 = vpop.f32.mrb[0].mxu0
      %v1420 = vadd.f32 %v1335, %v1419
      %v1421 = vpop.f32.mrb[0].mxu0
      %v1422 = vpop.f32.mrb[0].mxu0
      %v1423 = vadd.f32 %v1335, %v1422
      %v1424 = vpop.f32.mrb[0].mxu0
      %1425 = vmatprep.mubr.bf16.mxu0 0
      %1426 = vmatmul.mubr.bf16.gmra.mrb[0].mxu0 %v1313
      %v1427 = vpop.f32.mrb[0].mxu0
      %v1428 = vadd.f32 %v1335, %v1427
      %v1429 = vpop.f32.mrb[0].mxu0
      %v1430 = vpop.f32.mrb[0].mxu0
      %v1431 = vadd.f32 %v1335, %v1430
      %v1432 = vpop.f32.mrb[0].mxu0
      %1433 = vdwg.mxu0
      %v1434 = vmax.f32 %v1420, 1e-06
      %v1435 = vmax.f32 %v1423, 1e-06
      %v1436 = vmax.f32 %v1428, 1e-06
      %v1437 = vmax.f32 %v1431, 1e-06
      %v1438 = vrsqrt.pop %v1434
      %v1439 = vrsqrt.pop %v1435
      %v1440 = vrsqrt.pop %v1436
      %v1441 = vrsqrt.pop %v1437
      %v1442 = vmul.f32 %v1304, %v1438
      %v1443 = vmul.f32 %v1305, %v1439
      %v1444 = vmul.f32 %v1306, %v1440
      %v1445 = vmul.f32 %v1307, %v1441
      %v1446 = vpack.c.bf16 %v1442, %v1442
      %v1447 = vpack.c.bf16 %v1443, %v1443
      %v1448 = vpack.c.bf16 %v1444, %v1444
      %v1449 = vpack.c.bf16 %v1445, %v1445
      %1450 = vst [vmem:[%s260] sm:$0xf] %v1446
      %1451 = vst [vmem:[%s260 + $0x4] sm:$0xf] %v1447
      %1452 = vst [vmem:[%s260 + $0x8] sm:$0xf] %v1448
      %1453 = vst [vmem:[%s260 + $0xc] sm:$0xf] %v1449
      %s1454 = smul.u32 4, %s21
      %p1455 = scmp.lt.s32.totalorder %s20, 1
      %s1456 = scalar_select %p1455, %s20, 1
      %p1457 = scmp.lt.s32.totalorder %s1454, 3
      %s1458 = scalar_select %p1457, %s1454, 3
      %s1459 = smul.addr %s1456, 4
      %s1460 = sadd.s32 %s1458, %s1459
      %s1461 = smul.addr %s1460, 4
      %s1462 = scalar_lea.vmem %s5, %s1461
      // Predicated region
      $region41: #{encoder_forward.6} parent=39 // pred_check
        %p1463 = pneg %p160
      $region42: #{encoder_forward.6} parent=39 // pred_check_branch
        %1465 = sbr.rel (%p1463) target = $region44
      $region43: #{encoder_forward.6} parent=39 // pred_region
        %s1466 = smul.u32 4, %s21
      $region44: #{encoder_forward.6} parent=39 // pred_fallthru
        _
    $region40: #{encoder_forward.6} parent=5 // pred_fallthru
      _
    %p1467 = scmp.le.s32.totalorder 2, %s11
    // Predicated region
    $region45: #{encoder_forward.6} parent=5 // pred_check
      %p1468 = pneg %p1467
    $region46: #{encoder_forward.6} parent=5 // pred_check_branch
      %1470 = sbr.rel (%p1468) target = $region48
    $region47: #{encoder_forward.6} parent=5 // pred_region
      %s1471 = ssub.s32 %s11, 2
      // Predicated region
      $region49: #{encoder_forward.6} parent=47 // pred_check
        %p1472 = pneg %p166
      $region50: #{encoder_forward.6} parent=47 // pred_check_branch
        %1474 = sbr.rel (%p1472) target = $region52
      $region51: #{encoder_forward.6} parent=47 // pred_region
        %s1475 = smul.u32 4, %s23
        %p1476 = scmp.lt.s32.totalorder %s22, 1
        %s1477 = scalar_select %p1476, %s22, 1
        %p1478 = scmp.lt.s32.totalorder %s1475, 3
        %s1479 = scalar_select %p1478, %s1475, 3
        %s1480 = smul.addr %s1477, 4
        %s1481 = sadd.s32 %s1479, %s1480
        %s1482 = smul.addr %s1481, 4
        %s1483 = scalar_lea.vmem %s5, %s1482
      $region52: #{encoder_forward.6} parent=47 // pred_fallthru
        _
    $region48: #{encoder_forward.6} parent=5 // pred_fallthru
      _
  $region6: #{encoder_forward.6} parent=0 // loop_footer
    %s15 = sadd.s32 1, %s11
  $region7: #{encoder_forward.6} parent=0 // loop_footer_branch
    %10 = sbr.rel target = $region3
  $region8: #{encoder_forward.6} parent=0 // loop_exit
    _

// kernel: encoder_forward.7
$region0: #{encoder_forward.7}
  #allocation0 [shape = 'u32[]', space=smem, size = 0x4, offset = 0x4, fixed_abs, tag = 'smem constant byte address 0x4 - core index']
  #allocation1 [shape = 'u32[144,128]{1,0:T(1,128)}', space=vmem, size = 0x12000, scoped, tag = 'internal scratch']
  %s0 = inlined_call_operand.vmem [shape: bf16[2,1,4,10,32], index: 0, kind: input, shape index: {}]
  %s1 = inlined_call_operand.vmem [shape: bf16[3,3,32,128], index: 1, kind: input, shape index: {}]
  %s2 = inlined_call_operand.vmem [shape: f32[1,128], index: 2, kind: input, shape index: {}]
  %s3 = inlined_call_operand.vmem [shape: f32[2,2,8,128], index: 3, kind: output, shape index: {}]
  %s4 = sld [smem:[#allocation0]]
  $region45: #{encoder_forward.7} parent=0
    _
  %s6 = ssub.s32 1, %s4
  %s7 = scalar_select 0, %s6, %s4
  loop: start=0, step=1, limit=4
  $region2: #{encoder_forward.7} parent=0 // loop_pre_header
    _
  $region3: #{encoder_forward.7} parent=0 // loop_header
    %s9 = sphi 0, %s13
    %p10 = scmp.ge.s32.totalorder %s9, 4
    %s16 = sphi 0, %s28
    %s17 = sphi 0, %s24
    %s18 = sphi 0, %s16
    %s19 = sphi 0, %s17
    %s20 = sphi 0, %s18
    %s21 = sphi 0, %s19
    %s33 = sphi 0, %s35
    %s36 = sphi 0, %s33
    %s37 = sphi 0, %s36
    %s53 = sphi 0, %s37
    %s57 = sphi 0, %s57
    %s59 = sphi 0, %s57
    %s60 = sphi 0, %s59
    %s74 = sphi 0, %s60
    %s78 = sphi 0, %s78
    %s80 = sphi 0, %s78
    %s81 = sphi 0, %s80
    %s95 = sphi 0, %s81
    %s103 = sphi 0, %s105
    %s106 = sphi 0, %s103
    %s107 = sphi 0, %s106
    %s123 = sphi 0, %s107
  $region4: #{encoder_forward.7} parent=0 // loop_header_branch
    %12 = sbr.rel (%p10) target = $region8
  $region5: #{encoder_forward.7} parent=0 // loop_body
    %s14 = ssub.s32 %s9, 1
    %s15 = ssub.s32 %s9, 2
    %s22 = sadd.s32 1, %s17
    %p23 = scmp.ge.s32.totalorder %s22, 1
    %s24 = scalar_select %p23, 0, %s22
    %s25 = sadd.s32 1, %s16
    %s26 = scalar_select %p23, %s25, %s16
    %p27 = scmp.ge.s32.totalorder %s26, 2
    %s28 = scalar_select %p27, 0, %s26
    %s29 = ssub.s32 %s16, %s28
    %s30 = ssub.s32 %s17, %s24
    %s31 = sor.u32 %s29, %s30
    %p32 = scmp.eq.s32.totalorder %s31, 0
    %s34 = sadd.s32 %s33, 1
    %s35 = scalar_select %p32, %s33, %s34
    %p38 = pneg %p32
    %p39 = scmp.eq.s32.totalorder %s9, 1
    %p40 = por %p38, %p39
    %p41 = scmp.ne.s32.totalorder %s33, %s36
    %p42 = scmp.eq.s32.totalorder %s9, 0
    %p43 = por %p41, %p42
    %p44 = scmp.ne.s32.totalorder %s33, %s36
    %p45 = scmp.eq.s32.totalorder %s14, 1
    %p46 = por %p44, %p45
    %p47 = scmp.ne.s32.totalorder %s36, %s37
    %p48 = scmp.eq.s32.totalorder %s14, 0
    %p49 = por %p47, %p48
    %p50 = scmp.ne.s32.totalorder %s36, %s37
    %p51 = scmp.eq.s32.totalorder %s15, 1
    %p52 = por %p50, %p51
    %p54 = scmp.ne.s32.totalorder %s37, %s53
    %p55 = scmp.eq.s32.totalorder %s15, 0
    %p56 = por %p54, %p55
    %s58 = sadd.s32 %s57, 1
    %p61 = scmp.eq.s32.totalorder %s9, 1
    %p62 = scmp.ne.s32.totalorder %s57, %s59
    %p63 = scmp.eq.s32.totalorder %s9, 0
    %p64 = por %p62, %p63
    %p65 = scmp.ne.s32.totalorder %s57, %s59
    %p66 = scmp.eq.s32.totalorder %s14, 1
    %p67 = por %p65, %p66
    %p68 = scmp.ne.s32.totalorder %s59, %s60
    %p69 = scmp.eq.s32.totalorder %s14, 0
    %p70 = por %p68, %p69
    %p71 = scmp.ne.s32.totalorder %s59, %s60
    %p72 = scmp.eq.s32.totalorder %s15, 1
    %p73 = por %p71, %p72
    %p75 = scmp.ne.s32.totalorder %s60, %s74
    %p76 = scmp.eq.s32.totalorder %s15, 0
    %p77 = por %p75, %p76
    %s79 = sadd.s32 %s78, 1
    %p82 = scmp.eq.s32.totalorder %s9, 1
    %p83 = scmp.ne.s32.totalorder %s78, %s80
    %p84 = scmp.eq.s32.totalorder %s9, 0
    %p85 = por %p83, %p84
    %p86 = scmp.ne.s32.totalorder %s78, %s80
    %p87 = scmp.eq.s32.totalorder %s14, 1
    %p88 = por %p86, %p87
    %p89 = scmp.ne.s32.totalorder %s80, %s81
    %p90 = scmp.eq.s32.totalorder %s14, 0
    %p91 = por %p89, %p90
    %p92 = scmp.ne.s32.totalorder %s80, %s81
    %p93 = scmp.eq.s32.totalorder %s15, 1
    %p94 = por %p92, %p93
    %p96 = scmp.ne.s32.totalorder %s81, %s95
    %p97 = scmp.eq.s32.totalorder %s15, 0
    %p98 = por %p96, %p97
    %s99 = ssub.s32 %s16, %s28
    %s100 = ssub.s32 %s17, %s24
    %s101 = sor.u32 %s99, %s100
    %p102 = scmp.eq.s32.totalorder %s101, 0
    %s104 = sadd.s32 %s103, 1
    %s105 = scalar_select %p102, %s103, %s104
    %p108 = pneg %p102
    %p109 = scmp.eq.s32.totalorder %s9, 1
    %p110 = por %p108, %p109
    %p111 = scmp.ne.s32.totalorder %s103, %s106
    %p112 = scmp.eq.s32.totalorder %s9, 0
    %p113 = por %p111, %p112
    %p114 = scmp.ne.s32.totalorder %s103, %s106
    %p115 = scmp.eq.s32.totalorder %s14, 1
    %p116 = por %p114, %p115
    %p117 = scmp.ne.s32.totalorder %s106, %s107
    %p118 = scmp.eq.s32.totalorder %s14, 0
    %p119 = por %p117, %p118
    %p120 = scmp.ne.s32.totalorder %s106, %s107
    %p121 = scmp.eq.s32.totalorder %s15, 1
    %p122 = por %p120, %p121
    %p124 = scmp.ne.s32.totalorder %s107, %s123
    %p125 = scmp.eq.s32.totalorder %s15, 0
    %p126 = por %p124, %p125
    %p127 = scmp.le.s32.totalorder 1, %s9
    %p128 = scmp.lt.s32.totalorder %s9, 3
    %p129 = pnand %p127, %p128
    %p130 = pneg %p129
    // Predicated region
    $region9: #{encoder_forward.7} parent=5 // pred_check
      _
    $region10: #{encoder_forward.7} parent=5 // pred_check_branch
      %132 = sbr.rel (%p129) target = $region12
    $region11: #{encoder_forward.7} parent=5 // pred_region
      %s133 = ssub.s32 %s9, 1
      // Predicated region
      $region13: #{encoder_forward.7} parent=11 // pred_check
        %p134 = pneg %p70
      $region14: #{encoder_forward.7} parent=11 // pred_check_branch
        %136 = sbr.rel (%p134) target = $region16
      $region15: #{encoder_forward.7} parent=11 // pred_region
        _
      $region16: #{encoder_forward.7} parent=11 // pred_fallthru
        _
      // Predicated region
      $region17: #{encoder_forward.7} parent=11 // pred_check
        %p137 = pneg %p91
      $region18: #{encoder_forward.7} parent=11 // pred_check_branch
        %139 = sbr.rel (%p137) target = $region20
      $region19: #{encoder_forward.7} parent=11 // pred_region
        _
      $region20: #{encoder_forward.7} parent=11 // pred_fallthru
        _
    $region12: #{encoder_forward.7} parent=5 // pred_fallthru
      _
    %p140 = scmp.lt.s32.totalorder %s9, 2
    // Predicated region
    $region21: #{encoder_forward.7} parent=5 // pred_check
      %p141 = pneg %p140
    $region22: #{encoder_forward.7} parent=5 // pred_check_branch
      %143 = sbr.rel (%p141) target = $region24
    $region23: #{encoder_forward.7} parent=5 // pred_region
      // Predicated region
      $region25: #{encoder_forward.7} parent=23 // pred_check
        %p144 = pneg %p43
      $region26: #{encoder_forward.7} parent=23 // pred_check_branch
        %146 = sbr.rel (%p144) target = $region28
      $region27: #{encoder_forward.7} parent=23 // pred_region
        %p147 = scmp.lt.s32.totalorder %s16, 1
        %s148 = scalar_select %p147, %s16, 1
        %p149 = scmp.lt.s32.totalorder %s17, 0
        %s150 = scalar_select %p149, %s17, 0
        %s151 = smul.addr %s150, 8
        %s152 = smul.addr %s148, 8
        %s153 = sadd.s32 %s151, %s152
        %s154 = smul.addr %s153, 4
        %s155 = scalar_lea.vmem %s0, %s154
      $region28: #{encoder_forward.7} parent=23 // pred_fallthru
        _
    $region24: #{encoder_forward.7} parent=5 // pred_fallthru
      _
    %p156 = scmp.le.s32.totalorder 1, %s9
    %p157 = scmp.lt.s32.totalorder %s9, 3
    %p158 = pnand %p156, %p157
    %p159 = pneg %p158
    // Predicated region
    $region29: #{encoder_forward.7} parent=5 // pred_check
      _
    $region30: #{encoder_forward.7} parent=5 // pred_check_branch
      %161 = sbr.rel (%p158) target = $region32
    $region31: #{encoder_forward.7} parent=5 // pred_region
      %s162 = ssub.s32 %s9, 1
      %p163 = scmp.lt.s32.totalorder %s18, 1
      %s164 = scalar_select %p163, %s18, 1
      %p165 = scmp.lt.s32.totalorder %s19, 0
      %s166 = scalar_select %p165, %s19, 0
      %s167 = smul.addr %s166, 8
      %s168 = smul.addr %s164, 8
      %s169 = sadd.s32 %s167, %s168
      %s170 = smul.addr %s169, 4
      %s171 = scalar_lea.vmem %s0, %s170
      %p172 = pneg %p49
      %p173 = pneg %p46
      %p174 = pneg %p70
      %p175 = pneg %p67
      %p176 = pneg %p91
      %p177 = pneg %p88
      %p178 = pneg %p119
      %p179 = pneg %p116
      %s180 = smul.u32 2, %s19
      %p181 = scmp.lt.s32.totalorder %s18, 1
      %s182 = scalar_select %p181, %s18, 1
      %p183 = scmp.lt.s32.totalorder %s180, 1
      %s184 = scalar_select %p183, %s180, 1
      %s185 = smul.addr %s182, 2
      %s186 = sadd.s32 %s184, %s185
      %s187 = smul.addr %s186, 8
      %s188 = scalar_lea.vmem %s3, %s187
      %p189 = scmp.lt.s32.totalorder %s18, 1
      %s190 = scalar_select %p189, %s18, 1
      %p191 = scmp.lt.s32.totalorder %s19, 0
      %s192 = scalar_select %p191, %s19, 0
      %s193 = smul.addr %s192, 8
      %s194 = smul.addr %s190, 8
      %s195 = sadd.s32 %s193, %s194
      %s196 = smul.addr %s195, 4
      %s197 = scalar_lea.vmem %s0, %s196
      %s198 = smul.u32 2, %s19
      %p199 = scmp.lt.s32.totalorder %s18, 1
      %s200 = scalar_select %p199, %s18, 1
      %p201 = scmp.lt.s32.totalorder %s198, 1
      %s202 = scalar_select %p201, %s198, 1
      %s203 = smul.addr %s200, 2
      %s204 = sadd.s32 %s202, %s203
      %s205 = smul.addr %s204, 8
      %s206 = scalar_lea.vmem %s3, %s205
      %s207 = smul.u32 2, %s19
      %v209 = vld [vmem:[%s197] sm:$0xf]
      %v210 = vld [vmem:[%s197 + $0x8] sm:$0xf]
      %v211 = vld [vmem:[%s1] sm:$0xf]
      %v212 = vld [vmem:[%s1 + $0x4] sm:$0xf]
      %v213 = vld [vmem:[%s1 + $0x8] sm:$0xf]
      %v214 = vld [vmem:[%s1 + $0xc] sm:$0xf]
      %v215 = vld [vmem:[%s197 + $0x4] sm:$0x1]
      %v216 = vld [vmem:[%s197 + $0xc] sm:$0x1]
      %vm217 = vsmask.f32 3328
      %vm218 = vsmask.f32 7440
      %vm219 = vmor %vm217, %vm218
      %v221 = vshrl.u32 %v209, 16
      %v223 = vrot.slane %v221, 4
      %v224 = vshll.u32 %v209, 16
      %v226 = vrot.slane %v224, 5
      %v227 = vor.u32 %v223, %v226
      %v228 = vrot.slane %v227, 4
      %v230 = vshll.u32 %v215, 16
      %v232 = vrot.slane %v230, 5
      %v233 = vsel %vm219, %v228, %v232
      %v235 = vshrl.u32 %v210, 16
      %v237 = vrot.slane %v235, 4
      %v238 = vshll.u32 %v210, 16
      %v240 = vrot.slane %v238, 5
      %v241 = vor.u32 %v237, %v240
      %v242 = vrot.slane %v241, 4
      %v244 = vshll.u32 %v216, 16
      %v246 = vrot.slane %v244, 5
      %v247 = vsel %vm219, %v242, %v246
      %s248 = scalar_lea.vmem %s1, 16
      %v249 = vld [vmem:[%s248] sm:$0xf]
      %v250 = vld [vmem:[%s248 + $0x4] sm:$0xf]
      %v251 = vld [vmem:[%s248 + $0x8] sm:$0xf]
      %v252 = vld [vmem:[%s248 + $0xc] sm:$0xf]
      %v253 = vunpack.c.l.b16 %v233
      %v254 = vunpack.c.l.b16 %v247
      %v255 = vpack.c.b16 %v254, %v253
      %v260 = vunpack.c.l.b16 %v249
      %v261 = vunpack.c.l.b16 %v250
      %v262 = vunpack.c.l.b16 %v251
      %v263 = vunpack.c.l.b16 %v252
      %v264 = vpack.c.b16 %v261, %v260
      %v265 = vpack.c.b16 %v263, %v262
      %vm268 = vcmask 261120
      %v270 = vsel %vm268, %v255, 0
      %272 = vmatprep.subr.bf16.mxu0 0
      %273 = vmatpush1.bf16.msra.mxu0 %v264
      %274 = vmatprep.subr.bf16.mxu0 0
      %275 = vmatpush1.bf16.msra.mxu0 %v265
      %276 = vmatprep.subr.bf16.mxu0 0
      %277 = vmatpush1.bf16.msra.mxu0 0
      %278 = vmatprep.subr.bf16.mxu0 0
      %279 = vmatpush1.bf16.msra.mxu0 0
      %280 = vmatprep.subr.bf16.mxu0 0
      %281 = vmatpush1.bf16.msra.mxu0 0
      %282 = vmatprep.subr.bf16.mxu0 0
      %283 = vmatpush1.bf16.msra.mxu0 0
      %284 = vmatprep.subr.bf16.mxu0 0
      %285 = vmatpush1.bf16.msra.mxu0 0
      %286 = vmatprep.subr.bf16.mxu0 0
      %287 = vmatpush1.bf16.msra.mxu0 0
      %288 = vmatprep.subr.bf16.mxu0 0
      %289 = vmatpush1.bf16.msra.mxu0 0
      %290 = vmatprep.subr.bf16.mxu0 0
      %291 = vmatpush1.bf16.msra.mxu0 0
      %292 = vmatprep.subr.bf16.mxu0 0
      %293 = vmatpush1.bf16.msra.mxu0 0
      %294 = vmatprep.subr.bf16.mxu0 0
      %295 = vmatpush1.bf16.msra.mxu0 0
      %296 = vmatprep.subr.bf16.mxu0 0
      %297 = vmatpush1.bf16.msra.mxu0 0
      %298 = vmatprep.subr.bf16.mxu0 0
      %299 = vmatpush1.bf16.msra.mxu0 0
      %300 = vmatprep.subr.bf16.mxu0 0
      %301 = vmatpush1.bf16.msra.mxu0 0
      %302 = vmatprep.subr.bf16.mxu0 0
      %303 = vmatpush1.bf16.msra.mxu0 0
      %304 = vmatprep.mubr.bf16.mxu0 0
      %305 = vmatmul.mubr.bf16.gmra.mrb[0].mxu0 %v270
      %v306 = vpop.f32.mrb[0].mxu0
      %v307 = vadd.f32 0.0, %v306
      %v308 = vpop.f32.mrb[0].mxu0
      %v309 = vpop.f32.mrb[0].mxu0
      %v310 = vadd.f32 0.0, %v309
      %v311 = vpop.f32.mrb[0].mxu0
      %312 = vdwg.mxu0
      %v315 = vunpack.c.l.b16 %v209
      %v316 = vunpack.c.l.b16 %v210
      %v317 = vpack.c.b16 %v316, %v315
      %v322 = vunpack.c.l.b16 %v211
      %v323 = vunpack.c.l.b16 %v212
      %v324 = vunpack.c.l.b16 %v213
      %v325 = vunpack.c.l.b16 %v214
      %v326 = vpack.c.b16 %v323, %v322
      %v327 = vpack.c.b16 %v325, %v324
      %v331 = vsel %vm268, %v317, 0
      %333 = vmatprep.subr.bf16.mxu0 0
      %334 = vmatpush1.bf16.msra.mxu0 %v326
      %335 = vmatprep.subr.bf16.mxu0 0
      %336 = vmatpush1.bf16.msra.mxu0 %v327
      %337 = vmatprep.subr.bf16.mxu0 0
      %338 = vmatpush1.bf16.msra.mxu0 0
      %339 = vmatprep.subr.bf16.mxu0 0
      %340 = vmatpush1.bf16.msra.mxu0 0
      %341 = vmatprep.subr.bf16.mxu0 0
      %342 = vmatpush1.bf16.msra.mxu0 0
      %343 = vmatprep.subr.bf16.mxu0 0
      %344 = vmatpush1.bf16.msra.mxu0 0
      %345 = vmatprep.subr.bf16.mxu0 0
      %346 = vmatpush1.bf16.msra.mxu0 0
      %347 = vmatprep.subr.bf16.mxu0 0
      %348 = vmatpush1.bf16.msra.mxu0 0
      %349 = vmatprep.subr.bf16.mxu0 0
      %350 = vmatpush1.bf16.msra.mxu0 0
      %351 = vmatprep.subr.bf16.mxu0 0
      %352 = vmatpush1.bf16.msra.mxu0 0
      %353 = vmatprep.subr.bf16.mxu0 0
      %354 = vmatpush1.bf16.msra.mxu0 0
      %355 = vmatprep.subr.bf16.mxu0 0
      %356 = vmatpush1.bf16.msra.mxu0 0
      %357 = vmatprep.subr.bf16.mxu0 0
      %358 = vmatpush1.bf16.msra.mxu0 0
      %359 = vmatprep.subr.bf16.mxu0 0
      %360 = vmatpush1.bf16.msra.mxu0 0
      %361 = vmatprep.subr.bf16.mxu0 0
      %362 = vmatpush1.bf16.msra.mxu0 0
      %363 = vmatprep.subr.bf16.mxu0 0
      %364 = vmatpush1.bf16.msra.mxu0 0
      %365 = vmatprep.mubr.bf16.mxu0 0
      %366 = vmatmul.mubr.bf16.gmra.mrb[0].mxu0 %v331
      %v367 = vpop.f32.mrb[0].mxu0
      %v368 = vadd.f32 %v307, %v367
      %v369 = vpop.f32.mrb[0].mxu0
      %v370 = vpop.f32.mrb[0].mxu0
      %v371 = vadd.f32 %v310, %v370
      %v372 = vpop.f32.mrb[0].mxu0
      %373 = vdwg.mxu0
      %v374 = vld [vmem:[%s197] sm:$0xe]
      %v375 = vld [vmem:[%s197 + $0x8] sm:$0xe]
      %vm380 = vcmask 1042432
      %vm381 = vcmask 1046532
      %vm382 = vmor %vm380, %vm381
      %v383 = vrot.slane %v374, 5
      %v384 = vrot.slane %v383, 4
      %v385 = vrot.slane %v215, 5
      %v386 = vsel %vm382, %v384, %v385
      %v387 = vrot.slane %v375, 5
      %v388 = vrot.slane %v387, 4
      %v389 = vrot.slane %v216, 5
      %v390 = vsel %vm382, %v388, %v389
      %s391 = scalar_lea.vmem %s1, 32
      %v392 = vld [vmem:[%s391] sm:$0xf]
      %v393 = vld [vmem:[%s391 + $0x4] sm:$0xf]
      %v394 = vld [vmem:[%s391 + $0x8] sm:$0xf]
      %v395 = vld [vmem:[%s391 + $0xc] sm:$0xf]
      %v396 = vunpack.c.l.b16 %v386
      %v397 = vunpack.c.l.b16 %v390
      %v398 = vpack.c.b16 %v397, %v396
      %v403 = vunpack.c.l.b16 %v392
      %v404 = vunpack.c.l.b16 %v393
      %v405 = vunpack.c.l.b16 %v394
      %v406 = vunpack.c.l.b16 %v395
      %v407 = vpack.c.b16 %v404, %v403
      %v408 = vpack.c.b16 %v406, %v405
      %v412 = vsel %vm268, %v398, 0
      %414 = vmatprep.subr.bf16.mxu0 0
      %415 = vmatpush1.bf16.msra.mxu0 %v407
      %416 = vmatprep.subr.bf16.mxu0 0
      %417 = vmatpush1.bf16.msra.mxu0 %v408
      %418 = vmatprep.subr.bf16.mxu0 0
      %419 = vmatpush1.bf16.msra.mxu0 0
      %420 = vmatprep.subr.bf16.mxu0 0
      %421 = vmatpush1.bf16.msra.mxu0 0
      %422 = vmatprep.subr.bf16.mxu0 0
      %423 = vmatpush1.bf16.msra.mxu0 0
      %424 = vmatprep.subr.bf16.mxu0 0
      %425 = vmatpush1.bf16.msra.mxu0 0
      %426 = vmatprep.subr.bf16.mxu0 0
      %427 = vmatpush1.bf16.msra.mxu0 0
      %428 = vmatprep.subr.bf16.mxu0 0
      %429 = vmatpush1.bf16.msra.mxu0 0
      %430 = vmatprep.subr.bf16.mxu0 0
      %431 = vmatpush1.bf16.msra.mxu0 0
      %432 = vmatprep.subr.bf16.mxu0 0
      %433 = vmatpush1.bf16.msra.mxu0 0
      %434 = vmatprep.subr.bf16.mxu0 0
      %435 = vmatpush1.bf16.msra.mxu0 0
      %436 = vmatprep.subr.bf16.mxu0 0
      %437 = vmatpush1.bf16.msra.mxu0 0
      %438 = vmatprep.subr.bf16.mxu0 0
      %439 = vmatpush1.bf16.msra.mxu0 0
      %440 = vmatprep.subr.bf16.mxu0 0
      %441 = vmatpush1.bf16.msra.mxu0 0
      %442 = vmatprep.subr.bf16.mxu0 0
      %443 = vmatpush1.bf16.msra.mxu0 0
      %444 = vmatprep.subr.bf16.mxu0 0
      %445 = vmatpush1.bf16.msra.mxu0 0
      %446 = vmatprep.mubr.bf16.mxu0 0
      %447 = vmatmul.mubr.bf16.gmra.mrb[0].mxu0 %v412
      %v448 = vpop.f32.mrb[0].mxu0
      %v449 = vadd.f32 0.0, %v448
      %v450 = vpop.f32.mrb[0].mxu0
      %v451 = vpop.f32.mrb[0].mxu0
      %v452 = vadd.f32 0.0, %v451
      %v453 = vpop.f32.mrb[0].mxu0
      %454 = vdwg.mxu0
      %v455 = vadd.f32 %v368, %v449
      %v456 = vadd.f32 %v371, %v452
      %s457 = scalar_lea.vmem %s197, 8
      %v458 = vld [vmem:[%s457] sm:$0xf]
      %v459 = vld [vmem:[%s457 + $0x8] sm:$0xf]
      %s460 = scalar_lea.vmem %s1, 48
      %v461 = vld [vmem:[%s460] sm:$0xf]
      %v462 = vld [vmem:[%s460 + $0x4] sm:$0xf]
      %v463 = vld [vmem:[%s460 + $0x8] sm:$0xf]
      %v464 = vld [vmem:[%s460 + $0xc] sm:$0xf]
      %v467 = vunpack.c.l.b16 %v458
      %v468 = vunpack.c.l.b16 %v459
      %v469 = vpack.c.b16 %v468, %v467
      %v474 = vunpack.c.l.b16 %v461
      %v475 = vunpack.c.l.b16 %v462
      %v476 = vunpack.c.l.b16 %v463
      %v477 = vunpack.c.l.b16 %v464
      %v478 = vpack.c.b16 %v475, %v474
      %v479 = vpack.c.b16 %v477, %v476
      %v483 = vsel %vm268, %v469, 0
      %485 = vmatprep.subr.bf16.mxu0 0
      %486 = vmatpush1.bf16.msra.mxu0 %v478
      %487 = vmatprep.subr.bf16.mxu0 0
      %488 = vmatpush1.bf16.msra.mxu0 %v479
      %489 = vmatprep.subr.bf16.mxu0 0
      %490 = vmatpush1.bf16.msra.mxu0 0
      %491 = vmatprep.subr.bf16.mxu0 0
      %492 = vmatpush1.bf16.msra.mxu0 0
      %493 = vmatprep.subr.bf16.mxu0 0
      %494 = vmatpush1.bf16.msra.mxu0 0
      %495 = vmatprep.subr.bf16.mxu0 0
      %496 = vmatpush1.bf16.msra.mxu0 0
      %497 = vmatprep.subr.bf16.mxu0 0
      %498 = vmatpush1.bf16.msra.mxu0 0
      %499 = vmatprep.subr.bf16.mxu0 0
      %500 = vmatpush1.bf16.msra.mxu0 0
      %501 = vmatprep.subr.bf16.mxu0 0
      %502 = vmatpush1.bf16.msra.mxu0 0
      %503 = vmatprep.subr.bf16.mxu0 0
      %504 = vmatpush1.bf16.msra.mxu0 0
      %505 = vmatprep.subr.bf16.mxu0 0
      %506 = vmatpush1.bf16.msra.mxu0 0
      %507 = vmatprep.subr.bf16.mxu0 0
      %508 = vmatpush1.bf16.msra.mxu0 0
      %509 = vmatprep.subr.bf16.mxu0 0
      %510 = vmatpush1.bf16.msra.mxu0 0
      %511 = vmatprep.subr.bf16.mxu0 0
      %512 = vmatpush1.bf16.msra.mxu0 0
      %513 = vmatprep.subr.bf16.mxu0 0
      %514 = vmatpush1.bf16.msra.mxu0 0
      %515 = vmatprep.subr.bf16.mxu0 0
      %516 = vmatpush1.bf16.msra.mxu0 0
      %517 = vmatprep.mubr.bf16.mxu0 0
      %518 = vmatmul.mubr.bf16.gmra.mrb[0].mxu0 %v483
      %v519 = vpop.f32.mrb[0].mxu0
      %v520 = vadd.f32 0.0, %v519
      %v521 = vpop.f32.mrb[0].mxu0
      %v522 = vpop.f32.mrb[0].mxu0
      %v523 = vadd.f32 0.0, %v522
      %v524 = vpop.f32.mrb[0].mxu0
      %525 = vdwg.mxu0
      %v526 = vadd.f32 %v455, %v520
      %v527 = vadd.f32 %v456, %v523
      %v528 = vld [vmem:[%s457] sm:$0xf]
      %v529 = vld [vmem:[%s457 + $0x4] sm:$0x1]
      %v530 = vld [vmem:[%s457 + $0x8] sm:$0xf]
      %v531 = vld [vmem:[%s457 + $0xc] sm:$0x1]
      %v533 = vshrl.u32 %v528, 16
      %v535 = vrot.slane %v533, 4
      %v536 = vshll.u32 %v528, 16
      %v538 = vrot.slane %v536, 5
      %v539 = vor.u32 %v535, %v538
      %v540 = vrot.slane %v539, 4
      %v542 = vshll.u32 %v529, 16
      %v544 = vrot.slane %v542, 5
      %v545 = vsel %vm219, %v540, %v544
      %v547 = vshrl.u32 %v530, 16
      %v549 = vrot.slane %v547, 4
      %v550 = vshll.u32 %v530, 16
      %v552 = vrot.slane %v550, 5
      %v553 = vor.u32 %v549, %v552
      %v554 = vrot.slane %v553, 4
      %v556 = vshll.u32 %v531, 16
      %v558 = vrot.slane %v556, 5
      %v559 = vsel %vm219, %v554, %v558
      %s560 = scalar_lea.vmem %s1, 64
      %v561 = vld [vmem:[%s560] sm:$0xf]
      %v562 = vld [vmem:[%s560 + $0x4] sm:$0xf]
      %v563 = vld [vmem:[%s560 + $0x8] sm:$0xf]
      %v564 = vld [vmem:[%s560 + $0xc] sm:$0xf]
      %v565 = vunpack.c.l.b16 %v545
      %v566 = vunpack.c.l.b16 %v559
      %v567 = vpack.c.b16 %v566, %v565
      %v572 = vunpack.c.l.b16 %v561
      %v573 = vunpack.c.l.b16 %v562
      %v574 = vunpack.c.l.b16 %v563
      %v575 = vunpack.c.l.b16 %v564
      %v576 = vpack.c.b16 %v573, %v572
      %v577 = vpack.c.b16 %v575, %v574
      %v581 = vsel %vm268, %v567, 0
      %583 = vmatprep.subr.bf16.mxu0 0
      %584 = vmatpush1.bf16.msra.mxu0 %v576
      %585 = vmatprep.subr.bf16.mxu0 0
      %586 = vmatpush1.bf16.msra.mxu0 %v577
      %587 = vmatprep.subr.bf16.mxu0 0
      %588 = vmatpush1.bf16.msra.mxu0 0
      %589 = vmatprep.subr.bf16.mxu0 0
      %590 = vmatpush1.bf16.msra.mxu0 0
      %591 = vmatprep.subr.bf16.mxu0 0
      %592 = vmatpush1.bf16.msra.mxu0 0
      %593 = vmatprep.subr.bf16.mxu0 0
      %594 = vmatpush1.bf16.msra.mxu0 0
      %595 = vmatprep.subr.bf16.mxu0 0
      %596 = vmatpush1.bf16.msra.mxu0 0
      %597 = vmatprep.subr.bf16.mxu0 0
      %598 = vmatpush1.bf16.msra.mxu0 0
      %599 = vmatprep.subr.bf16.mxu0 0
      %600 = vmatpush1.bf16.msra.mxu0 0
      %601 = vmatprep.subr.bf16.mxu0 0
      %602 = vmatpush1.bf16.msra.mxu0 0
      %603 = vmatprep.subr.bf16.mxu0 0
      %604 = vmatpush1.bf16.msra.mxu0 0
      %605 = vmatprep.subr.bf16.mxu0 0
      %606 = vmatpush1.bf16.msra.mxu0 0
      %607 = vmatprep.subr.bf16.mxu0 0
      %608 = vmatpush1.bf16.msra.mxu0 0
      %609 = vmatprep.subr.bf16.mxu0 0
      %610 = vmatpush1.bf16.msra.mxu0 0
      %611 = vmatprep.subr.bf16.mxu0 0
      %612 = vmatpush1.bf16.msra.mxu0 0
      %613 = vmatprep.subr.bf16.mxu0 0
      %614 = vmatpush1.bf16.msra.mxu0 0
      %615 = vmatprep.mubr.bf16.mxu0 0
      %616 = vmatmul.mubr.bf16.gmra.mrb[0].mxu0 %v581
      %v617 = vpop.f32.mrb[0].mxu0
      %v618 = vadd.f32 0.0, %v617
      %v619 = vpop.f32.mrb[0].mxu0
      %v620 = vpop.f32.mrb[0].mxu0
      %v621 = vadd.f32 0.0, %v620
      %v622 = vpop.f32.mrb[0].mxu0
      %623 = vdwg.mxu0
      %v624 = vadd.f32 %v526, %v618
      %v625 = vadd.f32 %v527, %v621
      %v626 = vld [vmem:[%s457] sm:$0xe]
      %v627 = vld [vmem:[%s457 + $0x8] sm:$0xe]
      %v632 = vrot.slane %v626, 5
      %v633 = vrot.slane %v632, 4
      %v634 = vrot.slane %v529, 5
      %v635 = vsel %vm382, %v633, %v634
      %v636 = vrot.slane %v627, 5
      %v637 = vrot.slane %v636, 4
      %v638 = vrot.slane %v531, 5
      %v639 = vsel %vm382, %v637, %v638
      %s640 = scalar_lea.vmem %s1, 80
      %v641 = vld [vmem:[%s640] sm:$0xf]
      %v642 = vld [vmem:[%s640 + $0x4] sm:$0xf]
      %v643 = vld [vmem:[%s640 + $0x8] sm:$0xf]
      %v644 = vld [vmem:[%s640 + $0xc] sm:$0xf]
      %v645 = vunpack.c.l.b16 %v635
      %v646 = vunpack.c.l.b16 %v639
      %v647 = vpack.c.b16 %v646, %v645
      %v652 = vunpack.c.l.b16 %v641
      %v653 = vunpack.c.l.b16 %v642
      %v654 = vunpack.c.l.b16 %v643
      %v655 = vunpack.c.l.b16 %v644
      %v656 = vpack.c.b16 %v653, %v652
      %v657 = vpack.c.b16 %v655, %v654
      %v661 = vsel %vm268, %v647, 0
      %663 = vmatprep.subr.bf16.mxu0 0
      %664 = vmatpush1.bf16.msra.mxu0 %v656
      %665 = vmatprep.subr.bf16.mxu0 0
      %666 = vmatpush1.bf16.msra.mxu0 %v657
      %667 = vmatprep.subr.bf16.mxu0 0
      %668 = vmatpush1.bf16.msra.mxu0 0
      %669 = vmatprep.subr.bf16.mxu0 0
      %670 = vmatpush1.bf16.msra.mxu0 0
      %671 = vmatprep.subr.bf16.mxu0 0
      %672 = vmatpush1.bf16.msra.mxu0 0
      %673 = vmatprep.subr.bf16.mxu0 0
      %674 = vmatpush1.bf16.msra.mxu0 0
      %675 = vmatprep.subr.bf16.mxu0 0
      %676 = vmatpush1.bf16.msra.mxu0 0
      %677 = vmatprep.subr.bf16.mxu0 0
      %678 = vmatpush1.bf16.msra.mxu0 0
      %679 = vmatprep.subr.bf16.mxu0 0
      %680 = vmatpush1.bf16.msra.mxu0 0
      %681 = vmatprep.subr.bf16.mxu0 0
      %682 = vmatpush1.bf16.msra.mxu0 0
      %683 = vmatprep.subr.bf16.mxu0 0
      %684 = vmatpush1.bf16.msra.mxu0 0
      %685 = vmatprep.subr.bf16.mxu0 0
      %686 = vmatpush1.bf16.msra.mxu0 0
      %687 = vmatprep.subr.bf16.mxu0 0
      %688 = vmatpush1.bf16.msra.mxu0 0
      %689 = vmatprep.subr.bf16.mxu0 0
      %690 = vmatpush1.bf16.msra.mxu0 0
      %691 = vmatprep.subr.bf16.mxu0 0
      %692 = vmatpush1.bf16.msra.mxu0 0
      %693 = vmatprep.subr.bf16.mxu0 0
      %694 = vmatpush1.bf16.msra.mxu0 0
      %695 = vmatprep.mubr.bf16.mxu0 0
      %696 = vmatmul.mubr.bf16.gmra.mrb[0].mxu0 %v661
      %v697 = vpop.f32.mrb[0].mxu0
      %v698 = vadd.f32 0.0, %v697
      %v699 = vpop.f32.mrb[0].mxu0
      %v700 = vpop.f32.mrb[0].mxu0
      %v701 = vadd.f32 0.0, %v700
      %v702 = vpop.f32.mrb[0].mxu0
      %703 = vdwg.mxu0
      %v704 = vadd.f32 %v624, %v698
      %v705 = vadd.f32 %v625, %v701
      %s706 = scalar_lea.vmem %s197, 16
      %v707 = vld [vmem:[%s706] sm:$0xf]
      %v708 = vld [vmem:[%s706 + $0x8] sm:$0xf]
      %s709 = scalar_lea.vmem %s1, 96
      %v710 = vld [vmem:[%s709] sm:$0xf]
      %v711 = vld [vmem:[%s709 + $0x4] sm:$0xf]
      %v712 = vld [vmem:[%s709 + $0x8] sm:$0xf]
      %v713 = vld [vmem:[%s709 + $0xc] sm:$0xf]
      %v716 = vunpack.c.l.b16 %v707
      %v717 = vunpack.c.l.b16 %v708
      %v718 = vpack.c.b16 %v717, %v716
      %v723 = vunpack.c.l.b16 %v710
      %v724 = vunpack.c.l.b16 %v711
      %v725 = vunpack.c.l.b16 %v712
      %v726 = vunpack.c.l.b16 %v713
      %v727 = vpack.c.b16 %v724, %v723
      %v728 = vpack.c.b16 %v726, %v725
      %v732 = vsel %vm268, %v718, 0
      %734 = vmatprep.subr.bf16.mxu0 0
      %735 = vmatpush1.bf16.msra.mxu0 %v727
      %736 = vmatprep.subr.bf16.mxu0 0
      %737 = vmatpush1.bf16.msra.mxu0 %v728
      %738 = vmatprep.subr.bf16.mxu0 0
      %739 = vmatpush1.bf16.msra.mxu0 0
      %740 = vmatprep.subr.bf16.mxu0 0
      %741 = vmatpush1.bf16.msra.mxu0 0
      %742 = vmatprep.subr.bf16.mxu0 0
      %743 = vmatpush1.bf16.msra.mxu0 0
      %744 = vmatprep.subr.bf16.mxu0 0
      %745 = vmatpush1.bf16.msra.mxu0 0
      %746 = vmatprep.subr.bf16.mxu0 0
      %747 = vmatpush1.bf16.msra.mxu0 0
      %748 = vmatprep.subr.bf16.mxu0 0
      %749 = vmatpush1.bf16.msra.mxu0 0
      %750 = vmatprep.subr.bf16.mxu0 0
      %751 = vmatpush1.bf16.msra.mxu0 0
      %752 = vmatprep.subr.bf16.mxu0 0
      %753 = vmatpush1.bf16.msra.mxu0 0
      %754 = vmatprep.subr.bf16.mxu0 0
      %755 = vmatpush1.bf16.msra.mxu0 0
      %756 = vmatprep.subr.bf16.mxu0 0
      %757 = vmatpush1.bf16.msra.mxu0 0
      %758 = vmatprep.subr.bf16.mxu0 0
      %759 = vmatpush1.bf16.msra.mxu0 0
      %760 = vmatprep.subr.bf16.mxu0 0
      %761 = vmatpush1.bf16.msra.mxu0 0
      %762 = vmatprep.subr.bf16.mxu0 0
      %763 = vmatpush1.bf16.msra.mxu0 0
      %764 = vmatprep.subr.bf16.mxu0 0
      %765 = vmatpush1.bf16.msra.mxu0 0
      %766 = vmatprep.mubr.bf16.mxu0 0
      %767 = vmatmul.mubr.bf16.gmra.mrb[0].mxu0 %v732
      %v768 = vpop.f32.mrb[0].mxu0
      %v769 = vadd.f32 0.0, %v768
      %v770 = vpop.f32.mrb[0].mxu0
      %v771 = vpop.f32.mrb[0].mxu0
      %v772 = vadd.f32 0.0, %v771
      %v773 = vpop.f32.mrb[0].mxu0
      %774 = vdwg.mxu0
      %v775 = vadd.f32 %v704, %v769
      %v776 = vadd.f32 %v705, %v772
      %v777 = vld [vmem:[%s706] sm:$0xf]
      %v778 = vld [vmem:[%s706 + $0x4] sm:$0x1]
      %v779 = vld [vmem:[%s706 + $0x8] sm:$0xf]
      %v780 = vld [vmem:[%s706 + $0xc] sm:$0x1]
      %v782 = vshrl.u32 %v777, 16
      %v784 = vrot.slane %v782, 4
      %v785 = vshll.u32 %v777, 16
      %v787 = vrot.slane %v785, 5
      %v788 = vor.u32 %v784, %v787
      %v789 = vrot.slane %v788, 4
      %v791 = vshll.u32 %v778, 16
      %v793 = vrot.slane %v791, 5
      %v794 = vsel %vm219, %v789, %v793
      %v796 = vshrl.u32 %v779, 16
      %v798 = vrot.slane %v796, 4
      %v799 = vshll.u32 %v779, 16
      %v801 = vrot.slane %v799, 5
      %v802 = vor.u32 %v798, %v801
      %v803 = vrot.slane %v802, 4
      %v805 = vshll.u32 %v780, 16
      %v807 = vrot.slane %v805, 5
      %v808 = vsel %vm219, %v803, %v807
      %s809 = scalar_lea.vmem %s1, 112
      %v810 = vld [vmem:[%s809] sm:$0xf]
      %v811 = vld [vmem:[%s809 + $0x4] sm:$0xf]
      %v812 = vld [vmem:[%s809 + $0x8] sm:$0xf]
      %v813 = vld [vmem:[%s809 + $0xc] sm:$0xf]
      %v814 = vunpack.c.l.b16 %v794
      %v815 = vunpack.c.l.b16 %v808
      %v816 = vpack.c.b16 %v815, %v814
      %v821 = vunpack.c.l.b16 %v810
      %v822 = vunpack.c.l.b16 %v811
      %v823 = vunpack.c.l.b16 %v812
      %v824 = vunpack.c.l.b16 %v813
      %v825 = vpack.c.b16 %v822, %v821
      %v826 = vpack.c.b16 %v824, %v823
      %v830 = vsel %vm268, %v816, 0
      %832 = vmatprep.subr.bf16.mxu0 0
      %833 = vmatpush1.bf16.msra.mxu0 %v825
      %834 = vmatprep.subr.bf16.mxu0 0
      %835 = vmatpush1.bf16.msra.mxu0 %v826
      %836 = vmatprep.subr.bf16.mxu0 0
      %837 = vmatpush1.bf16.msra.mxu0 0
      %838 = vmatprep.subr.bf16.mxu0 0
      %839 = vmatpush1.bf16.msra.mxu0 0
      %840 = vmatprep.subr.bf16.mxu0 0
      %841 = vmatpush1.bf16.msra.mxu0 0
      %842 = vmatprep.subr.bf16.mxu0 0
      %843 = vmatpush1.bf16.msra.mxu0 0
      %844 = vmatprep.subr.bf16.mxu0 0
      %845 = vmatpush1.bf16.msra.mxu0 0
      %846 = vmatprep.subr.bf16.mxu0 0
      %847 = vmatpush1.bf16.msra.mxu0 0
      %848 = vmatprep.subr.bf16.mxu0 0
      %849 = vmatpush1.bf16.msra.mxu0 0
      %850 = vmatprep.subr.bf16.mxu0 0
      %851 = vmatpush1.bf16.msra.mxu0 0
      %852 = vmatprep.subr.bf16.mxu0 0
      %853 = vmatpush1.bf16.msra.mxu0 0
      %854 = vmatprep.subr.bf16.mxu0 0
      %855 = vmatpush1.bf16.msra.mxu0 0
      %856 = vmatprep.subr.bf16.mxu0 0
      %857 = vmatpush1.bf16.msra.mxu0 0
      %858 = vmatprep.subr.bf16.mxu0 0
      %859 = vmatpush1.bf16.msra.mxu0 0
      %860 = vmatprep.subr.bf16.mxu0 0
      %861 = vmatpush1.bf16.msra.mxu0 0
      %862 = vmatprep.subr.bf16.mxu0 0
      %863 = vmatpush1.bf16.msra.mxu0 0
      %864 = vmatprep.mubr.bf16.mxu0 0
      %865 = vmatmul.mubr.bf16.gmra.mrb[0].mxu0 %v830
      %v866 = vpop.f32.mrb[0].mxu0
      %v867 = vadd.f32 0.0, %v866
      %v868 = vpop.f32.mrb[0].mxu0
      %v869 = vpop.f32.mrb[0].mxu0
      %v870 = vadd.f32 0.0, %v869
      %v871 = vpop.f32.mrb[0].mxu0
      %872 = vdwg.mxu0
      %v873 = vadd.f32 %v775, %v867
      %v874 = vadd.f32 %v776, %v870
      %v875 = vld [vmem:[%s706] sm:$0xe]
      %v876 = vld [vmem:[%s706 + $0x8] sm:$0xe]
      %v881 = vrot.slane %v875, 5
      %v882 = vrot.slane %v881, 4
      %v883 = vrot.slane %v778, 5
      %v884 = vsel %vm382, %v882, %v883
      %v885 = vrot.slane %v876, 5
      %v886 = vrot.slane %v885, 4
      %v887 = vrot.slane %v780, 5
      %v888 = vsel %vm382, %v886, %v887
      %s889 = scalar_lea.vmem %s1, 128
      %v890 = vld [vmem:[%s889] sm:$0xf]
      %v891 = vld [vmem:[%s889 + $0x4] sm:$0xf]
      %v892 = vld [vmem:[%s889 + $0x8] sm:$0xf]
      %v893 = vld [vmem:[%s889 + $0xc] sm:$0xf]
      %v894 = vunpack.c.l.b16 %v884
      %v895 = vunpack.c.l.b16 %v888
      %v896 = vpack.c.b16 %v895, %v894
      %v901 = vunpack.c.l.b16 %v890
      %v902 = vunpack.c.l.b16 %v891
      %v903 = vunpack.c.l.b16 %v892
      %v904 = vunpack.c.l.b16 %v893
      %v905 = vpack.c.b16 %v902, %v901
      %v906 = vpack.c.b16 %v904, %v903
      %v910 = vsel %vm268, %v896, 0
      %912 = vmatprep.subr.bf16.mxu0 0
      %913 = vmatpush1.bf16.msra.mxu0 %v905
      %914 = vmatprep.subr.bf16.mxu0 0
      %915 = vmatpush1.bf16.msra.mxu0 %v906
      %916 = vmatprep.subr.bf16.mxu0 0
      %917 = vmatpush1.bf16.msra.mxu0 0
      %918 = vmatprep.subr.bf16.mxu0 0
      %919 = vmatpush1.bf16.msra.mxu0 0
      %920 = vmatprep.subr.bf16.mxu0 0
      %921 = vmatpush1.bf16.msra.mxu0 0
      %922 = vmatprep.subr.bf16.mxu0 0
      %923 = vmatpush1.bf16.msra.mxu0 0
      %924 = vmatprep.subr.bf16.mxu0 0
      %925 = vmatpush1.bf16.msra.mxu0 0
      %926 = vmatprep.subr.bf16.mxu0 0
      %927 = vmatpush1.bf16.msra.mxu0 0
      %928 = vmatprep.subr.bf16.mxu0 0
      %929 = vmatpush1.bf16.msra.mxu0 0
      %930 = vmatprep.subr.bf16.mxu0 0
      %931 = vmatpush1.bf16.msra.mxu0 0
      %932 = vmatprep.subr.bf16.mxu0 0
      %933 = vmatpush1.bf16.msra.mxu0 0
      %934 = vmatprep.subr.bf16.mxu0 0
      %935 = vmatpush1.bf16.msra.mxu0 0
      %936 = vmatprep.subr.bf16.mxu0 0
      %937 = vmatpush1.bf16.msra.mxu0 0
      %938 = vmatprep.subr.bf16.mxu0 0
      %939 = vmatpush1.bf16.msra.mxu0 0
      %940 = vmatprep.subr.bf16.mxu0 0
      %941 = vmatpush1.bf16.msra.mxu0 0
      %942 = vmatprep.subr.bf16.mxu0 0
      %943 = vmatpush1.bf16.msra.mxu0 0
      %944 = vmatprep.mubr.bf16.mxu0 0
      %945 = vmatmul.mubr.bf16.gmra.mrb[0].mxu0 %v910
      %v946 = vpop.f32.mrb[0].mxu0
      %v947 = vadd.f32 0.0, %v946
      %v948 = vpop.f32.mrb[0].mxu0
      %v949 = vpop.f32.mrb[0].mxu0
      %v950 = vadd.f32 0.0, %v949
      %v951 = vpop.f32.mrb[0].mxu0
      %952 = vdwg.mxu0
      %v953 = vadd.f32 %v873, %v947
      %v954 = vadd.f32 %v874, %v950
      %v955 = vld [vmem:[%s2] sm:$0x1]
      %v957 = vlaneseq
      %v958 = vshrl.u32 %v957, 7
      %v959 = vsub.s32 0, %v958
      %v960 = vrot.slane %v955, %v959
      %v962 = vadd.f32 %v953, %v960
      %v963 = vadd.f32 %v954, %v960
      %964 = vst [vmem:[%s206] sm:$0xff] %v962
      %965 = vst [vmem:[%s206 + $0x8] sm:$0xff] %v963
      %s966 = smul.u32 2, %s19
      %p967 = scmp.lt.s32.totalorder %s18, 1
      %s968 = scalar_select %p967, %s18, 1
      %p969 = scmp.lt.s32.totalorder %s966, 1
      %s970 = scalar_select %p969, %s966, 1
      %s971 = smul.addr %s968, 2
      %s972 = sadd.s32 %s970, %s971
      %s973 = smul.addr %s972, 8
      %s974 = scalar_lea.vmem %s3, %s973
      // Predicated region
      $region33: #{encoder_forward.7} parent=31 // pred_check
        %p975 = pneg %p116
      $region34: #{encoder_forward.7} parent=31 // pred_check_branch
        %977 = sbr.rel (%p975) target = $region36
      $region35: #{encoder_forward.7} parent=31 // pred_region
        %s978 = smul.u32 2, %s19
      $region36: #{encoder_forward.7} parent=31 // pred_fallthru
        _
    $region32: #{encoder_forward.7} parent=5 // pred_fallthru
      _
    %p979 = scmp.le.s32.totalorder 2, %s9
    // Predicated region
    $region37: #{encoder_forward.7} parent=5 // pred_check
      %p980 = pneg %p979
    $region38: #{encoder_forward.7} parent=5 // pred_check_branch
      %982 = sbr.rel (%p980) target = $region40
    $region39: #{encoder_forward.7} parent=5 // pred_region
      %s983 = ssub.s32 %s9, 2
      // Predicated region
      $region41: #{encoder_forward.7} parent=39 // pred_check
        %p984 = pneg %p122
      $region42: #{encoder_forward.7} parent=39 // pred_check_branch
        %986 = sbr.rel (%p984) target = $region44
      $region43: #{encoder_forward.7} parent=39 // pred_region
        %s987 = smul.u32 2, %s21
        %p988 = scmp.lt.s32.totalorder %s20, 1
        %s989 = scalar_select %p988, %s20, 1
        %p990 = scmp.lt.s32.totalorder %s987, 1
        %s991 = scalar_select %p990, %s987, 1
        %s992 = smul.addr %s989, 2
        %s993 = sadd.s32 %s991, %s992
        %s994 = smul.addr %s993, 8
        %s995 = scalar_lea.vmem %s3, %s994
      $region44: #{encoder_forward.7} parent=39 // pred_fallthru
        _
    $region40: #{encoder_forward.7} parent=5 // pred_fallthru
      _
  $region6: #{encoder_forward.7} parent=0 // loop_footer
    %s13 = sadd.s32 1, %s9
  $region7: #{encoder_forward.7} parent=0 // loop_footer_branch
    %8 = sbr.rel target = $region3
  $region8: #{encoder_forward.7} parent=0 // loop_exit
    _

</llo_original>
